<compile_context>
chip_gen: v6e
topology: v6e:2x2x1
jax: 0.10.0
libtpu: 0.0.40
codegen_flags: <defaults>
</compile_context>

<pallas_src>
import functools

import jax
import jax.numpy as jnp
import numpy as np
from jax.experimental import pallas as pl
from jax.experimental.pallas import tpu as pltpu

_LANE = 128
_MXU_DTYPE = jnp.bfloat16   # MXU-native on v5e/v6e/v7x; accumulate in f32


def _tpu_vmem_capacity():
    try:
        return int(pltpu.get_tpu_info().vmem_capacity_bytes)
    except Exception:
        return 64 * 1024 * 1024


_VMEM_CAP = _tpu_vmem_capacity()
_BIG_VMEM = _VMEM_CAP >= 96 * 1024 * 1024            # v5e/v6e (128 MiB) vs v7x (64 MiB)
_VMEM_LIMIT = (80 if _BIG_VMEM else 40) * 1024 * 1024
_ROW_TILE_MAX = 1024 if _BIG_VMEM else 512
_NODE_TILE_MAX = 1024 if _BIG_VMEM else 512
_EDGE_TILE_MAX = 512


# ---------------------------------------------------------------------------
# small helpers
# ---------------------------------------------------------------------------
def _round_up(x, m):
    return ((x + m - 1) // m) * m


def _pick_tile(rows, max_tile):
    """Row tile (multiple of 8) minimizing padding; prefer >=2 grid steps."""
    cands = [t for t in (2048, 1024, 512, 256, 128, 64, 32, 16, 8) if t <= max_tile]
    best = min(cands, key=lambda t: (_round_up(rows, t), -t))
    if _round_up(rows, best) == best and best >= 16:      # single step -> try to split
        half = best // 2
        if _round_up(rows, half) == _round_up(rows, best):
            best = half
    return best


def _pick_lane_tile(rows, max_tile):
    """Tile that also sits on the lane axis: must be a multiple of 128."""
    cands = [t for t in (1024, 512, 256, 128) if t <= max_tile]
    return min(cands, key=lambda t: (_round_up(rows, t), -t))


def _pad2(a, rows, cols):
    return jnp.pad(a, ((0, rows - a.shape[0]), (0, cols - a.shape[1])))


def _pad_rows(a, rows):
    return jnp.pad(a, ((0, rows - a.shape[0]), (0, 0))) if rows != a.shape[0] else a


def _pad_cols(a, cols):
    return jnp.pad(a, ((0, 0), (0, cols - a.shape[1]))) if cols != a.shape[1] else a


# ---------------------------------------------------------------------------
# in-kernel math: 2-layer MLP with split first-layer weights (+ optional LN)
# ---------------------------------------------------------------------------
def _layer_norm(y, g, beta, d_real):
    d_pad = y.shape[-1]
    inv_d = np.float32(1.0 / d_real)
    mean = jnp.sum(y, axis=-1, keepdims=True) * inv_d
    dev = y - mean
    if d_pad != d_real:
        # padded columns of y are exactly zero; exclude them from the variance
        col = jax.lax.broadcasted_iota(jnp.int32, y.shape, 1)
        dev = jnp.where(col < d_real, dev, 0.0)
    var = jnp.sum(dev * dev, axis=-1, keepdims=True) * inv_d
    y = (y - mean) * jax.lax.rsqrt(var + 1e-5)
    return y * g + beta                       # padded g/beta are 0 -> padded out stays 0


def _ffb_compute(xs, w1s, b1, w2, b2, act_name, ln=None, d_out_real=None):
    # bf16 operands on the MXU, f32 accumulation
    h = jnp.dot(xs[0].astype(w1s[0].dtype), w1s[0], preferred_element_type=jnp.float32)
    for x, w1 in zip(xs[1:], w1s[1:]):
        h = h + jnp.dot(x.astype(w1.dtype), w1, preferred_element_type=jnp.float32)
    h = h + b1
    if act_name == "silu":
        h = h * jax.nn.sigmoid(h)
    elif act_name == "sigmoid":
        h = jax.nn.sigmoid(h)
    y = jnp.dot(h.astype(w2.dtype), w2, preferred_element_type=jnp.float32) + b2
    if ln is not None:
        g, beta = ln
        y = _layer_norm(y, g, beta, d_out_real)
    return y


# ---------------------------------------------------------------------------
# Kernel 1: fused embed_edge + process_edge (per edge-row tile)
# ---------------------------------------------------------------------------
def _edge_kernel(ef_ref, sf_ref, rf_ref,
                 ew1, eb1, ew2, eb2, eg, ebt,
                 pw1s, pw1r, pw1e, pb1, pw2, pb2, pg, pbt,
                 emb_o, pe_o, *, d_hidden_real):
    emb = _ffb_compute([ef_ref[...]], [ew1[...]], eb1[...], ew2[...], eb2[...],
                       "silu", ln=(eg[...], ebt[...]), d_out_real=d_hidden_real)
    emb_o[...] = emb
    pe = _ffb_compute([sf_ref[...], rf_ref[...], emb],
                      [pw1s[...], pw1r[...], pw1e[...]],
                      pb1[...], pw2[...], pb2[...],
                      "silu", ln=(pg[...], pbt[...]), d_out_real=d_hidden_real)
    pe_o[...] = pe


def _edge_update(ef_p, sf_p, rf_p, p_embed, p_proc, *, d_hidden,
                 row_tile_max=_ROW_TILE_MAX):
    E, Dinp = ef_p.shape
    Hp = sf_p.shape[1]
    row_tile = _pick_tile(E, row_tile_max)
    E_pad = _round_up(E, row_tile)
    ef_p = _pad_rows(ef_p, E_pad)
    sf_p = _pad_rows(sf_p, E_pad)
    rf_p = _pad_rows(rf_p, E_pad)

    param_list = [p_embed["w1_blocks"][0], p_embed["b1"], p_embed["w2"],
                  p_embed["b2"], p_embed["g"], p_embed["beta"],
                  p_proc["w1_blocks"][0], p_proc["w1_blocks"][1], p_proc["w1_blocks"][2],
                  p_proc["b1"], p_proc["w2"], p_proc["b2"], p_proc["g"], p_proc["beta"]]

    in_specs = ([pl.BlockSpec((row_tile, Dinp), lambda i: (i, 0)),
                 pl.BlockSpec((row_tile, Hp), lambda i: (i, 0)),
                 pl.BlockSpec((row_tile, Hp), lambda i: (i, 0))]
                + [pl.BlockSpec(p.shape, lambda i: (0, 0)) for p in param_list])

    emb, new_edges = pl.pallas_call(
        functools.partial(_edge_kernel, d_hidden_real=d_hidden),
        out_shape=(jax.ShapeDtypeStruct((E_pad, Hp), jnp.float32),
                   jax.ShapeDtypeStruct((E_pad, Hp), jnp.float32)),
        grid=(E_pad // row_tile,),
        in_specs=in_specs,
        out_specs=(pl.BlockSpec((row_tile, Hp), lambda i: (i, 0)),
                   pl.BlockSpec((row_tile, Hp), lambda i: (i, 0))),
        compiler_params=pltpu.CompilerParams(
            dimension_semantics=("parallel",), vmem_limit_bytes=_VMEM_LIMIT),
    )(ef_p, sf_p, rf_p, *param_list)
    return emb[:E], new_edges[:E]


# ---------------------------------------------------------------------------
# Kernel 2: scatter_mean over receiver-sorted edges.
#   grid = (node tiles [parallel], edge blocks [arbitrary]); per node tile the
#   prefetched (blk_lo, nblk) select only the contiguous edge blocks that hold
#   its receivers; clamped index_map means non-contributing steps re-use the
#   already-resident block (no DMA) and pl.when skips their compute.
# ---------------------------------------------------------------------------
def _scatter_mean_kernel(blk_lo_ref, nblk_ref, recv_ref, ef_ref, o_ref,
                         acc_ref, cnt_ref, *, node_tile):
    n = pl.program_id(0)
    e = pl.program_id(1)

    @pl.when(e == 0)
    def _():
        acc_ref[...] = jnp.zeros_like(acc_ref)
        cnt_ref[...] = jnp.zeros_like(cnt_ref)

    @pl.when(e < nblk_ref[n])
    def _():
        recv = recv_ref[...]                                   # (1, edge_tile) int32
        edge_tile = recv.shape[1]
        tile_start = n * node_tile
        node_ids = jax.lax.broadcasted_iota(
            jnp.int32, (node_tile, edge_tile), 0) + tile_start
        hit = node_ids == recv                                 # (node_tile, edge_tile)
        cnt_ref[...] += jnp.sum(hit.astype(jnp.float32), axis=-1, keepdims=True)
        mask = hit.astype(_MXU_DTYPE)                          # 0/1 exact in bf16
        acc_ref[...] += jnp.dot(mask, ef_ref[...].astype(_MXU_DTYPE),
                                preferred_element_type=jnp.float32)

    @pl.when(e == pl.num_programs(1) - 1)
    def _():
        o_ref[...] = acc_ref[...] / jnp.maximum(cnt_ref[...], 1.0)   # exact divide


def scatter_mean(ef_sorted, recv_sorted, num_nodes, *,
                 node_tile_max=_NODE_TILE_MAX, edge_tile_max=_EDGE_TILE_MAX):
    """Per-receiver mean of edge features. Edges must be sorted by receiver."""
    E, Hp = ef_sorted.shape
    node_tile = _pick_tile(num_nodes, node_tile_max)
    N_pad = _round_up(num_nodes, node_tile)
    num_node_tiles = N_pad // node_tile
    edge_tile = _pick_lane_tile(E, edge_tile_max)
    E_pad = _round_up(E, edge_tile)
    num_eblk = E_pad // edge_tile

    ef = _pad_rows(ef_sorted, E_pad)
    # padded receiver slots get sentinel N_pad -> never match any node id
    recv_row = jnp.full((1, E_pad), N_pad, jnp.int32).at[0, :E].set(recv_sorted)

    # contiguous edge range per node tile (receiver-sorted) -> edge-block range
    bounds = jnp.arange(num_node_tiles + 1, dtype=jnp.int32) * node_tile
    pos = jnp.searchsorted(recv_sorted, bounds, side="left").astype(jnp.int32)
    starts, ends = pos[:-1], pos[1:]
    counts = ends - starts
    blk_lo = jnp.where(counts > 0, starts // edge_tile, 0).astype(jnp.int32)
    blk_hi = jnp.where(counts > 0, (ends - 1) // edge_tile, 0)
    nblk = jnp.where(counts > 0, blk_hi - blk_lo + 1, 0).astype(jnp.int32)

    def _blk(n, e, lo_ref, nb_ref):
        last = lo_ref[n] + jnp.maximum(nb_ref[n] - 1, 0)
        return jnp.minimum(lo_ref[n] + e, last)

    grid_spec = pltpu.PrefetchScalarGridSpec(
        num_scalar_prefetch=2,
        grid=(num_node_tiles, num_eblk),
        in_specs=[
            pl.BlockSpec((1, edge_tile), lambda n, e, lo, nb: (0, _blk(n, e, lo, nb))),
            pl.BlockSpec((edge_tile, Hp), lambda n, e, lo, nb: (_blk(n, e, lo, nb), 0)),
        ],
        out_specs=pl.BlockSpec((node_tile, Hp), lambda n, e, lo, nb: (n, 0)),
        scratch_shapes=[pltpu.VMEM((node_tile, Hp), jnp.float32),
                        pltpu.VMEM((node_tile, 1), jnp.float32)],
    )

    out = pl.pallas_call(
        functools.partial(_scatter_mean_kernel, node_tile=node_tile),
        out_shape=jax.ShapeDtypeStruct((N_pad, Hp), jnp.float32),
        grid_spec=grid_spec,
        compiler_params=pltpu.CompilerParams(
            dimension_semantics=("parallel", "arbitrary"),
            vmem_limit_bytes=_VMEM_LIMIT),
    )(blk_lo, nblk, recv_row, ef)
    return out[:num_nodes]


# ---------------------------------------------------------------------------
# Kernel 3: fused process_node + node_output (per node-row tile)
# ---------------------------------------------------------------------------
def _node_kernel(nf_ref, me_ref,
                 nw1a, nw1b, nb1, nw2, nb2, ng, nbt,
                 ow1, ob1, ow2, ob2,
                 out_o, *, d_hidden_real):
    y1 = _ffb_compute([nf_ref[...], me_ref[...]], [nw1a[...], nw1b[...]],
                      nb1[...], nw2[...], nb2[...],
                      "silu", ln=(ng[...], nbt[...]), d_out_real=d_hidden_real)
    y2 = _ffb_compute([y1], [ow1[...]], ob1[...], ow2[...], ob2[...],
                      "sigmoid", ln=None)
    out_o[...] = y2


def _node_update(nf_p, me_p, p_node, p_out, *, d_hidden, row_tile_max=_ROW_TILE_MAX):
    N, Hp = nf_p.shape
    Doutp = p_out["w2"].shape[1]
    row_tile = _pick_tile(N, row_tile_max)
    N_pad = _round_up(N, row_tile)
    nf_p = _pad_rows(nf_p, N_pad)
    me_p = _pad_rows(me_p, N_pad)

    param_list = [p_node["w1_blocks"][0], p_node["w1_blocks"][1], p_node["b1"],
                  p_node["w2"], p_node["b2"], p_node["g"], p_node["beta"],
                  p_out["w1_blocks"][0], p_out["b1"], p_out["w2"], p_out["b2"]]

    in_specs = ([pl.BlockSpec((row_tile, Hp), lambda i: (i, 0)),
                 pl.BlockSpec((row_tile, Hp), lambda i: (i, 0))]
                + [pl.BlockSpec(p.shape, lambda i: (0, 0)) for p in param_list])

    out = pl.pallas_call(
        functools.partial(_node_kernel, d_hidden_real=d_hidden),
        out_shape=jax.ShapeDtypeStruct((N_pad, Doutp), jnp.float32),
        grid=(N_pad // row_tile,),
        in_specs=in_specs,
        out_specs=pl.BlockSpec((row_tile, Doutp), lambda i: (i, 0)),
        compiler_params=pltpu.CompilerParams(
            dimension_semantics=("parallel",), vmem_limit_bytes=_VMEM_LIMIT),
    )(nf_p, me_p, *param_list)
    return out[:N]


# ---------------------------------------------------------------------------
# Parameter init (PyTorch-Linear-style uniform), lane-padded, split W1,
# matmul weights stored bf16 (biases / LayerNorm params stay f32).
# ---------------------------------------------------------------------------
def _uniform(key, shape, bound):
    return jax.random.uniform(key, shape, jnp.float32, -bound, bound)


def _ln_params(d_real, d_pad):
    g = jnp.zeros((1, d_pad), jnp.float32).at[:, :d_real].set(1.0)
    beta = jnp.zeros((1, d_pad), jnp.float32)
    return g, beta


def _init_ffb(key, in_sizes, in_pads, d_hidden, hidden_pad, d_out, out_pad, use_ln):
    d_in = sum(in_sizes)
    k1w, k1b, k2w, k2b = jax.random.split(key, 4)
    bound1 = 1.0 / np.sqrt(d_in)
    w1_full = _uniform(k1w, (d_in, d_hidden), bound1)
    b1 = _pad2(_uniform(k1b, (1, d_hidden), bound1), 1, hidden_pad)
    w1_blocks, off = [], 0
    for sz, pad in zip(in_sizes, in_pads):
        w1_blocks.append(_pad2(w1_full[off:off + sz], pad, hidden_pad).astype(_MXU_DTYPE))
        off += sz
    bound2 = 1.0 / np.sqrt(d_hidden)
    w2 = _pad2(_uniform(k2w, (d_hidden, d_out), bound2), hidden_pad, out_pad).astype(_MXU_DTYPE)
    b2 = _pad2(_uniform(k2b, (1, d_out), bound2), 1, out_pad)
    p = {"w1_blocks": tuple(w1_blocks), "b1": b1, "w2": w2, "b2": b2}
    if use_ln:
        g, beta = _ln_params(d_out, out_pad)
        p["g"], p["beta"] = g, beta
    return p


def init_decoder_params(key, input_dim_edge, hidden_dim, output_dim_node):
    H = hidden_dim
    Hp = _round_up(H, _LANE)
    Dinp = _round_up(input_dim_edge, _LANE)
    Doutp = _round_up(output_dim_node, _LANE)
    k1, k2, k3, k4 = jax.random.split(key, 4)
    return {
        "embed_edge": _init_ffb(k1, [input_dim_edge], [Dinp], H, Hp, H, Hp, True),
        "process_edge": _init_ffb(k2, [H, H, H], [Hp, Hp, Hp], H, Hp, H, Hp, True),
        "process_node": _init_ffb(k3, [H, H], [Hp, Hp], H, Hp, H, Hp, True),
        "node_output": _init_ffb(k4, [H], [Hp], H, Hp, output_dim_node, Doutp, False),
    }


# ---------------------------------------------------------------------------
# Decoder forward (indexing glue in JAX, all MLP / scatter compute in Pallas)
# ---------------------------------------------------------------------------
def decoder_forward(params, edge_idx, edge_features, node_latents, node_features, *, dims):
    input_dim_edge, hidden_dim, output_dim_node = dims
    num_nodes = node_features.shape[0]
    Hp = _round_up(hidden_dim, _LANE)
    Dinp = _round_up(input_dim_edge, _LANE)

    senders = edge_idx[:, 0].astype(jnp.int32)
    receivers = edge_idx[:, 1].astype(jnp.int32)

    # Sort edges by receiver once: scatter_mean becomes a single sorted pass.
    order = jnp.argsort(receivers)
    inv_order = jnp.argsort(order)
    recv_s = receivers[order]
    send_s = senders[order]

    # lane-pad features once; everything downstream stays 128-lane dense
    ef_p = _pad_cols(edge_features.astype(jnp.float32), Dinp)[order]
    nl_p = _pad_cols(node_latents.astype(jnp.float32), Hp)
    nf_p = _pad_cols(node_features.astype(jnp.float32), Hp)

    # TODO(synk): move these row gathers into the edge kernel (scalar-prefetched
    # sender/receiver ids + in-kernel gather from VMEM-resident node tables).
    sf_p = jnp.take(nl_p, send_s, axis=0)
    rf_p = jnp.take(nf_p, recv_s, axis=0)

    # fused embed_edge + process_edge (receiver-sorted order)
    emb_s, new_edges_s = _edge_update(
        ef_p, sf_p, rf_p, params["embed_edge"], params["process_edge"],
        d_hidden=hidden_dim)

    # scatter-mean over receivers (already sorted)
    mean_edges_p = scatter_mean(new_edges_s, recv_s, num_nodes)

    # fused process_node + node_output
    out_p = _node_update(nf_p, mean_edges_p, params["process_node"],
                         params["node_output"], d_hidden=hidden_dim)

    embedded_edges = jnp.take(emb_s, inv_order, axis=0)[:, :hidden_dim]
    return embedded_edges, out_p[:, :output_dim_node]


# ---------------------------------------------------------------------------
if __name__ == "__main__":
    NUM_NODES = 32
    NUM_EDGES = 64
    INPUT_DIM_EDGE = 16
    HIDDEN_DIM = 32
    OUTPUT_DIM_NODE = 4

    key = jax.random.PRNGKey(0)
    k_ei, k_ef, k_nl, k_nf, k_par = jax.random.split(key, 5)

    edge_idx = jax.random.randint(k_ei, (NUM_EDGES, 2), 0, NUM_NODES, dtype=jnp.int32)
    edge_features = jax.random.normal(k_ef, (NUM_EDGES, INPUT_DIM_EDGE), jnp.float32)
    node_latents = jax.random.normal(k_nl, (NUM_NODES, HIDDEN_DIM), jnp.float32)
    node_features = jax.random.normal(k_nf, (NUM_NODES, HIDDEN_DIM), jnp.float32)

    params = init_decoder_params(k_par, INPUT_DIM_EDGE, HIDDEN_DIM, OUTPUT_DIM_NODE)

    fwd = jax.jit(functools.partial(
        decoder_forward, dims=(INPUT_DIM_EDGE, HIDDEN_DIM, OUTPUT_DIM_NODE)))
    emb_edges, node_out = fwd(params, edge_idx, edge_features, node_latents, node_features)
    jax.block_until_ready((emb_edges, node_out))

    assert emb_edges.shape == (NUM_EDGES, HIDDEN_DIM)
    assert node_out.shape == (NUM_NODES, OUTPUT_DIM_NODE)
    assert bool(jnp.all(jnp.isfinite(emb_edges))) and bool(jnp.all(jnp.isfinite(node_out)))
    print("KERNEL_OK")
</pallas_src>

<mosaic_0001>
module attributes {stable_mosaic.version = 11 : i64} {
  func.func @_edge_kernel(%arg0: i32, %arg1: memref<32x128xf32, #tpu.memory_space<vmem>>, %arg2: memref<32x128xf32, #tpu.memory_space<vmem>>, %arg3: memref<32x128xf32, #tpu.memory_space<vmem>>, %arg4: memref<128x128xbf16, #tpu.memory_space<vmem>>, %arg5: memref<1x128xf32, #tpu.memory_space<vmem>>, %arg6: memref<128x128xbf16, #tpu.memory_space<vmem>>, %arg7: memref<1x128xf32, #tpu.memory_space<vmem>>, %arg8: memref<1x128xf32, #tpu.memory_space<vmem>>, %arg9: memref<1x128xf32, #tpu.memory_space<vmem>>, %arg10: memref<128x128xbf16, #tpu.memory_space<vmem>>, %arg11: memref<128x128xbf16, #tpu.memory_space<vmem>>, %arg12: memref<128x128xbf16, #tpu.memory_space<vmem>>, %arg13: memref<1x128xf32, #tpu.memory_space<vmem>>, %arg14: memref<128x128xbf16, #tpu.memory_space<vmem>>, %arg15: memref<1x128xf32, #tpu.memory_space<vmem>>, %arg16: memref<1x128xf32, #tpu.memory_space<vmem>>, %arg17: memref<1x128xf32, #tpu.memory_space<vmem>>, %arg18: memref<32x128xf32, #tpu.memory_space<vmem>>, %arg19: memref<32x128xf32, #tpu.memory_space<vmem>>) attributes {dimension_semantics = [#tpu.dimension_semantics<parallel>], iteration_bounds = array<i64: 2>, scalar_prefetch = 0 : i64, scratch_operands = 0 : i64, tpu.core_type = #tpu.core_type<tc>, window_params = [{transform_indices = @transform_0, window_bounds = array<i64: 32, 128>}, {transform_indices = @transform_1, window_bounds = array<i64: 32, 128>}, {transform_indices = @transform_2, window_bounds = array<i64: 32, 128>}, {pipeline_mode = #tpu.pipeline_mode<synchronous>, transform_indices = @transform_3, window_bounds = array<i64: 128, 128>}, {pipeline_mode = #tpu.pipeline_mode<synchronous>, transform_indices = @transform_4, window_bounds = array<i64: 1, 128>}, {pipeline_mode = #tpu.pipeline_mode<synchronous>, transform_indices = @transform_5, window_bounds = array<i64: 128, 128>}, {pipeline_mode = #tpu.pipeline_mode<synchronous>, transform_indices = @transform_6, window_bounds = array<i64: 1, 128>}, {pipeline_mode = #tpu.pipeline_mode<synchronous>, transform_indices = @transform_7, window_bounds = array<i64: 1, 128>}, {pipeline_mode = #tpu.pipeline_mode<synchronous>, transform_indices = @transform_8, window_bounds = array<i64: 1, 128>}, {pipeline_mode = #tpu.pipeline_mode<synchronous>, transform_indices = @transform_9, window_bounds = array<i64: 128, 128>}, {pipeline_mode = #tpu.pipeline_mode<synchronous>, transform_indices = @transform_10, window_bounds = array<i64: 128, 128>}, {pipeline_mode = #tpu.pipeline_mode<synchronous>, transform_indices = @transform_11, window_bounds = array<i64: 128, 128>}, {pipeline_mode = #tpu.pipeline_mode<synchronous>, transform_indices = @transform_12, window_bounds = array<i64: 1, 128>}, {pipeline_mode = #tpu.pipeline_mode<synchronous>, transform_indices = @transform_13, window_bounds = array<i64: 128, 128>}, {pipeline_mode = #tpu.pipeline_mode<synchronous>, transform_indices = @transform_14, window_bounds = array<i64: 1, 128>}, {pipeline_mode = #tpu.pipeline_mode<synchronous>, transform_indices = @transform_15, window_bounds = array<i64: 1, 128>}, {pipeline_mode = #tpu.pipeline_mode<synchronous>, transform_indices = @transform_16, window_bounds = array<i64: 1, 128>}, {transform_indices = @transform_17, window_bounds = array<i64: 32, 128>}, {transform_indices = @transform_18, window_bounds = array<i64: 32, 128>}]} {
    %c0 = arith.constant 0 : index
    %c0_0 = arith.constant 0 : index
    %0 = vector.load %arg1[%c0, %c0_0] : memref<32x128xf32, #tpu.memory_space<vmem>>, vector<32x128xf32>
    %c0_1 = arith.constant 0 : index
    %c0_2 = arith.constant 0 : index
    %1 = vector.load %arg4[%c0_1, %c0_2] : memref<128x128xbf16, #tpu.memory_space<vmem>>, vector<128x128xbf16>
    %c0_3 = arith.constant 0 : index
    %c0_4 = arith.constant 0 : index
    %2 = vector.load %arg5[%c0_3, %c0_4] : memref<1x128xf32, #tpu.memory_space<vmem>>, vector<1x128xf32>
    %c0_5 = arith.constant 0 : index
    %c0_6 = arith.constant 0 : index
    %3 = vector.load %arg6[%c0_5, %c0_6] : memref<128x128xbf16, #tpu.memory_space<vmem>>, vector<128x128xbf16>
    %c0_7 = arith.constant 0 : index
    %c0_8 = arith.constant 0 : index
    %4 = vector.load %arg7[%c0_7, %c0_8] : memref<1x128xf32, #tpu.memory_space<vmem>>, vector<1x128xf32>
    %c0_9 = arith.constant 0 : index
    %c0_10 = arith.constant 0 : index
    %5 = vector.load %arg8[%c0_9, %c0_10] : memref<1x128xf32, #tpu.memory_space<vmem>>, vector<1x128xf32>
    %c0_11 = arith.constant 0 : index
    %c0_12 = arith.constant 0 : index
    %6 = vector.load %arg9[%c0_11, %c0_12] : memref<1x128xf32, #tpu.memory_space<vmem>>, vector<1x128xf32>
    %7 = arith.truncf %0 : vector<32x128xf32> to vector<32x128xbf16>
    %cst = arith.constant dense<0.000000e+00> : vector<32x128xf32>
    %8 = tpu.matmul %7, %1, %cst {dimension_numbers = #tpu.dot_dimension_numbers<[1], [0], [0], [1], [0, 0, 1, 1], [], []>} : vector<32x128xbf16>, vector<128x128xbf16>, vector<32x128xf32> -> vector<32x128xf32>
    %9 = vector.broadcast %2 : vector<1x128xf32> to vector<32x128xf32>
    %10 = arith.addf %8, %9 : vector<32x128xf32>
    %11 = arith.negf %10 : vector<32x128xf32>
    %12 = math.exp %11 : vector<32x128xf32>
    %cst_13 = arith.constant 1.000000e+00 : f32
    %13 = vector.broadcast %cst_13 : f32 to vector<32x128xf32>
    %14 = arith.addf %13, %12 : vector<32x128xf32>
    %15 = arith.divf %13, %14 : vector<32x128xf32>
    %16 = arith.mulf %10, %15 : vector<32x128xf32>
    %17 = arith.truncf %16 : vector<32x128xf32> to vector<32x128xbf16>
    %cst_14 = arith.constant dense<0.000000e+00> : vector<32x128xf32>
    %18 = tpu.matmul %17, %3, %cst_14 {dimension_numbers = #tpu.dot_dimension_numbers<[1], [0], [0], [1], [0, 0, 1, 1], [], []>} : vector<32x128xbf16>, vector<128x128xbf16>, vector<32x128xf32> -> vector<32x128xf32>
    %19 = vector.broadcast %4 : vector<1x128xf32> to vector<32x128xf32>
    %20 = arith.addf %18, %19 : vector<32x128xf32>
    %cst_15 = arith.constant dense<0.000000e+00> : vector<32xf32>
    %21 = vector.multi_reduction <add>, %20, %cst_15 [1] : vector<32x128xf32> to vector<32xf32>
    %22 = vector.shape_cast %21 : vector<32xf32> to vector<32x1xf32>
    %cst_16 = arith.constant 3.125000e-02 : f32
    %23 = vector.broadcast %cst_16 : f32 to vector<32x1xf32>
    %24 = arith.mulf %22, %23 : vector<32x1xf32>
    %25 = vector.broadcast %24 : vector<32x1xf32> to vector<32x128xf32>
    %26 = arith.subf %20, %25 : vector<32x128xf32>
    %27 = tpu.iota {dimensions = array<i32: 1>} : vector<32x128xi32>
    %c32_i32 = arith.constant 32 : i32
    %28 = vector.broadcast %c32_i32 : i32 to vector<32x128xi32>
    %29 = arith.cmpi slt, %27, %28 : vector<32x128xi32>
    %cst_17 = arith.constant 0.000000e+00 : f32
    %30 = vector.broadcast %cst_17 : f32 to vector<32x128xf32>
    %31 = arith.select %29, %26, %30 : vector<32x128xi1>, vector<32x128xf32>
    %32 = arith.mulf %31, %31 : vector<32x128xf32>
    %cst_18 = arith.constant dense<0.000000e+00> : vector<32xf32>
    %33 = vector.multi_reduction <add>, %32, %cst_18 [1] : vector<32x128xf32> to vector<32xf32>
    %34 = vector.shape_cast %33 : vector<32xf32> to vector<32x1xf32>
    %cst_19 = arith.constant 3.125000e-02 : f32
    %35 = vector.broadcast %cst_19 : f32 to vector<32x1xf32>
    %36 = arith.mulf %34, %35 : vector<32x1xf32>
    %37 = vector.broadcast %24 : vector<32x1xf32> to vector<32x128xf32>
    %38 = arith.subf %20, %37 : vector<32x128xf32>
    %cst_20 = arith.constant 9.99999974E-6 : f32
    %39 = vector.broadcast %cst_20 : f32 to vector<32x1xf32>
    %40 = arith.addf %36, %39 : vector<32x1xf32>
    %41 = math.rsqrt %40 : vector<32x1xf32>
    %42 = vector.broadcast %41 : vector<32x1xf32> to vector<32x128xf32>
    %43 = arith.mulf %38, %42 : vector<32x128xf32>
    %44 = vector.broadcast %5 : vector<1x128xf32> to vector<32x128xf32>
    %45 = arith.mulf %43, %44 : vector<32x128xf32>
    %46 = vector.broadcast %6 : vector<1x128xf32> to vector<32x128xf32>
    %47 = arith.addf %45, %46 : vector<32x128xf32>
    %c0_21 = arith.constant 0 : index
    %c0_22 = arith.constant 0 : index
    %48 = vector.load %arg18[%c0_21, %c0_22] : memref<32x128xf32, #tpu.memory_space<vmem>>, vector<32x128xf32>
    tpu.vector_store %arg18[%c0_21, %c0_22], %47 {strides = array<i32>} : memref<32x128xf32, #tpu.memory_space<vmem>>, vector<32x128xf32>,
    %c0_23 = arith.constant 0 : index
    %c0_24 = arith.constant 0 : index
    %49 = vector.load %arg2[%c0_23, %c0_24] : memref<32x128xf32, #tpu.memory_space<vmem>>, vector<32x128xf32>
    %c0_25 = arith.constant 0 : index
    %c0_26 = arith.constant 0 : index
    %50 = vector.load %arg3[%c0_25, %c0_26] : memref<32x128xf32, #tpu.memory_space<vmem>>, vector<32x128xf32>
    %c0_27 = arith.constant 0 : index
    %c0_28 = arith.constant 0 : index
    %51 = vector.load %arg10[%c0_27, %c0_28] : memref<128x128xbf16, #tpu.memory_space<vmem>>, vector<128x128xbf16>
    %c0_29 = arith.constant 0 : index
    %c0_30 = arith.constant 0 : index
    %52 = vector.load %arg11[%c0_29, %c0_30] : memref<128x128xbf16, #tpu.memory_space<vmem>>, vector<128x128xbf16>
    %c0_31 = arith.constant 0 : index
    %c0_32 = arith.constant 0 : index
    %53 = vector.load %arg12[%c0_31, %c0_32] : memref<128x128xbf16, #tpu.memory_space<vmem>>, vector<128x128xbf16>
    %c0_33 = arith.constant 0 : index
    %c0_34 = arith.constant 0 : index
    %54 = vector.load %arg13[%c0_33, %c0_34] : memref<1x128xf32, #tpu.memory_space<vmem>>, vector<1x128xf32>
    %c0_35 = arith.constant 0 : index
    %c0_36 = arith.constant 0 : index
    %55 = vector.load %arg14[%c0_35, %c0_36] : memref<128x128xbf16, #tpu.memory_space<vmem>>, vector<128x128xbf16>
    %c0_37 = arith.constant 0 : index
    %c0_38 = arith.constant 0 : index
    %56 = vector.load %arg15[%c0_37, %c0_38] : memref<1x128xf32, #tpu.memory_space<vmem>>, vector<1x128xf32>
    %c0_39 = arith.constant 0 : index
    %c0_40 = arith.constant 0 : index
    %57 = vector.load %arg16[%c0_39, %c0_40] : memref<1x128xf32, #tpu.memory_space<vmem>>, vector<1x128xf32>
    %c0_41 = arith.constant 0 : index
    %c0_42 = arith.constant 0 : index
    %58 = vector.load %arg17[%c0_41, %c0_42] : memref<1x128xf32, #tpu.memory_space<vmem>>, vector<1x128xf32>
    %59 = arith.truncf %49 : vector<32x128xf32> to vector<32x128xbf16>
    %cst_43 = arith.constant dense<0.000000e+00> : vector<32x128xf32>
    %60 = tpu.matmul %59, %51, %cst_43 {dimension_numbers = #tpu.dot_dimension_numbers<[1], [0], [0], [1], [0, 0, 1, 1], [], []>} : vector<32x128xbf16>, vector<128x128xbf16>, vector<32x128xf32> -> vector<32x128xf32>
    %61 = arith.truncf %50 : vector<32x128xf32> to vector<32x128xbf16>
    %cst_44 = arith.constant dense<0.000000e+00> : vector<32x128xf32>
    %62 = tpu.matmul %61, %52, %cst_44 {dimension_numbers = #tpu.dot_dimension_numbers<[1], [0], [0], [1], [0, 0, 1, 1], [], []>} : vector<32x128xbf16>, vector<128x128xbf16>, vector<32x128xf32> -> vector<32x128xf32>
    %63 = arith.addf %60, %62 : vector<32x128xf32>
    %64 = arith.truncf %47 : vector<32x128xf32> to vector<32x128xbf16>
    %cst_45 = arith.constant dense<0.000000e+00> : vector<32x128xf32>
    %65 = tpu.matmul %64, %53, %cst_45 {dimension_numbers = #tpu.dot_dimension_numbers<[1], [0], [0], [1], [0, 0, 1, 1], [], []>} : vector<32x128xbf16>, vector<128x128xbf16>, vector<32x128xf32> -> vector<32x128xf32>
    %66 = arith.addf %63, %65 : vector<32x128xf32>
    %67 = vector.broadcast %54 : vector<1x128xf32> to vector<32x128xf32>
    %68 = arith.addf %66, %67 : vector<32x128xf32>
    %69 = arith.negf %68 : vector<32x128xf32>
    %70 = math.exp %69 : vector<32x128xf32>
    %cst_46 = arith.constant 1.000000e+00 : f32
    %71 = vector.broadcast %cst_46 : f32 to vector<32x128xf32>
    %72 = arith.addf %71, %70 : vector<32x128xf32>
    %73 = arith.divf %71, %72 : vector<32x128xf32>
    %74 = arith.mulf %68, %73 : vector<32x128xf32>
    %75 = arith.truncf %74 : vector<32x128xf32> to vector<32x128xbf16>
    %cst_47 = arith.constant dense<0.000000e+00> : vector<32x128xf32>
    %76 = tpu.matmul %75, %55, %cst_47 {dimension_numbers = #tpu.dot_dimension_numbers<[1], [0], [0], [1], [0, 0, 1, 1], [], []>} : vector<32x128xbf16>, vector<128x128xbf16>, vector<32x128xf32> -> vector<32x128xf32>
    %77 = vector.broadcast %56 : vector<1x128xf32> to vector<32x128xf32>
    %78 = arith.addf %76, %77 : vector<32x128xf32>
    %cst_48 = arith.constant dense<0.000000e+00> : vector<32xf32>
    %79 = vector.multi_reduction <add>, %78, %cst_48 [1] : vector<32x128xf32> to vector<32xf32>
    %80 = vector.shape_cast %79 : vector<32xf32> to vector<32x1xf32>
    %cst_49 = arith.constant 3.125000e-02 : f32
    %81 = vector.broadcast %cst_49 : f32 to vector<32x1xf32>
    %82 = arith.mulf %80, %81 : vector<32x1xf32>
    %83 = vector.broadcast %82 : vector<32x1xf32> to vector<32x128xf32>
    %84 = arith.subf %78, %83 : vector<32x128xf32>
    %85 = tpu.iota {dimensions = array<i32: 1>} : vector<32x128xi32>
    %c32_i32_50 = arith.constant 32 : i32
    %86 = vector.broadcast %c32_i32_50 : i32 to vector<32x128xi32>
    %87 = arith.cmpi slt, %85, %86 : vector<32x128xi32>
    %cst_51 = arith.constant 0.000000e+00 : f32
    %88 = vector.broadcast %cst_51 : f32 to vector<32x128xf32>
    %89 = arith.select %87, %84, %88 : vector<32x128xi1>, vector<32x128xf32>
    %90 = arith.mulf %89, %89 : vector<32x128xf32>
    %cst_52 = arith.constant dense<0.000000e+00> : vector<32xf32>
    %91 = vector.multi_reduction <add>, %90, %cst_52 [1] : vector<32x128xf32> to vector<32xf32>
    %92 = vector.shape_cast %91 : vector<32xf32> to vector<32x1xf32>
    %cst_53 = arith.constant 3.125000e-02 : f32
    %93 = vector.broadcast %cst_53 : f32 to vector<32x1xf32>
    %94 = arith.mulf %92, %93 : vector<32x1xf32>
    %95 = vector.broadcast %82 : vector<32x1xf32> to vector<32x128xf32>
    %96 = arith.subf %78, %95 : vector<32x128xf32>
    %cst_54 = arith.constant 9.99999974E-6 : f32
    %97 = vector.broadcast %cst_54 : f32 to vector<32x1xf32>
    %98 = arith.addf %94, %97 : vector<32x1xf32>
    %99 = math.rsqrt %98 : vector<32x1xf32>
    %100 = vector.broadcast %99 : vector<32x1xf32> to vector<32x128xf32>
    %101 = arith.mulf %96, %100 : vector<32x128xf32>
    %102 = vector.broadcast %57 : vector<1x128xf32> to vector<32x128xf32>
    %103 = arith.mulf %101, %102 : vector<32x128xf32>
    %104 = vector.broadcast %58 : vector<1x128xf32> to vector<32x128xf32>
    %105 = arith.addf %103, %104 : vector<32x128xf32>
    %c0_55 = arith.constant 0 : index
    %c0_56 = arith.constant 0 : index
    %106 = vector.load %arg19[%c0_55, %c0_56] : memref<32x128xf32, #tpu.memory_space<vmem>>, vector<32x128xf32>
    tpu.vector_store %arg19[%c0_55, %c0_56], %105 {strides = array<i32>} : memref<32x128xf32, #tpu.memory_space<vmem>>, vector<32x128xf32>,
    return
  }
  func.func @transform_0(%arg0: i32) -> (i32, i32) {
    %c0_i32 = arith.constant 0 : i32
    %c0_i32_0 = arith.constant 0 : i32
    return %arg0, %c0_i32 : i32, i32
  }
  func.func @transform_1(%arg0: i32) -> (i32, i32) {
    %c0_i32 = arith.constant 0 : i32
    %c0_i32_0 = arith.constant 0 : i32
    return %arg0, %c0_i32 : i32, i32
  }
  func.func @transform_2(%arg0: i32) -> (i32, i32) {
    %c0_i32 = arith.constant 0 : i32
    %c0_i32_0 = arith.constant 0 : i32
    return %arg0, %c0_i32 : i32, i32
  }
  func.func @transform_3(%arg0: i32) -> (i32, i32) {
    %c0_i32 = arith.constant 0 : i32
    %c0_i32_0 = arith.constant 0 : i32
    %c0_i32_1 = arith.constant 0 : i32
    return %c0_i32, %c0_i32_0 : i32, i32
  }
  func.func @transform_4(%arg0: i32) -> (i32, i32) {
    %c0_i32 = arith.constant 0 : i32
    %c0_i32_0 = arith.constant 0 : i32
    %c0_i32_1 = arith.constant 0 : i32
    return %c0_i32, %c0_i32_0 : i32, i32
  }
  func.func @transform_5(%arg0: i32) -> (i32, i32) {
    %c0_i32 = arith.constant 0 : i32
    %c0_i32_0 = arith.constant 0 : i32
    %c0_i32_1 = arith.constant 0 : i32
    return %c0_i32, %c0_i32_0 : i32, i32
  }
  func.func @transform_6(%arg0: i32) -> (i32, i32) {
    %c0_i32 = arith.constant 0 : i32
    %c0_i32_0 = arith.constant 0 : i32
    %c0_i32_1 = arith.constant 0 : i32
    return %c0_i32, %c0_i32_0 : i32, i32
  }
  func.func @transform_7(%arg0: i32) -> (i32, i32) {
    %c0_i32 = arith.constant 0 : i32
    %c0_i32_0 = arith.constant 0 : i32
    %c0_i32_1 = arith.constant 0 : i32
    return %c0_i32, %c0_i32_0 : i32, i32
  }
  func.func @transform_8(%arg0: i32) -> (i32, i32) {
    %c0_i32 = arith.constant 0 : i32
    %c0_i32_0 = arith.constant 0 : i32
    %c0_i32_1 = arith.constant 0 : i32
    return %c0_i32, %c0_i32_0 : i32, i32
  }
  func.func @transform_9(%arg0: i32) -> (i32, i32) {
    %c0_i32 = arith.constant 0 : i32
    %c0_i32_0 = arith.constant 0 : i32
    %c0_i32_1 = arith.constant 0 : i32
    return %c0_i32, %c0_i32_0 : i32, i32
  }
  func.func @transform_10(%arg0: i32) -> (i32, i32) {
    %c0_i32 = arith.constant 0 : i32
    %c0_i32_0 = arith.constant 0 : i32
    %c0_i32_1 = arith.constant 0 : i32
    return %c0_i32, %c0_i32_0 : i32, i32
  }
  func.func @transform_11(%arg0: i32) -> (i32, i32) {
    %c0_i32 = arith.constant 0 : i32
    %c0_i32_0 = arith.constant 0 : i32
    %c0_i32_1 = arith.constant 0 : i32
    return %c0_i32, %c0_i32_0 : i32, i32
  }
  func.func @transform_12(%arg0: i32) -> (i32, i32) {
    %c0_i32 = arith.constant 0 : i32
    %c0_i32_0 = arith.constant 0 : i32
    %c0_i32_1 = arith.constant 0 : i32
    return %c0_i32, %c0_i32_0 : i32, i32
  }
  func.func @transform_13(%arg0: i32) -> (i32, i32) {
    %c0_i32 = arith.constant 0 : i32
    %c0_i32_0 = arith.constant 0 : i32
    %c0_i32_1 = arith.constant 0 : i32
    return %c0_i32, %c0_i32_0 : i32, i32
  }
  func.func @transform_14(%arg0: i32) -> (i32, i32) {
    %c0_i32 = arith.constant 0 : i32
    %c0_i32_0 = arith.constant 0 : i32
    %c0_i32_1 = arith.constant 0 : i32
    return %c0_i32, %c0_i32_0 : i32, i32
  }
  func.func @transform_15(%arg0: i32) -> (i32, i32) {
    %c0_i32 = arith.constant 0 : i32
    %c0_i32_0 = arith.constant 0 : i32
    %c0_i32_1 = arith.constant 0 : i32
    return %c0_i32, %c0_i32_0 : i32, i32
  }
  func.func @transform_16(%arg0: i32) -> (i32, i32) {
    %c0_i32 = arith.constant 0 : i32
    %c0_i32_0 = arith.constant 0 : i32
    %c0_i32_1 = arith.constant 0 : i32
    return %c0_i32, %c0_i32_0 : i32, i32
  }
  func.func @transform_17(%arg0: i32) -> (i32, i32) {
    %c0_i32 = arith.constant 0 : i32
    %c0_i32_0 = arith.constant 0 : i32
    return %arg0, %c0_i32 : i32, i32
  }
  func.func @transform_18(%arg0: i32) -> (i32, i32) {
    %c0_i32 = arith.constant 0 : i32
    %c0_i32_0 = arith.constant 0 : i32
    return %arg0, %c0_i32 : i32, i32
  }
}

module attributes {stable_mosaic.version = 11 : i64} {
  func.func @_scatter_mean_kernel(%arg0: i32, %arg1: i32, %arg2: memref<2xi32, #tpu.memory_space<smem>>, %arg3: memref<2xi32, #tpu.memory_space<smem>>, %arg4: memref<1x128xi32, #tpu.memory_space<vmem>>, %arg5: memref<128x128xf32, #tpu.memory_space<vmem>>, %arg6: memref<16x128xf32, #tpu.memory_space<vmem>>, %arg7: memref<16x128xf32, #tpu.memory_space<vmem>>, %arg8: memref<16x1xf32, #tpu.memory_space<vmem>>) attributes {dimension_semantics = [#tpu.dimension_semantics<parallel>, #tpu.dimension_semantics<arbitrary>], iteration_bounds = array<i64: 2, 1>, scalar_prefetch = 2 : i64, scratch_operands = 2 : i64, tpu.core_type = #tpu.core_type<tc>, window_params = [{transform_indices = @transform_0, window_bounds = array<i64: 1, 128>}, {transform_indices = @transform_1, window_bounds = array<i64: 128, 128>}, {transform_indices = @transform_2, window_bounds = array<i64: 16, 128>}]} {
    %c0_i32 = arith.constant 0 : i32
    %0 = arith.cmpi eq, %arg1, %c0_i32 : i32
    %1 = arith.extui %0 : i1 to i32
    %c0_i32_0 = arith.constant 0 : i32
    %2 = arith.cmpi ne, %1, %c0_i32_0 : i32
    scf.if %2 {
      %cst = arith.constant 0.000000e+00 : f32
      %11 = vector.broadcast %cst : f32 to vector<16x128xf32>
      %c0 = arith.constant 0 : index
      %c0_4 = arith.constant 0 : index
      %12 = vector.load %arg7[%c0, %c0_4] : memref<16x128xf32, #tpu.memory_space<vmem>>, vector<16x128xf32>
      tpu.vector_store %arg7[%c0, %c0_4], %11 {strides = array<i32>} : memref<16x128xf32, #tpu.memory_space<vmem>>, vector<16x128xf32>,
      %cst_5 = arith.constant 0.000000e+00 : f32
      %13 = vector.broadcast %cst_5 : f32 to vector<16x1xf32>
      %c0_6 = arith.constant 0 : index
      %c0_7 = arith.constant 0 : index
      %14 = vector.load %arg8[%c0_6, %c0_7] : memref<16x1xf32, #tpu.memory_space<vmem>>, vector<16x1xf32>
      tpu.vector_store %arg8[%c0_6, %c0_7], %13 {strides = array<i32>} : memref<16x1xf32, #tpu.memory_space<vmem>>, vector<16x1xf32>,
    } else {
    }
    %3 = arith.index_cast %arg0 : i32 to index
    %4 = memref.load %arg3[%3] : memref<2xi32, #tpu.memory_space<smem>>
    %5 = arith.cmpi slt, %arg1, %4 : i32
    %6 = arith.extui %5 : i1 to i32
    %c0_i32_1 = arith.constant 0 : i32
    %7 = arith.cmpi ne, %6, %c0_i32_1 : i32
    scf.if %7 {
      %c0 = arith.constant 0 : index
      %c0_4 = arith.constant 0 : index
      %11 = vector.load %arg4[%c0, %c0_4] : memref<1x128xi32, #tpu.memory_space<vmem>>, vector<1x128xi32>
      %c16_i32 = arith.constant 16 : i32
      %12 = arith.muli %arg0, %c16_i32 : i32
      %13 = tpu.iota {dimensions = array<i32: 0>} : vector<16x128xi32>
      %14 = vector.broadcast %12 : i32 to vector<16x128xi32>
      %15 = arith.addi %13, %14 : vector<16x128xi32>
      %16 = vector.broadcast %11 : vector<1x128xi32> to vector<16x128xi32>
      %17 = arith.cmpi eq, %15, %16 : vector<16x128xi32>
      %c0_5 = arith.constant 0 : index
      %c0_6 = arith.constant 0 : index
      %18 = vector.load %arg8[%c0_5, %c0_6] : memref<16x1xf32, #tpu.memory_space<vmem>>, vector<16x1xf32>
      %19 = arith.extui %17 : vector<16x128xi1> to vector<16x128xi32>
      %20 = arith.sitofp %19 : vector<16x128xi32> to vector<16x128xf32>
      %cst = arith.constant dense<0.000000e+00> : vector<16xf32>
      %21 = vector.multi_reduction <add>, %20, %cst [1] : vector<16x128xf32> to vector<16xf32>
      %22 = vector.shape_cast %21 : vector<16xf32> to vector<16x1xf32>
      %23 = arith.addf %18, %22 : vector<16x1xf32>
      %c0_7 = arith.constant 0 : index
      %c0_8 = arith.constant 0 : index
      %24 = vector.load %arg8[%c0_7, %c0_8] : memref<16x1xf32, #tpu.memory_space<vmem>>, vector<16x1xf32>
      tpu.vector_store %arg8[%c0_7, %c0_8], %23 {strides = array<i32>} : memref<16x1xf32, #tpu.memory_space<vmem>>, vector<16x1xf32>,
      %25 = arith.extui %17 : vector<16x128xi1> to vector<16x128xi32>
      %26 = arith.sitofp %25 : vector<16x128xi32> to vector<16x128xf32>
      %27 = arith.truncf %26 : vector<16x128xf32> to vector<16x128xbf16>
      %c0_9 = arith.constant 0 : index
      %c0_10 = arith.constant 0 : index
      %28 = vector.load %arg7[%c0_9, %c0_10] : memref<16x128xf32, #tpu.memory_space<vmem>>, vector<16x128xf32>
      %c0_11 = arith.constant 0 : index
      %c0_12 = arith.constant 0 : index
      %29 = vector.load %arg5[%c0_11, %c0_12] : memref<128x128xf32, #tpu.memory_space<vmem>>, vector<128x128xf32>
      %30 = arith.truncf %29 : vector<128x128xf32> to vector<128x128xbf16>
      %cst_13 = arith.constant dense<0.000000e+00> : vector<16x128xf32>
      %31 = tpu.matmul %27, %30, %cst_13 {dimension_numbers = #tpu.dot_dimension_numbers<[1], [0], [0], [1], [0, 0, 1, 1], [], []>} : vector<16x128xbf16>, vector<128x128xbf16>, vector<16x128xf32> -> vector<16x128xf32>
      %32 = arith.addf %28, %31 : vector<16x128xf32>
      %c0_14 = arith.constant 0 : index
      %c0_15 = arith.constant 0 : index
      %33 = vector.load %arg7[%c0_14, %c0_15] : memref<16x128xf32, #tpu.memory_space<vmem>>, vector<16x128xf32>
      tpu.vector_store %arg7[%c0_14, %c0_15], %32 {strides = array<i32>} : memref<16x128xf32, #tpu.memory_space<vmem>>, vector<16x128xf32>,
    } else {
    }
    %c0_i32_2 = arith.constant 0 : i32
    %8 = arith.cmpi eq, %arg1, %c0_i32_2 : i32
    %9 = arith.extui %8 : i1 to i32
    %c0_i32_3 = arith.constant 0 : i32
    %10 = arith.cmpi ne, %9, %c0_i32_3 : i32
    scf.if %10 {
      %c0 = arith.constant 0 : index
      %c0_4 = arith.constant 0 : index
      %11 = vector.load %arg7[%c0, %c0_4] : memref<16x128xf32, #tpu.memory_space<vmem>>, vector<16x128xf32>
      %c0_5 = arith.constant 0 : index
      %c0_6 = arith.constant 0 : index
      %12 = vector.load %arg8[%c0_5, %c0_6] : memref<16x1xf32, #tpu.memory_space<vmem>>, vector<16x1xf32>
      %cst = arith.constant 1.000000e+00 : f32
      %13 = vector.broadcast %cst : f32 to vector<16x1xf32>
      %14 = arith.maximumf %12, %13 : vector<16x1xf32>
      %15 = vector.broadcast %14 : vector<16x1xf32> to vector<16x128xf32>
      %16 = arith.divf %11, %15 : vector<16x128xf32>
      %c0_7 = arith.constant 0 : index
      %c0_8 = arith.constant 0 : index
      %17 = vector.load %arg6[%c0_7, %c0_8] : memref<16x128xf32, #tpu.memory_space<vmem>>, vector<16x128xf32>
      tpu.vector_store %arg6[%c0_7, %c0_8], %16 {strides = array<i32>} : memref<16x128xf32, #tpu.memory_space<vmem>>, vector<16x128xf32>,
    } else {
    }
    return
  }
  func.func @transform_0(%arg0: i32, %arg1: i32, %arg2: memref<2xi32, #tpu.memory_space<smem>>, %arg3: memref<2xi32, #tpu.memory_space<smem>>) -> (i32, i32) {
    %0 = arith.index_cast %arg0 : i32 to index
    %1 = memref.load %arg2[%0] : memref<2xi32, #tpu.memory_space<smem>>
    %2 = arith.index_cast %arg0 : i32 to index
    %3 = memref.load %arg3[%2] : memref<2xi32, #tpu.memory_space<smem>>
    %c1_i32 = arith.constant 1 : i32
    %4 = arith.subi %3, %c1_i32 : i32
    %c0_i32 = arith.constant 0 : i32
    %5 = arith.maxsi %4, %c0_i32 : i32
    %6 = arith.addi %1, %5 : i32
    %7 = arith.index_cast %arg0 : i32 to index
    %8 = memref.load %arg2[%7] : memref<2xi32, #tpu.memory_space<smem>>
    %9 = arith.addi %8, %arg1 : i32
    %10 = arith.minsi %9, %6 : i32
    %c0_i32_0 = arith.constant 0 : i32
    %c0_i32_1 = arith.constant 0 : i32
    return %c0_i32_0, %10 : i32, i32
  }
  func.func @transform_1(%arg0: i32, %arg1: i32, %arg2: memref<2xi32, #tpu.memory_space<smem>>, %arg3: memref<2xi32, #tpu.memory_space<smem>>) -> (i32, i32) {
    %0 = arith.index_cast %arg0 : i32 to index
    %1 = memref.load %arg2[%0] : memref<2xi32, #tpu.memory_space<smem>>
    %2 = arith.index_cast %arg0 : i32 to index
    %3 = memref.load %arg3[%2] : memref<2xi32, #tpu.memory_space<smem>>
    %c1_i32 = arith.constant 1 : i32
    %4 = arith.subi %3, %c1_i32 : i32
    %c0_i32 = arith.constant 0 : i32
    %5 = arith.maxsi %4, %c0_i32 : i32
    %6 = arith.addi %1, %5 : i32
    %7 = arith.index_cast %arg0 : i32 to index
    %8 = memref.load %arg2[%7] : memref<2xi32, #tpu.memory_space<smem>>
    %9 = arith.addi %8, %arg1 : i32
    %10 = arith.minsi %9, %6 : i32
    %c0_i32_0 = arith.constant 0 : i32
    %c0_i32_1 = arith.constant 0 : i32
    return %10, %c0_i32_0 : i32, i32
  }
  func.func @transform_2(%arg0: i32, %arg1: i32, %arg2: memref<2xi32, #tpu.memory_space<smem>>, %arg3: memref<2xi32, #tpu.memory_space<smem>>) -> (i32, i32) {
    %c0_i32 = arith.constant 0 : i32
    %c0_i32_0 = arith.constant 0 : i32
    return %arg0, %c0_i32 : i32, i32
  }
}

module attributes {stable_mosaic.version = 11 : i64} {
  func.func @_node_kernel(%arg0: i32, %arg1: memref<16x128xf32, #tpu.memory_space<vmem>>, %arg2: memref<16x128xf32, #tpu.memory_space<vmem>>, %arg3: memref<128x128xbf16, #tpu.memory_space<vmem>>, %arg4: memref<128x128xbf16, #tpu.memory_space<vmem>>, %arg5: memref<1x128xf32, #tpu.memory_space<vmem>>, %arg6: memref<128x128xbf16, #tpu.memory_space<vmem>>, %arg7: memref<1x128xf32, #tpu.memory_space<vmem>>, %arg8: memref<1x128xf32, #tpu.memory_space<vmem>>, %arg9: memref<1x128xf32, #tpu.memory_space<vmem>>, %arg10: memref<128x128xbf16, #tpu.memory_space<vmem>>, %arg11: memref<1x128xf32, #tpu.memory_space<vmem>>, %arg12: memref<128x128xbf16, #tpu.memory_space<vmem>>, %arg13: memref<1x128xf32, #tpu.memory_space<vmem>>, %arg14: memref<16x128xf32, #tpu.memory_space<vmem>>) attributes {dimension_semantics = [#tpu.dimension_semantics<parallel>], iteration_bounds = array<i64: 2>, scalar_prefetch = 0 : i64, scratch_operands = 0 : i64, tpu.core_type = #tpu.core_type<tc>, window_params = [{transform_indices = @transform_0, window_bounds = array<i64: 16, 128>}, {transform_indices = @transform_1, window_bounds = array<i64: 16, 128>}, {pipeline_mode = #tpu.pipeline_mode<synchronous>, transform_indices = @transform_2, window_bounds = array<i64: 128, 128>}, {pipeline_mode = #tpu.pipeline_mode<synchronous>, transform_indices = @transform_3, window_bounds = array<i64: 128, 128>}, {pipeline_mode = #tpu.pipeline_mode<synchronous>, transform_indices = @transform_4, window_bounds = array<i64: 1, 128>}, {pipeline_mode = #tpu.pipeline_mode<synchronous>, transform_indices = @transform_5, window_bounds = array<i64: 128, 128>}, {pipeline_mode = #tpu.pipeline_mode<synchronous>, transform_indices = @transform_6, window_bounds = array<i64: 1, 128>}, {pipeline_mode = #tpu.pipeline_mode<synchronous>, transform_indices = @transform_7, window_bounds = array<i64: 1, 128>}, {pipeline_mode = #tpu.pipeline_mode<synchronous>, transform_indices = @transform_8, window_bounds = array<i64: 1, 128>}, {pipeline_mode = #tpu.pipeline_mode<synchronous>, transform_indices = @transform_9, window_bounds = array<i64: 128, 128>}, {pipeline_mode = #tpu.pipeline_mode<synchronous>, transform_indices = @transform_10, window_bounds = array<i64: 1, 128>}, {pipeline_mode = #tpu.pipeline_mode<synchronous>, transform_indices = @transform_11, window_bounds = array<i64: 128, 128>}, {pipeline_mode = #tpu.pipeline_mode<synchronous>, transform_indices = @transform_12, window_bounds = array<i64: 1, 128>}, {transform_indices = @transform_13, window_bounds = array<i64: 16, 128>}]} {
    %c0 = arith.constant 0 : index
    %c0_0 = arith.constant 0 : index
    %0 = vector.load %arg1[%c0, %c0_0] : memref<16x128xf32, #tpu.memory_space<vmem>>, vector<16x128xf32>
    %c0_1 = arith.constant 0 : index
    %c0_2 = arith.constant 0 : index
    %1 = vector.load %arg2[%c0_1, %c0_2] : memref<16x128xf32, #tpu.memory_space<vmem>>, vector<16x128xf32>
    %c0_3 = arith.constant 0 : index
    %c0_4 = arith.constant 0 : index
    %2 = vector.load %arg3[%c0_3, %c0_4] : memref<128x128xbf16, #tpu.memory_space<vmem>>, vector<128x128xbf16>
    %c0_5 = arith.constant 0 : index
    %c0_6 = arith.constant 0 : index
    %3 = vector.load %arg4[%c0_5, %c0_6] : memref<128x128xbf16, #tpu.memory_space<vmem>>, vector<128x128xbf16>
    %c0_7 = arith.constant 0 : index
    %c0_8 = arith.constant 0 : index
    %4 = vector.load %arg5[%c0_7, %c0_8] : memref<1x128xf32, #tpu.memory_space<vmem>>, vector<1x128xf32>
    %c0_9 = arith.constant 0 : index
    %c0_10 = arith.constant 0 : index
    %5 = vector.load %arg6[%c0_9, %c0_10] : memref<128x128xbf16, #tpu.memory_space<vmem>>, vector<128x128xbf16>
    %c0_11 = arith.constant 0 : index
    %c0_12 = arith.constant 0 : index
    %6 = vector.load %arg7[%c0_11, %c0_12] : memref<1x128xf32, #tpu.memory_space<vmem>>, vector<1x128xf32>
    %c0_13 = arith.constant 0 : index
    %c0_14 = arith.constant 0 : index
    %7 = vector.load %arg8[%c0_13, %c0_14] : memref<1x128xf32, #tpu.memory_space<vmem>>, vector<1x128xf32>
    %c0_15 = arith.constant 0 : index
    %c0_16 = arith.constant 0 : index
    %8 = vector.load %arg9[%c0_15, %c0_16] : memref<1x128xf32, #tpu.memory_space<vmem>>, vector<1x128xf32>
    %9 = arith.truncf %0 : vector<16x128xf32> to vector<16x128xbf16>
    %cst = arith.constant dense<0.000000e+00> : vector<16x128xf32>
    %10 = tpu.matmul %9, %2, %cst {dimension_numbers = #tpu.dot_dimension_numbers<[1], [0], [0], [1], [0, 0, 1, 1], [], []>} : vector<16x128xbf16>, vector<128x128xbf16>, vector<16x128xf32> -> vector<16x128xf32>
    %11 = arith.truncf %1 : vector<16x128xf32> to vector<16x128xbf16>
    %cst_17 = arith.constant dense<0.000000e+00> : vector<16x128xf32>
    %12 = tpu.matmul %11, %3, %cst_17 {dimension_numbers = #tpu.dot_dimension_numbers<[1], [0], [0], [1], [0, 0, 1, 1], [], []>} : vector<16x128xbf16>, vector<128x128xbf16>, vector<16x128xf32> -> vector<16x128xf32>
    %13 = arith.addf %10, %12 : vector<16x128xf32>
    %14 = vector.broadcast %4 : vector<1x128xf32> to vector<16x128xf32>
    %15 = arith.addf %13, %14 : vector<16x128xf32>
    %16 = arith.negf %15 : vector<16x128xf32>
    %17 = math.exp %16 : vector<16x128xf32>
    %cst_18 = arith.constant 1.000000e+00 : f32
    %18 = vector.broadcast %cst_18 : f32 to vector<16x128xf32>
    %19 = arith.addf %18, %17 : vector<16x128xf32>
    %20 = arith.divf %18, %19 : vector<16x128xf32>
    %21 = arith.mulf %15, %20 : vector<16x128xf32>
    %22 = arith.truncf %21 : vector<16x128xf32> to vector<16x128xbf16>
    %cst_19 = arith.constant dense<0.000000e+00> : vector<16x128xf32>
    %23 = tpu.matmul %22, %5, %cst_19 {dimension_numbers = #tpu.dot_dimension_numbers<[1], [0], [0], [1], [0, 0, 1, 1], [], []>} : vector<16x128xbf16>, vector<128x128xbf16>, vector<16x128xf32> -> vector<16x128xf32>
    %24 = vector.broadcast %6 : vector<1x128xf32> to vector<16x128xf32>
    %25 = arith.addf %23, %24 : vector<16x128xf32>
    %cst_20 = arith.constant dense<0.000000e+00> : vector<16xf32>
    %26 = vector.multi_reduction <add>, %25, %cst_20 [1] : vector<16x128xf32> to vector<16xf32>
    %27 = vector.shape_cast %26 : vector<16xf32> to vector<16x1xf32>
    %cst_21 = arith.constant 3.125000e-02 : f32
    %28 = vector.broadcast %cst_21 : f32 to vector<16x1xf32>
    %29 = arith.mulf %27, %28 : vector<16x1xf32>
    %30 = vector.broadcast %29 : vector<16x1xf32> to vector<16x128xf32>
    %31 = arith.subf %25, %30 : vector<16x128xf32>
    %32 = tpu.iota {dimensions = array<i32: 1>} : vector<16x128xi32>
    %c32_i32 = arith.constant 32 : i32
    %33 = vector.broadcast %c32_i32 : i32 to vector<16x128xi32>
    %34 = arith.cmpi slt, %32, %33 : vector<16x128xi32>
    %cst_22 = arith.constant 0.000000e+00 : f32
    %35 = vector.broadcast %cst_22 : f32 to vector<16x128xf32>
    %36 = arith.select %34, %31, %35 : vector<16x128xi1>, vector<16x128xf32>
    %37 = arith.mulf %36, %36 : vector<16x128xf32>
    %cst_23 = arith.constant dense<0.000000e+00> : vector<16xf32>
    %38 = vector.multi_reduction <add>, %37, %cst_23 [1] : vector<16x128xf32> to vector<16xf32>
    %39 = vector.shape_cast %38 : vector<16xf32> to vector<16x1xf32>
    %cst_24 = arith.constant 3.125000e-02 : f32
    %40 = vector.broadcast %cst_24 : f32 to vector<16x1xf32>
    %41 = arith.mulf %39, %40 : vector<16x1xf32>
    %42 = vector.broadcast %29 : vector<16x1xf32> to vector<16x128xf32>
    %43 = arith.subf %25, %42 : vector<16x128xf32>
    %cst_25 = arith.constant 9.99999974E-6 : f32
    %44 = vector.broadcast %cst_25 : f32 to vector<16x1xf32>
    %45 = arith.addf %41, %44 : vector<16x1xf32>
    %46 = math.rsqrt %45 : vector<16x1xf32>
    %47 = vector.broadcast %46 : vector<16x1xf32> to vector<16x128xf32>
    %48 = arith.mulf %43, %47 : vector<16x128xf32>
    %49 = vector.broadcast %7 : vector<1x128xf32> to vector<16x128xf32>
    %50 = arith.mulf %48, %49 : vector<16x128xf32>
    %51 = vector.broadcast %8 : vector<1x128xf32> to vector<16x128xf32>
    %52 = arith.addf %50, %51 : vector<16x128xf32>
    %c0_26 = arith.constant 0 : index
    %c0_27 = arith.constant 0 : index
    %53 = vector.load %arg10[%c0_26, %c0_27] : memref<128x128xbf16, #tpu.memory_space<vmem>>, vector<128x128xbf16>
    %c0_28 = arith.constant 0 : index
    %c0_29 = arith.constant 0 : index
    %54 = vector.load %arg11[%c0_28, %c0_29] : memref<1x128xf32, #tpu.memory_space<vmem>>, vector<1x128xf32>
    %c0_30 = arith.constant 0 : index
    %c0_31 = arith.constant 0 : index
    %55 = vector.load %arg12[%c0_30, %c0_31] : memref<128x128xbf16, #tpu.memory_space<vmem>>, vector<128x128xbf16>
    %c0_32 = arith.constant 0 : index
    %c0_33 = arith.constant 0 : index
    %56 = vector.load %arg13[%c0_32, %c0_33] : memref<1x128xf32, #tpu.memory_space<vmem>>, vector<1x128xf32>
    %57 = arith.truncf %52 : vector<16x128xf32> to vector<16x128xbf16>
    %cst_34 = arith.constant dense<0.000000e+00> : vector<16x128xf32>
    %58 = tpu.matmul %57, %53, %cst_34 {dimension_numbers = #tpu.dot_dimension_numbers<[1], [0], [0], [1], [0, 0, 1, 1], [], []>} : vector<16x128xbf16>, vector<128x128xbf16>, vector<16x128xf32> -> vector<16x128xf32>
    %59 = vector.broadcast %54 : vector<1x128xf32> to vector<16x128xf32>
    %60 = arith.addf %58, %59 : vector<16x128xf32>
    %61 = arith.negf %60 : vector<16x128xf32>
    %62 = math.exp %61 : vector<16x128xf32>
    %cst_35 = arith.constant 1.000000e+00 : f32
    %63 = vector.broadcast %cst_35 : f32 to vector<16x128xf32>
    %64 = arith.addf %63, %62 : vector<16x128xf32>
    %65 = arith.divf %63, %64 : vector<16x128xf32>
    %66 = arith.truncf %65 : vector<16x128xf32> to vector<16x128xbf16>
    %cst_36 = arith.constant dense<0.000000e+00> : vector<16x128xf32>
    %67 = tpu.matmul %66, %55, %cst_36 {dimension_numbers = #tpu.dot_dimension_numbers<[1], [0], [0], [1], [0, 0, 1, 1], [], []>} : vector<16x128xbf16>, vector<128x128xbf16>, vector<16x128xf32> -> vector<16x128xf32>
    %68 = vector.broadcast %56 : vector<1x128xf32> to vector<16x128xf32>
    %69 = arith.addf %67, %68 : vector<16x128xf32>
    %c0_37 = arith.constant 0 : index
    %c0_38 = arith.constant 0 : index
    %70 = vector.load %arg14[%c0_37, %c0_38] : memref<16x128xf32, #tpu.memory_space<vmem>>, vector<16x128xf32>
    tpu.vector_store %arg14[%c0_37, %c0_38], %69 {strides = array<i32>} : memref<16x128xf32, #tpu.memory_space<vmem>>, vector<16x128xf32>,
    return
  }
  func.func @transform_0(%arg0: i32) -> (i32, i32) {
    %c0_i32 = arith.constant 0 : i32
    %c0_i32_0 = arith.constant 0 : i32
    return %arg0, %c0_i32 : i32, i32
  }
  func.func @transform_1(%arg0: i32) -> (i32, i32) {
    %c0_i32 = arith.constant 0 : i32
    %c0_i32_0 = arith.constant 0 : i32
    return %arg0, %c0_i32 : i32, i32
  }
  func.func @transform_2(%arg0: i32) -> (i32, i32) {
    %c0_i32 = arith.constant 0 : i32
    %c0_i32_0 = arith.constant 0 : i32
    %c0_i32_1 = arith.constant 0 : i32
    return %c0_i32, %c0_i32_0 : i32, i32
  }
  func.func @transform_3(%arg0: i32) -> (i32, i32) {
    %c0_i32 = arith.constant 0 : i32
    %c0_i32_0 = arith.constant 0 : i32
    %c0_i32_1 = arith.constant 0 : i32
    return %c0_i32, %c0_i32_0 : i32, i32
  }
  func.func @transform_4(%arg0: i32) -> (i32, i32) {
    %c0_i32 = arith.constant 0 : i32
    %c0_i32_0 = arith.constant 0 : i32
    %c0_i32_1 = arith.constant 0 : i32
    return %c0_i32, %c0_i32_0 : i32, i32
  }
  func.func @transform_5(%arg0: i32) -> (i32, i32) {
    %c0_i32 = arith.constant 0 : i32
    %c0_i32_0 = arith.constant 0 : i32
    %c0_i32_1 = arith.constant 0 : i32
    return %c0_i32, %c0_i32_0 : i32, i32
  }
  func.func @transform_6(%arg0: i32) -> (i32, i32) {
    %c0_i32 = arith.constant 0 : i32
    %c0_i32_0 = arith.constant 0 : i32
    %c0_i32_1 = arith.constant 0 : i32
    return %c0_i32, %c0_i32_0 : i32, i32
  }
  func.func @transform_7(%arg0: i32) -> (i32, i32) {
    %c0_i32 = arith.constant 0 : i32
    %c0_i32_0 = arith.constant 0 : i32
    %c0_i32_1 = arith.constant 0 : i32
    return %c0_i32, %c0_i32_0 : i32, i32
  }
  func.func @transform_8(%arg0: i32) -> (i32, i32) {
    %c0_i32 = arith.constant 0 : i32
    %c0_i32_0 = arith.constant 0 : i32
    %c0_i32_1 = arith.constant 0 : i32
    return %c0_i32, %c0_i32_0 : i32, i32
  }
  func.func @transform_9(%arg0: i32) -> (i32, i32) {
    %c0_i32 = arith.constant 0 : i32
    %c0_i32_0 = arith.constant 0 : i32
    %c0_i32_1 = arith.constant 0 : i32
    return %c0_i32, %c0_i32_0 : i32, i32
  }
  func.func @transform_10(%arg0: i32) -> (i32, i32) {
    %c0_i32 = arith.constant 0 : i32
    %c0_i32_0 = arith.constant 0 : i32
    %c0_i32_1 = arith.constant 0 : i32
    return %c0_i32, %c0_i32_0 : i32, i32
  }
  func.func @transform_11(%arg0: i32) -> (i32, i32) {
    %c0_i32 = arith.constant 0 : i32
    %c0_i32_0 = arith.constant 0 : i32
    %c0_i32_1 = arith.constant 0 : i32
    return %c0_i32, %c0_i32_0 : i32, i32
  }
  func.func @transform_12(%arg0: i32) -> (i32, i32) {
    %c0_i32 = arith.constant 0 : i32
    %c0_i32_0 = arith.constant 0 : i32
    %c0_i32_1 = arith.constant 0 : i32
    return %c0_i32, %c0_i32_0 : i32, i32
  }
  func.func @transform_13(%arg0: i32) -> (i32, i32) {
    %c0_i32 = arith.constant 0 : i32
    %c0_i32_0 = arith.constant 0 : i32
    return %arg0, %c0_i32 : i32, i32
  }
}

</mosaic_0001>

<llo_original>
// kernel: custom-call
$region0: #{custom-call}
  %s0 = inlined_call_operand.vmem [shape: u32[3], index: 0, kind: output, shape index: {}]

// kernel: decoder_forward.4
$region0: #{decoder_forward.4}
  #allocation0 [shape = 'u32[]', space=smem, size = 0x4, offset = 0x4, fixed_abs, tag = 'smem constant byte address 0x4 - core index']
  #allocation1 [shape = 'u32[144,128]{1,0:T(1,128)}', space=vmem, size = 0x12000, scoped, tag = 'internal scratch']
  #allocation2 [shape = 'f32[16,128]{1,0:T(8,128)}', space=vmem, size = 0x2000, scoped, tag = 'scratch operand']
  #allocation3 [shape = 'f32[16,1]{1,0:T(8,128)}', space=vmem, size = 0x2000, scoped, tag = 'scratch operand']
  #allocation4 [shape = 's32[1]{0}', space=sflag, size = 0x4, scoped, tag = 'scoped memory for decoder_forward.4']
  #allocation5 [shape = 'u8[512]{0}', space=smem, size = 0x200, scoped, tag = 'prefetched SMEM operand 0']
  #allocation6 [shape = 'u8[512]{0}', space=smem, size = 0x200, scoped, tag = 'prefetched SMEM operand 1']
  %s0 = inlined_call_operand.vmem [shape: s32[2], index: 0, kind: input, shape index: {}]
  %s1 = inlined_call_operand.vmem [shape: s32[2], index: 1, kind: input, shape index: {}]
  %s2 = inlined_call_operand.vmem [shape: s32[1,128], index: 2, kind: input, shape index: {}]
  %s3 = inlined_call_operand.vmem [shape: f32[128,128], index: 3, kind: input, shape index: {}]
  %s4 = inlined_call_operand.vmem [shape: f32[32,128], index: 4, kind: output, shape index: {}]
  %s5 = sld [smem:[#allocation0]]
  $region53: #{decoder_forward.4} parent=0
    _
  %s7 = ssub.s32 1, %s5
  %s8 = scalar_select 0, %s7, %s5
  %s9 = sshll.u32 %s0, 4
  %s10 = int_to_ptr.vmem [resolvable:$true] %s9
  %12 = dma.vmem_to_smem %s10, 16, [#allocation5], [#allocation4]
  %s13 = sshll.u32 %s1, 4
  %s14 = int_to_ptr.vmem [resolvable:$true] %s13
  %16 = dma.vmem_to_smem %s14, 16, [#allocation6], [#allocation4]
  %17 = dma.done [#allocation4], 32
  %18 = sfence
  loop: start=0, step=1, limit=4
  $region2: #{decoder_forward.4} parent=0 // loop_pre_header
    _
  $region3: #{decoder_forward.4} parent=0 // loop_header
    %s20 = sphi 0, %s24
    %p21 = scmp.ge.s32.totalorder %s20, 4
    %s27 = sphi 0, %s39
    %s28 = sphi 0, %s35
    %s29 = sphi 0, %s27
    %s30 = sphi 0, %s28
    %s31 = sphi 0, %s29
    %s32 = sphi 0, %s30
    %s60 = sphi 0, %s62
    %s63 = sphi 0, %s60
    %s64 = sphi 0, %s63
    %s80 = sphi 0, %s64
    %s104 = sphi 0, %s106
    %s107 = sphi 0, %s104
    %s108 = sphi 0, %s107
    %s124 = sphi 0, %s108
    %s130 = sphi 0, %s132
    %s133 = sphi 0, %s130
    %s134 = sphi 0, %s133
    %s150 = sphi 0, %s134
  $region4: #{decoder_forward.4} parent=0 // loop_header_branch
    %23 = sbr.rel (%p21) target = $region8
  $region5: #{decoder_forward.4} parent=0 // loop_body
    %s25 = ssub.s32 %s20, 1
    %s26 = ssub.s32 %s20, 2
    %s33 = sadd.s32 1, %s28
    %p34 = scmp.ge.s32.totalorder %s33, 1
    %s35 = scalar_select %p34, 0, %s33
    %s36 = sadd.s32 1, %s27
    %s37 = scalar_select %p34, %s36, %s27
    %p38 = scmp.ge.s32.totalorder %s37, 2
    %s39 = scalar_select %p38, 0, %s37
    %s40 = sld [smem:[#allocation5 + %s27]]
    %s41 = sld [smem:[#allocation6 + %s27]]
    %s42 = ssub.s32 %s41, 1
    %p43 = scmp.gt.s32.totalorder %s42, 0
    %s44 = scalar_select %p43, %s42, 0
    %s45 = sadd.s32 %s40, %s44
    %s46 = sadd.s32 %s40, %s28
    %p47 = scmp.lt.s32.totalorder %s46, %s45
    %s48 = scalar_select %p47, %s46, %s45
    %s49 = sld [smem:[#allocation5 + %s39]]
    %s50 = sld [smem:[#allocation6 + %s39]]
    %s51 = ssub.s32 %s50, 1
    %p52 = scmp.gt.s32.totalorder %s51, 0
    %s53 = scalar_select %p52, %s51, 0
    %s54 = sadd.s32 %s49, %s53
    %s55 = sadd.s32 %s49, %s35
    %p56 = scmp.lt.s32.totalorder %s55, %s54
    %s57 = scalar_select %p56, %s55, %s54
    %s58 = ssub.s32 %s48, %s57
    %p59 = scmp.eq.s32.totalorder %s58, 0
    %s61 = sadd.s32 %s60, 1
    %s62 = scalar_select %p59, %s60, %s61
    %p65 = pneg %p59
    %p66 = scmp.eq.s32.totalorder %s20, 1
    %p67 = por %p65, %p66
    %p68 = scmp.ne.s32.totalorder %s60, %s63
    %p69 = scmp.eq.s32.totalorder %s20, 0
    %p70 = por %p68, %p69
    %p71 = scmp.ne.s32.totalorder %s60, %s63
    %p72 = scmp.eq.s32.totalorder %s25, 1
    %p73 = por %p71, %p72
    %p74 = scmp.ne.s32.totalorder %s63, %s64
    %p75 = scmp.eq.s32.totalorder %s25, 0
    %p76 = por %p74, %p75
    %p77 = scmp.ne.s32.totalorder %s63, %s64
    %p78 = scmp.eq.s32.totalorder %s26, 1
    %p79 = por %p77, %p78
    %p81 = scmp.ne.s32.totalorder %s64, %s80
    %p82 = scmp.eq.s32.totalorder %s26, 0
    %p83 = por %p81, %p82
    %s84 = sld [smem:[#allocation5 + %s27]]
    %s85 = sld [smem:[#allocation6 + %s27]]
    %s86 = ssub.s32 %s85, 1
    %p87 = scmp.gt.s32.totalorder %s86, 0
    %s88 = scalar_select %p87, %s86, 0
    %s89 = sadd.s32 %s84, %s88
    %s90 = sadd.s32 %s84, %s28
    %p91 = scmp.lt.s32.totalorder %s90, %s89
    %s92 = scalar_select %p91, %s90, %s89
    %s93 = sld [smem:[#allocation5 + %s39]]
    %s94 = sld [smem:[#allocation6 + %s39]]
    %s95 = ssub.s32 %s94, 1
    %p96 = scmp.gt.s32.totalorder %s95, 0
    %s97 = scalar_select %p96, %s95, 0
    %s98 = sadd.s32 %s93, %s97
    %s99 = sadd.s32 %s93, %s35
    %p100 = scmp.lt.s32.totalorder %s99, %s98
    %s101 = scalar_select %p100, %s99, %s98
    %s102 = ssub.s32 %s92, %s101
    %p103 = scmp.eq.s32.totalorder %s102, 0
    %s105 = sadd.s32 %s104, 1
    %s106 = scalar_select %p103, %s104, %s105
    %p109 = pneg %p103
    %p110 = scmp.eq.s32.totalorder %s20, 1
    %p111 = por %p109, %p110
    %p112 = scmp.ne.s32.totalorder %s104, %s107
    %p113 = scmp.eq.s32.totalorder %s20, 0
    %p114 = por %p112, %p113
    %p115 = scmp.ne.s32.totalorder %s104, %s107
    %p116 = scmp.eq.s32.totalorder %s25, 1
    %p117 = por %p115, %p116
    %p118 = scmp.ne.s32.totalorder %s107, %s108
    %p119 = scmp.eq.s32.totalorder %s25, 0
    %p120 = por %p118, %p119
    %p121 = scmp.ne.s32.totalorder %s107, %s108
    %p122 = scmp.eq.s32.totalorder %s26, 1
    %p123 = por %p121, %p122
    %p125 = scmp.ne.s32.totalorder %s108, %s124
    %p126 = scmp.eq.s32.totalorder %s26, 0
    %p127 = por %p125, %p126
    %s128 = ssub.s32 %s27, %s39
    %p129 = scmp.eq.s32.totalorder %s128, 0
    %s131 = sadd.s32 %s130, 1
    %s132 = scalar_select %p129, %s130, %s131
    %p135 = pneg %p129
    %p136 = scmp.eq.s32.totalorder %s20, 1
    %p137 = por %p135, %p136
    %p138 = scmp.ne.s32.totalorder %s130, %s133
    %p139 = scmp.eq.s32.totalorder %s20, 0
    %p140 = por %p138, %p139
    %p141 = scmp.ne.s32.totalorder %s130, %s133
    %p142 = scmp.eq.s32.totalorder %s25, 1
    %p143 = por %p141, %p142
    %p144 = scmp.ne.s32.totalorder %s133, %s134
    %p145 = scmp.eq.s32.totalorder %s25, 0
    %p146 = por %p144, %p145
    %p147 = scmp.ne.s32.totalorder %s133, %s134
    %p148 = scmp.eq.s32.totalorder %s26, 1
    %p149 = por %p147, %p148
    %p151 = scmp.ne.s32.totalorder %s134, %s150
    %p152 = scmp.eq.s32.totalorder %s26, 0
    %p153 = por %p151, %p152
    %p154 = scmp.le.s32.totalorder 1, %s20
    %p155 = scmp.lt.s32.totalorder %s20, 3
    %p156 = pnand %p154, %p155
    %p157 = pneg %p156
    // Predicated region
    $region9: #{decoder_forward.4} parent=5 // pred_check
      _
    $region10: #{decoder_forward.4} parent=5 // pred_check_branch
      %159 = sbr.rel (%p156) target = $region12
    $region11: #{decoder_forward.4} parent=5 // pred_region
      %s160 = ssub.s32 %s20, 1
    $region12: #{decoder_forward.4} parent=5 // pred_fallthru
      _
    %p161 = scmp.lt.s32.totalorder %s20, 2
    // Predicated region
    $region13: #{decoder_forward.4} parent=5 // pred_check
      %p162 = pneg %p161
    $region14: #{decoder_forward.4} parent=5 // pred_check_branch
      %164 = sbr.rel (%p162) target = $region16
    $region15: #{decoder_forward.4} parent=5 // pred_region
      // Predicated region
      $region17: #{decoder_forward.4} parent=15 // pred_check
        %p165 = pneg %p70
      $region18: #{decoder_forward.4} parent=15 // pred_check_branch
        %167 = sbr.rel (%p165) target = $region20
      $region19: #{decoder_forward.4} parent=15 // pred_region
        %s168 = sld [smem:[#allocation5 + %s27]]
        %s169 = sld [smem:[#allocation6 + %s27]]
        %s170 = ssub.s32 %s169, 1
        %p171 = scmp.gt.s32.totalorder %s170, 0
        %s172 = scalar_select %p171, %s170, 0
        %s173 = sadd.s32 %s168, %s172
        %s174 = sadd.s32 %s168, %s28
        %p175 = scmp.lt.s32.totalorder %s174, %s173
        %s176 = scalar_select %p175, %s174, %s173
        %p177 = scmp.lt.s32.totalorder %s176, 0
        %s178 = scalar_select %p177, %s176, 0
        %s179 = scalar_lea.vmem %s2, %s178
        %s180 = sld [smem:[#allocation5 + %s27]]
        %s181 = sld [smem:[#allocation6 + %s27]]
        %s182 = ssub.s32 %s181, 1
        %p183 = scmp.gt.s32.totalorder %s182, 0
        %s184 = scalar_select %p183, %s182, 0
        %s185 = sadd.s32 %s180, %s184
        %s186 = sadd.s32 %s180, %s28
        %p187 = scmp.lt.s32.totalorder %s186, %s185
        %s188 = scalar_select %p187, %s186, %s185
      $region20: #{decoder_forward.4} parent=15 // pred_fallthru
        _
      // Predicated region
      $region21: #{decoder_forward.4} parent=15 // pred_check
        %p189 = pneg %p114
      $region22: #{decoder_forward.4} parent=15 // pred_check_branch
        %191 = sbr.rel (%p189) target = $region24
      $region23: #{decoder_forward.4} parent=15 // pred_region
        %s192 = sld [smem:[#allocation5 + %s27]]
        %s193 = sld [smem:[#allocation6 + %s27]]
        %s194 = ssub.s32 %s193, 1
        %p195 = scmp.gt.s32.totalorder %s194, 0
        %s196 = scalar_select %p195, %s194, 0
        %s197 = sadd.s32 %s192, %s196
        %s198 = sadd.s32 %s192, %s28
        %p199 = scmp.lt.s32.totalorder %s198, %s197
        %s200 = scalar_select %p199, %s198, %s197
        %s201 = smul.u32 16, %s200
        %p202 = scmp.lt.s32.totalorder %s201, 15
        %s203 = scalar_select %p202, %s201, 15
        %s204 = smul.addr %s203, 8
        %s205 = scalar_lea.vmem %s3, %s204
        %s206 = sld [smem:[#allocation5 + %s27]]
        %s207 = sld [smem:[#allocation6 + %s27]]
        %s208 = ssub.s32 %s207, 1
        %p209 = scmp.gt.s32.totalorder %s208, 0
        %s210 = scalar_select %p209, %s208, 0
        %s211 = sadd.s32 %s206, %s210
        %s212 = sadd.s32 %s206, %s28
        %p213 = scmp.lt.s32.totalorder %s212, %s211
        %s214 = scalar_select %p213, %s212, %s211
        %s215 = smul.u32 16, %s214
      $region24: #{decoder_forward.4} parent=15 // pred_fallthru
        _
    $region16: #{decoder_forward.4} parent=5 // pred_fallthru
      _
    %p216 = scmp.le.s32.totalorder 1, %s20
    %p217 = scmp.lt.s32.totalorder %s20, 3
    %p218 = pnand %p216, %p217
    %p219 = pneg %p218
    // Predicated region
    $region25: #{decoder_forward.4} parent=5 // pred_check
      _
    $region26: #{decoder_forward.4} parent=5 // pred_check_branch
      %221 = sbr.rel (%p218) target = $region28
    $region27: #{decoder_forward.4} parent=5 // pred_region
      %s222 = ssub.s32 %s20, 1
      %s223 = sld [smem:[#allocation5 + %s29]]
      %s224 = sld [smem:[#allocation6 + %s29]]
      %s225 = ssub.s32 %s224, 1
      %p226 = scmp.gt.s32.totalorder %s225, 0
      %s227 = scalar_select %p226, %s225, 0
      %s228 = sadd.s32 %s223, %s227
      %s229 = sadd.s32 %s223, %s30
      %p230 = scmp.lt.s32.totalorder %s229, %s228
      %s231 = scalar_select %p230, %s229, %s228
      %p232 = scmp.lt.s32.totalorder %s231, 0
      %s233 = scalar_select %p232, %s231, 0
      %s234 = scalar_lea.vmem %s2, %s233
      %p235 = pneg %p76
      %p236 = pneg %p73
      %s237 = sld [smem:[#allocation5 + %s29]]
      %s238 = sld [smem:[#allocation6 + %s29]]
      %s239 = ssub.s32 %s238, 1
      %p240 = scmp.gt.s32.totalorder %s239, 0
      %s241 = scalar_select %p240, %s239, 0
      %s242 = sadd.s32 %s237, %s241
      %s243 = sadd.s32 %s237, %s30
      %p244 = scmp.lt.s32.totalorder %s243, %s242
      %s245 = scalar_select %p244, %s243, %s242
      %s246 = smul.u32 16, %s245
      %p247 = scmp.lt.s32.totalorder %s246, 15
      %s248 = scalar_select %p247, %s246, 15
      %s249 = smul.addr %s248, 8
      %s250 = scalar_lea.vmem %s3, %s249
      %p251 = pneg %p120
      %p252 = pneg %p117
      %p253 = pneg %p146
      %p254 = pneg %p143
      %s255 = smul.u32 2, %s29
      %p256 = scmp.lt.s32.totalorder %s255, 3
      %s257 = scalar_select %p256, %s255, 3
      %s258 = smul.addr %s257, 8
      %s259 = scalar_lea.vmem %s4, %s258
      %s260 = sld [smem:[#allocation5 + %s29]]
      %s261 = sld [smem:[#allocation6 + %s29]]
      %s262 = ssub.s32 %s261, 1
      %p263 = scmp.gt.s32.totalorder %s262, 0
      %s264 = scalar_select %p263, %s262, 0
      %s265 = sadd.s32 %s260, %s264
      %s266 = sadd.s32 %s260, %s30
      %p267 = scmp.lt.s32.totalorder %s266, %s265
      %s268 = scalar_select %p267, %s266, %s265
      %p269 = scmp.lt.s32.totalorder %s268, 0
      %s270 = scalar_select %p269, %s268, 0
      %s271 = scalar_lea.vmem %s2, %s270
      %s272 = sld [smem:[#allocation5 + %s29]]
      %s273 = sld [smem:[#allocation6 + %s29]]
      %s274 = ssub.s32 %s273, 1
      %p275 = scmp.gt.s32.totalorder %s274, 0
      %s276 = scalar_select %p275, %s274, 0
      %s277 = sadd.s32 %s272, %s276
      %s278 = sadd.s32 %s272, %s30
      %p279 = scmp.lt.s32.totalorder %s278, %s277
      %s280 = scalar_select %p279, %s278, %s277
      %s281 = sld [smem:[#allocation5 + %s29]]
      %s282 = sld [smem:[#allocation6 + %s29]]
      %s283 = ssub.s32 %s282, 1
      %p284 = scmp.gt.s32.totalorder %s283, 0
      %s285 = scalar_select %p284, %s283, 0
      %s286 = sadd.s32 %s281, %s285
      %s287 = sadd.s32 %s281, %s30
      %p288 = scmp.lt.s32.totalorder %s287, %s286
      %s289 = scalar_select %p288, %s287, %s286
      %s290 = smul.u32 16, %s289
      %p291 = scmp.lt.s32.totalorder %s290, 15
      %s292 = scalar_select %p291, %s290, 15
      %s293 = smul.addr %s292, 8
      %s294 = scalar_lea.vmem %s3, %s293
      %s295 = sld [smem:[#allocation5 + %s29]]
      %s296 = sld [smem:[#allocation6 + %s29]]
      %s297 = ssub.s32 %s296, 1
      %p298 = scmp.gt.s32.totalorder %s297, 0
      %s299 = scalar_select %p298, %s297, 0
      %s300 = sadd.s32 %s295, %s299
      %s301 = sadd.s32 %s295, %s30
      %p302 = scmp.lt.s32.totalorder %s301, %s300
      %s303 = scalar_select %p302, %s301, %s300
      %s304 = smul.u32 16, %s303
      %s305 = smul.u32 2, %s29
      %p306 = scmp.lt.s32.totalorder %s305, 3
      %s307 = scalar_select %p306, %s305, 3
      %s308 = smul.addr %s307, 8
      %s309 = scalar_lea.vmem %s4, %s308
      %s310 = smul.u32 2, %s29
      %p312 = scmp.eq.s32.totalorder %s30, 0
      // Predicated region
      $region29: #{decoder_forward.4} parent=27 // pred_check
        %p313 = pneg %p312
      $region30: #{decoder_forward.4} parent=27 // pred_check_branch
        %315 = sbr.rel (%p313) target = $region32
      $region31: #{decoder_forward.4} parent=27 // pred_region
        %316 = vst [vmem:[#allocation2] sm:$0xff] 0.0
        %317 = vst [vmem:[#allocation2 + $0x8] sm:$0xff] 0.0
        %vm318 = vcmask 7168
        %319 = vst.msk [vmem:[#allocation3] sm:$0xff] %vm318, 0.0
        %320 = vst.msk [vmem:[#allocation3 + $0x8] sm:$0xff] %vm318, 0.0
      $region32: #{decoder_forward.4} parent=27 // pred_fallthru
        _
      %s321 = sld [smem:[#allocation6 + %s29]]
      %p322 = scmp.lt.s32.totalorder %s30, %s321
      // Predicated region
      $region33: #{decoder_forward.4} parent=27 // pred_check
        %p323 = pneg %p322
      $region34: #{decoder_forward.4} parent=27 // pred_check_branch
        %325 = sbr.rel (%p323) target = $region36
      $region35: #{decoder_forward.4} parent=27 // pred_region
        %v326 = vld [vmem:[%s271] sm:$0x1]
        %s327 = smul.u32 %s29, 16
        %v328 = vlaneseq
        %v329 = vshrl.u32 %v328, 7
        %v330 = vadd.s32 %v329, 8
        %v331 = vstv %s327
        %v332 = vadd.s32 %v329, %v331
        %v333 = vadd.s32 %v330, %v331
        %v334 = vlaneseq
        %v335 = vshrl.u32 %v334, 7
        %v336 = vsub.s32 0, %v335
        %v337 = vrot.slane %v326, %v336
        %vm338 = vcmp.eq.s32.totalorder %v332, %v337
        %vm339 = vcmp.eq.s32.totalorder %v333, %v337
        %v340 = vld [vmem:[#allocation3] sm:$0xff]
        %v341 = vld [vmem:[#allocation3 + $0x8] sm:$0xff]
        %v342 = vsel %vm338, 1, 0
        %v343 = vsel %vm339, 1, 0
        %v344 = vcvt.s32.f32 %v342
        %v345 = vcvt.s32.f32 %v343
        %346 = vadd.xlane.f32.xlu0 %v344
        %v347 = vpop.xlane.xlu0 %346
        %348 = vadd.xlane.f32.xlu0 %v345
        %v349 = vpop.xlane.xlu0 %348
        %v350 = vadd.f32 %v340, %v347
        %v351 = vadd.f32 %v341, %v349
        %vm352 = vcmask 7168
        %353 = vst.msk [vmem:[#allocation3] sm:$0xff] %vm352, %v350
        %354 = vst.msk [vmem:[#allocation3 + $0x8] sm:$0xff] %vm352, %v351
        %v355 = vpack.c.bf16 %v345, %v344
        %v356 = vld [vmem:[#allocation2] sm:$0xff]
        %v357 = vld [vmem:[#allocation2 + $0x8] sm:$0xff]
        %v358 = vld [vmem:[%s294] sm:$0xff]
        %v359 = vld [vmem:[%s294 + $0x8] sm:$0xff]
        %v360 = vld [vmem:[%s294 + $0x10] sm:$0xff]
        %v361 = vld [vmem:[%s294 + $0x18] sm:$0xff]
        %v362 = vld [vmem:[%s294 + $0x20] sm:$0xff]
        %v363 = vld [vmem:[%s294 + $0x28] sm:$0xff]
        %v364 = vld [vmem:[%s294 + $0x30] sm:$0xff]
        %v365 = vld [vmem:[%s294 + $0x38] sm:$0xff]
        %v366 = vld [vmem:[%s294 + $0x40] sm:$0xff]
        %v367 = vld [vmem:[%s294 + $0x48] sm:$0xff]
        %v368 = vld [vmem:[%s294 + $0x50] sm:$0xff]
        %v369 = vld [vmem:[%s294 + $0x58] sm:$0xff]
        %v370 = vld [vmem:[%s294 + $0x60] sm:$0xff]
        %v371 = vld [vmem:[%s294 + $0x68] sm:$0xff]
        %v372 = vld [vmem:[%s294 + $0x70] sm:$0xff]
        %v373 = vld [vmem:[%s294 + $0x78] sm:$0xff]
        %v374 = vpack.c.bf16 %v359, %v358
        %v375 = vpack.c.bf16 %v361, %v360
        %v376 = vpack.c.bf16 %v363, %v362
        %v377 = vpack.c.bf16 %v365, %v364
        %v378 = vpack.c.bf16 %v367, %v366
        %v379 = vpack.c.bf16 %v369, %v368
        %v380 = vpack.c.bf16 %v371, %v370
        %v381 = vpack.c.bf16 %v373, %v372
        %382 = vmatprep.subr.bf16.mxu0 0
        %383 = vmatpush1.bf16.msra.mxu0 %v381
        %384 = vmatprep.subr.bf16.mxu0 0
        %385 = vmatpush1.bf16.msra.mxu0 %v380
        %386 = vmatprep.subr.bf16.mxu0 0
        %387 = vmatpush1.bf16.msra.mxu0 %v379
        %388 = vmatprep.subr.bf16.mxu0 0
        %389 = vmatpush1.bf16.msra.mxu0 %v378
        %390 = vmatprep.subr.bf16.mxu0 0
        %391 = vmatpush1.bf16.msra.mxu0 %v377
        %392 = vmatprep.subr.bf16.mxu0 0
        %393 = vmatpush1.bf16.msra.mxu0 %v376
        %394 = vmatprep.subr.bf16.mxu0 0
        %395 = vmatpush1.bf16.msra.mxu0 %v375
        %396 = vmatprep.subr.bf16.mxu0 0
        %397 = vmatpush1.bf16.msra.mxu0 %v374
        %398 = vmatprep.subr.bf16.mxu0 0
        %399 = vmatpush2.bf16.msra.mxu0 0
        %400 = vmatprep.subr.bf16.mxu0 0
        %401 = vmatpush2.bf16.msra.mxu0 0
        %402 = vmatprep.subr.bf16.mxu0 0
        %403 = vmatpush2.bf16.msra.mxu0 0
        %404 = vmatprep.subr.bf16.mxu0 0
        %405 = vmatpush2.bf16.msra.mxu0 0
        %406 = vmatprep.subr.bf16.mxu0 0
        %407 = vmatpush2.bf16.msra.mxu0 0
        %408 = vmatprep.subr.bf16.mxu0 0
        %409 = vmatpush2.bf16.msra.mxu0 0
        %410 = vmatprep.subr.bf16.mxu0 0
        %411 = vmatpush2.bf16.msra.mxu0 0
        %412 = vmatprep.subr.bf16.mxu0 0
        %413 = vmatpush2.bf16.msra.mxu0 0
        %414 = vmatprep.mubr.bf16.mxu0 0
        %415 = vmatmul.mubr.bf16.gmra.mxu0 %v355
        %v416 = vpop.f32.mrf.mxu0
        %v417 = vadd.f32 0.0, %v416
        %v418 = vpop.f32.mrf.mxu0
        %v419 = vpop.f32.mrf.mxu0
        %v420 = vadd.f32 0.0, %v419
        %v421 = vpop.f32.mrf.mxu0
        %422 = vdwg.mxu0
        %v423 = vadd.f32 %v356, %v417
        %v424 = vadd.f32 %v357, %v420
        %425 = vst [vmem:[#allocation2] sm:$0xff] %v423
        %426 = vst [vmem:[#allocation2 + $0x8] sm:$0xff] %v424
      $region36: #{decoder_forward.4} parent=27 // pred_fallthru
        _
      // Predicated region
      $region37: #{decoder_forward.4} parent=27 // pred_check
        %p427 = pneg %p312
      $region38: #{decoder_forward.4} parent=27 // pred_check_branch
        %429 = sbr.rel (%p427) target = $region40
      $region39: #{decoder_forward.4} parent=27 // pred_region
        %v430 = vld [vmem:[#allocation2] sm:$0xff]
        %v431 = vld [vmem:[#allocation2 + $0x8] sm:$0xff]
        %v432 = vld [vmem:[#allocation3] sm:$0xff]
        %v433 = vld [vmem:[#allocation3 + $0x8] sm:$0xff]
        %v434 = vmax.f32 %v432, 1.0
        %v435 = vmax.f32 %v433, 1.0
        %437 = vset.pattern.permute.xlu0 0
        %438 = vperm.xlu0 %437, %v434
        %v439 = vpop.permute.xlu0 %438
        %442 = vset.pattern.permute.xlu0 0
        %443 = vperm.xlu0 %442, %v435
        %v444 = vpop.permute.xlu0 %443
        %v446 = vrcp.pop %v439
        %v447 = vmul.f32 %v430, %v446
        %v448 = vrcp.pop %v444
        %v449 = vmul.f32 %v431, %v448
        %450 = vst [vmem:[%s309] sm:$0xff] %v447
        %451 = vst [vmem:[%s309 + $0x8] sm:$0xff] %v449
      $region40: #{decoder_forward.4} parent=27 // pred_fallthru
        _
      %s452 = smul.u32 2, %s29
      %p453 = scmp.lt.s32.totalorder %s452, 3
      %s454 = scalar_select %p453, %s452, 3
      %s455 = smul.addr %s454, 8
      %s456 = scalar_lea.vmem %s4, %s455
      // Predicated region
      $region41: #{decoder_forward.4} parent=27 // pred_check
        %p457 = pneg %p143
      $region42: #{decoder_forward.4} parent=27 // pred_check_branch
        %459 = sbr.rel (%p457) target = $region44
      $region43: #{decoder_forward.4} parent=27 // pred_region
        %s460 = smul.u32 2, %s29
      $region44: #{decoder_forward.4} parent=27 // pred_fallthru
        _
    $region28: #{decoder_forward.4} parent=5 // pred_fallthru
      _
    %p461 = scmp.le.s32.totalorder 2, %s20
    // Predicated region
    $region45: #{decoder_forward.4} parent=5 // pred_check
      %p462 = pneg %p461
    $region46: #{decoder_forward.4} parent=5 // pred_check_branch
      %464 = sbr.rel (%p462) target = $region48
    $region47: #{decoder_forward.4} parent=5 // pred_region
      %s465 = ssub.s32 %s20, 2
      // Predicated region
      $region49: #{decoder_forward.4} parent=47 // pred_check
        %p466 = pneg %p149
      $region50: #{decoder_forward.4} parent=47 // pred_check_branch
        %468 = sbr.rel (%p466) target = $region52
      $region51: #{decoder_forward.4} parent=47 // pred_region
        %s469 = smul.u32 2, %s31
        %p470 = scmp.lt.s32.totalorder %s469, 3
        %s471 = scalar_select %p470, %s469, 3
        %s472 = smul.addr %s471, 8
        %s473 = scalar_lea.vmem %s4, %s472
      $region52: #{decoder_forward.4} parent=47 // pred_fallthru
        _
    $region48: #{decoder_forward.4} parent=5 // pred_fallthru
      _
  $region6: #{decoder_forward.4} parent=0 // loop_footer
    %s24 = sadd.s32 1, %s20
  $region7: #{decoder_forward.4} parent=0 // loop_footer_branch
    %19 = sbr.rel target = $region3
  $region8: #{decoder_forward.4} parent=0 // loop_exit
    _

// kernel: decoder_forward.5
$region0: #{decoder_forward.5}
  #allocation0 [shape = 'u32[]', space=smem, size = 0x4, offset = 0x4, fixed_abs, tag = 'smem constant byte address 0x4 - core index']
  #allocation1 [shape = 'u32[144,128]{1,0:T(1,128)}', space=vmem, size = 0x12000, scoped, tag = 'internal scratch']
  %s0 = inlined_call_operand.vmem [shape: f32[32,128], index: 0, kind: input, shape index: {}]
  %s1 = inlined_call_operand.vmem [shape: f32[32,128], index: 1, kind: input, shape index: {}]
  %s2 = inlined_call_operand.vmem [shape: bf16[128,128], index: 2, kind: input, shape index: {}]
  %s3 = inlined_call_operand.vmem [shape: bf16[128,128], index: 3, kind: input, shape index: {}]
  %s4 = inlined_call_operand.vmem [shape: f32[1,128], index: 4, kind: input, shape index: {}]
  %s5 = inlined_call_operand.vmem [shape: bf16[128,128], index: 5, kind: input, shape index: {}]
  %s6 = inlined_call_operand.vmem [shape: f32[1,128], index: 6, kind: input, shape index: {}]
  %s7 = inlined_call_operand.vmem [shape: f32[1,128], index: 7, kind: input, shape index: {}]
  %s8 = inlined_call_operand.vmem [shape: f32[1,128], index: 8, kind: input, shape index: {}]
  %s9 = inlined_call_operand.vmem [shape: bf16[128,128], index: 9, kind: input, shape index: {}]
  %s10 = inlined_call_operand.vmem [shape: f32[1,128], index: 10, kind: input, shape index: {}]
  %s11 = inlined_call_operand.vmem [shape: bf16[128,128], index: 11, kind: input, shape index: {}]
  %s12 = inlined_call_operand.vmem [shape: f32[1,128], index: 12, kind: input, shape index: {}]
  %s13 = inlined_call_operand.vmem [shape: f32[32,128], index: 13, kind: output, shape index: {}]
  %s14 = sld [smem:[#allocation0]]
  $region85: #{decoder_forward.5} parent=0
    _
  %s16 = ssub.s32 1, %s14
  %s17 = scalar_select 0, %s16, %s14
  loop: start=0, step=1, limit=4
  $region2: #{decoder_forward.5} parent=0 // loop_pre_header
    _
  $region3: #{decoder_forward.5} parent=0 // loop_header
    %s19 = sphi 0, %s23
    %p20 = scmp.ge.s32.totalorder %s19, 4
    %s29 = sphi 0, %s31
    %s32 = sphi 0, %s29
    %s33 = sphi 0, %s32
    %s49 = sphi 0, %s33
    %s55 = sphi 0, %s57
    %s58 = sphi 0, %s55
    %s59 = sphi 0, %s58
    %s75 = sphi 0, %s59
    %s79 = sphi 0, %s79
    %s81 = sphi 0, %s79
    %s82 = sphi 0, %s81
    %s96 = sphi 0, %s82
    %s100 = sphi 0, %s100
    %s102 = sphi 0, %s100
    %s103 = sphi 0, %s102
    %s117 = sphi 0, %s103
    %s121 = sphi 0, %s121
    %s123 = sphi 0, %s121
    %s124 = sphi 0, %s123
    %s138 = sphi 0, %s124
    %s142 = sphi 0, %s142
    %s144 = sphi 0, %s142
    %s145 = sphi 0, %s144
    %s159 = sphi 0, %s145
    %s163 = sphi 0, %s163
    %s165 = sphi 0, %s163
    %s166 = sphi 0, %s165
    %s180 = sphi 0, %s166
    %s184 = sphi 0, %s184
    %s186 = sphi 0, %s184
    %s187 = sphi 0, %s186
    %s201 = sphi 0, %s187
    %s205 = sphi 0, %s205
    %s207 = sphi 0, %s205
    %s208 = sphi 0, %s207
    %s222 = sphi 0, %s208
    %s226 = sphi 0, %s226
    %s228 = sphi 0, %s226
    %s229 = sphi 0, %s228
    %s243 = sphi 0, %s229
    %s247 = sphi 0, %s247
    %s249 = sphi 0, %s247
    %s250 = sphi 0, %s249
    %s264 = sphi 0, %s250
    %s268 = sphi 0, %s268
    %s270 = sphi 0, %s268
    %s271 = sphi 0, %s270
    %s285 = sphi 0, %s271
    %s289 = sphi 0, %s289
    %s291 = sphi 0, %s289
    %s292 = sphi 0, %s291
    %s306 = sphi 0, %s292
    %s312 = sphi 0, %s314
    %s315 = sphi 0, %s312
    %s316 = sphi 0, %s315
    %s332 = sphi 0, %s316
  $region4: #{decoder_forward.5} parent=0 // loop_header_branch
    %22 = sbr.rel (%p20) target = $region8
  $region5: #{decoder_forward.5} parent=0 // loop_body
    %s24 = ssub.s32 %s19, 1
    %s25 = ssub.s32 %s19, 2
    %s26 = sadd.s32 %s19, 1
    %s27 = ssub.s32 %s19, %s26
    %p28 = scmp.eq.s32.totalorder %s27, 0
    %s30 = sadd.s32 %s29, 1
    %s31 = scalar_select %p28, %s29, %s30
    %p34 = pneg %p28
    %p35 = scmp.eq.s32.totalorder %s19, 1
    %p36 = por %p34, %p35
    %p37 = scmp.ne.s32.totalorder %s29, %s32
    %p38 = scmp.eq.s32.totalorder %s19, 0
    %p39 = por %p37, %p38
    %p40 = scmp.ne.s32.totalorder %s29, %s32
    %p41 = scmp.eq.s32.totalorder %s24, 1
    %p42 = por %p40, %p41
    %p43 = scmp.ne.s32.totalorder %s32, %s33
    %p44 = scmp.eq.s32.totalorder %s24, 0
    %p45 = por %p43, %p44
    %p46 = scmp.ne.s32.totalorder %s32, %s33
    %p47 = scmp.eq.s32.totalorder %s25, 1
    %p48 = por %p46, %p47
    %p50 = scmp.ne.s32.totalorder %s33, %s49
    %p51 = scmp.eq.s32.totalorder %s25, 0
    %p52 = por %p50, %p51
    %s53 = ssub.s32 %s19, %s26
    %p54 = scmp.eq.s32.totalorder %s53, 0
    %s56 = sadd.s32 %s55, 1
    %s57 = scalar_select %p54, %s55, %s56
    %p60 = pneg %p54
    %p61 = scmp.eq.s32.totalorder %s19, 1
    %p62 = por %p60, %p61
    %p63 = scmp.ne.s32.totalorder %s55, %s58
    %p64 = scmp.eq.s32.totalorder %s19, 0
    %p65 = por %p63, %p64
    %p66 = scmp.ne.s32.totalorder %s55, %s58
    %p67 = scmp.eq.s32.totalorder %s24, 1
    %p68 = por %p66, %p67
    %p69 = scmp.ne.s32.totalorder %s58, %s59
    %p70 = scmp.eq.s32.totalorder %s24, 0
    %p71 = por %p69, %p70
    %p72 = scmp.ne.s32.totalorder %s58, %s59
    %p73 = scmp.eq.s32.totalorder %s25, 1
    %p74 = por %p72, %p73
    %p76 = scmp.ne.s32.totalorder %s59, %s75
    %p77 = scmp.eq.s32.totalorder %s25, 0
    %p78 = por %p76, %p77
    %s80 = sadd.s32 %s79, 1
    %p83 = scmp.eq.s32.totalorder %s19, 1
    %p84 = scmp.ne.s32.totalorder %s79, %s81
    %p85 = scmp.eq.s32.totalorder %s19, 0
    %p86 = por %p84, %p85
    %p87 = scmp.ne.s32.totalorder %s79, %s81
    %p88 = scmp.eq.s32.totalorder %s24, 1
    %p89 = por %p87, %p88
    %p90 = scmp.ne.s32.totalorder %s81, %s82
    %p91 = scmp.eq.s32.totalorder %s24, 0
    %p92 = por %p90, %p91
    %p93 = scmp.ne.s32.totalorder %s81, %s82
    %p94 = scmp.eq.s32.totalorder %s25, 1
    %p95 = por %p93, %p94
    %p97 = scmp.ne.s32.totalorder %s82, %s96
    %p98 = scmp.eq.s32.totalorder %s25, 0
    %p99 = por %p97, %p98
    %s101 = sadd.s32 %s100, 1
    %p104 = scmp.eq.s32.totalorder %s19, 1
    %p105 = scmp.ne.s32.totalorder %s100, %s102
    %p106 = scmp.eq.s32.totalorder %s19, 0
    %p107 = por %p105, %p106
    %p108 = scmp.ne.s32.totalorder %s100, %s102
    %p109 = scmp.eq.s32.totalorder %s24, 1
    %p110 = por %p108, %p109
    %p111 = scmp.ne.s32.totalorder %s102, %s103
    %p112 = scmp.eq.s32.totalorder %s24, 0
    %p113 = por %p111, %p112
    %p114 = scmp.ne.s32.totalorder %s102, %s103
    %p115 = scmp.eq.s32.totalorder %s25, 1
    %p116 = por %p114, %p115
    %p118 = scmp.ne.s32.totalorder %s103, %s117
    %p119 = scmp.eq.s32.totalorder %s25, 0
    %p120 = por %p118, %p119
    %s122 = sadd.s32 %s121, 1
    %p125 = scmp.eq.s32.totalorder %s19, 1
    %p126 = scmp.ne.s32.totalorder %s121, %s123
    %p127 = scmp.eq.s32.totalorder %s19, 0
    %p128 = por %p126, %p127
    %p129 = scmp.ne.s32.totalorder %s121, %s123
    %p130 = scmp.eq.s32.totalorder %s24, 1
    %p131 = por %p129, %p130
    %p132 = scmp.ne.s32.totalorder %s123, %s124
    %p133 = scmp.eq.s32.totalorder %s24, 0
    %p134 = por %p132, %p133
    %p135 = scmp.ne.s32.totalorder %s123, %s124
    %p136 = scmp.eq.s32.totalorder %s25, 1
    %p137 = por %p135, %p136
    %p139 = scmp.ne.s32.totalorder %s124, %s138
    %p140 = scmp.eq.s32.totalorder %s25, 0
    %p141 = por %p139, %p140
    %s143 = sadd.s32 %s142, 1
    %p146 = scmp.eq.s32.totalorder %s19, 1
    %p147 = scmp.ne.s32.totalorder %s142, %s144
    %p148 = scmp.eq.s32.totalorder %s19, 0
    %p149 = por %p147, %p148
    %p150 = scmp.ne.s32.totalorder %s142, %s144
    %p151 = scmp.eq.s32.totalorder %s24, 1
    %p152 = por %p150, %p151
    %p153 = scmp.ne.s32.totalorder %s144, %s145
    %p154 = scmp.eq.s32.totalorder %s24, 0
    %p155 = por %p153, %p154
    %p156 = scmp.ne.s32.totalorder %s144, %s145
    %p157 = scmp.eq.s32.totalorder %s25, 1
    %p158 = por %p156, %p157
    %p160 = scmp.ne.s32.totalorder %s145, %s159
    %p161 = scmp.eq.s32.totalorder %s25, 0
    %p162 = por %p160, %p161
    %s164 = sadd.s32 %s163, 1
    %p167 = scmp.eq.s32.totalorder %s19, 1
    %p168 = scmp.ne.s32.totalorder %s163, %s165
    %p169 = scmp.eq.s32.totalorder %s19, 0
    %p170 = por %p168, %p169
    %p171 = scmp.ne.s32.totalorder %s163, %s165
    %p172 = scmp.eq.s32.totalorder %s24, 1
    %p173 = por %p171, %p172
    %p174 = scmp.ne.s32.totalorder %s165, %s166
    %p175 = scmp.eq.s32.totalorder %s24, 0
    %p176 = por %p174, %p175
    %p177 = scmp.ne.s32.totalorder %s165, %s166
    %p178 = scmp.eq.s32.totalorder %s25, 1
    %p179 = por %p177, %p178
    %p181 = scmp.ne.s32.totalorder %s166, %s180
    %p182 = scmp.eq.s32.totalorder %s25, 0
    %p183 = por %p181, %p182
    %s185 = sadd.s32 %s184, 1
    %p188 = scmp.eq.s32.totalorder %s19, 1
    %p189 = scmp.ne.s32.totalorder %s184, %s186
    %p190 = scmp.eq.s32.totalorder %s19, 0
    %p191 = por %p189, %p190
    %p192 = scmp.ne.s32.totalorder %s184, %s186
    %p193 = scmp.eq.s32.totalorder %s24, 1
    %p194 = por %p192, %p193
    %p195 = scmp.ne.s32.totalorder %s186, %s187
    %p196 = scmp.eq.s32.totalorder %s24, 0
    %p197 = por %p195, %p196
    %p198 = scmp.ne.s32.totalorder %s186, %s187
    %p199 = scmp.eq.s32.totalorder %s25, 1
    %p200 = por %p198, %p199
    %p202 = scmp.ne.s32.totalorder %s187, %s201
    %p203 = scmp.eq.s32.totalorder %s25, 0
    %p204 = por %p202, %p203
    %s206 = sadd.s32 %s205, 1
    %p209 = scmp.eq.s32.totalorder %s19, 1
    %p210 = scmp.ne.s32.totalorder %s205, %s207
    %p211 = scmp.eq.s32.totalorder %s19, 0
    %p212 = por %p210, %p211
    %p213 = scmp.ne.s32.totalorder %s205, %s207
    %p214 = scmp.eq.s32.totalorder %s24, 1
    %p215 = por %p213, %p214
    %p216 = scmp.ne.s32.totalorder %s207, %s208
    %p217 = scmp.eq.s32.totalorder %s24, 0
    %p218 = por %p216, %p217
    %p219 = scmp.ne.s32.totalorder %s207, %s208
    %p220 = scmp.eq.s32.totalorder %s25, 1
    %p221 = por %p219, %p220
    %p223 = scmp.ne.s32.totalorder %s208, %s222
    %p224 = scmp.eq.s32.totalorder %s25, 0
    %p225 = por %p223, %p224
    %s227 = sadd.s32 %s226, 1
    %p230 = scmp.eq.s32.totalorder %s19, 1
    %p231 = scmp.ne.s32.totalorder %s226, %s228
    %p232 = scmp.eq.s32.totalorder %s19, 0
    %p233 = por %p231, %p232
    %p234 = scmp.ne.s32.totalorder %s226, %s228
    %p235 = scmp.eq.s32.totalorder %s24, 1
    %p236 = por %p234, %p235
    %p237 = scmp.ne.s32.totalorder %s228, %s229
    %p238 = scmp.eq.s32.totalorder %s24, 0
    %p239 = por %p237, %p238
    %p240 = scmp.ne.s32.totalorder %s228, %s229
    %p241 = scmp.eq.s32.totalorder %s25, 1
    %p242 = por %p240, %p241
    %p244 = scmp.ne.s32.totalorder %s229, %s243
    %p245 = scmp.eq.s32.totalorder %s25, 0
    %p246 = por %p244, %p245
    %s248 = sadd.s32 %s247, 1
    %p251 = scmp.eq.s32.totalorder %s19, 1
    %p252 = scmp.ne.s32.totalorder %s247, %s249
    %p253 = scmp.eq.s32.totalorder %s19, 0
    %p254 = por %p252, %p253
    %p255 = scmp.ne.s32.totalorder %s247, %s249
    %p256 = scmp.eq.s32.totalorder %s24, 1
    %p257 = por %p255, %p256
    %p258 = scmp.ne.s32.totalorder %s249, %s250
    %p259 = scmp.eq.s32.totalorder %s24, 0
    %p260 = por %p258, %p259
    %p261 = scmp.ne.s32.totalorder %s249, %s250
    %p262 = scmp.eq.s32.totalorder %s25, 1
    %p263 = por %p261, %p262
    %p265 = scmp.ne.s32.totalorder %s250, %s264
    %p266 = scmp.eq.s32.totalorder %s25, 0
    %p267 = por %p265, %p266
    %s269 = sadd.s32 %s268, 1
    %p272 = scmp.eq.s32.totalorder %s19, 1
    %p273 = scmp.ne.s32.totalorder %s268, %s270
    %p274 = scmp.eq.s32.totalorder %s19, 0
    %p275 = por %p273, %p274
    %p276 = scmp.ne.s32.totalorder %s268, %s270
    %p277 = scmp.eq.s32.totalorder %s24, 1
    %p278 = por %p276, %p277
    %p279 = scmp.ne.s32.totalorder %s270, %s271
    %p280 = scmp.eq.s32.totalorder %s24, 0
    %p281 = por %p279, %p280
    %p282 = scmp.ne.s32.totalorder %s270, %s271
    %p283 = scmp.eq.s32.totalorder %s25, 1
    %p284 = por %p282, %p283
    %p286 = scmp.ne.s32.totalorder %s271, %s285
    %p287 = scmp.eq.s32.totalorder %s25, 0
    %p288 = por %p286, %p287
    %s290 = sadd.s32 %s289, 1
    %p293 = scmp.eq.s32.totalorder %s19, 1
    %p294 = scmp.ne.s32.totalorder %s289, %s291
    %p295 = scmp.eq.s32.totalorder %s19, 0
    %p296 = por %p294, %p295
    %p297 = scmp.ne.s32.totalorder %s289, %s291
    %p298 = scmp.eq.s32.totalorder %s24, 1
    %p299 = por %p297, %p298
    %p300 = scmp.ne.s32.totalorder %s291, %s292
    %p301 = scmp.eq.s32.totalorder %s24, 0
    %p302 = por %p300, %p301
    %p303 = scmp.ne.s32.totalorder %s291, %s292
    %p304 = scmp.eq.s32.totalorder %s25, 1
    %p305 = por %p303, %p304
    %p307 = scmp.ne.s32.totalorder %s292, %s306
    %p308 = scmp.eq.s32.totalorder %s25, 0
    %p309 = por %p307, %p308
    %s310 = ssub.s32 %s19, %s26
    %p311 = scmp.eq.s32.totalorder %s310, 0
    %s313 = sadd.s32 %s312, 1
    %s314 = scalar_select %p311, %s312, %s313
    %p317 = pneg %p311
    %p318 = scmp.eq.s32.totalorder %s19, 1
    %p319 = por %p317, %p318
    %p320 = scmp.ne.s32.totalorder %s312, %s315
    %p321 = scmp.eq.s32.totalorder %s19, 0
    %p322 = por %p320, %p321
    %p323 = scmp.ne.s32.totalorder %s312, %s315
    %p324 = scmp.eq.s32.totalorder %s24, 1
    %p325 = por %p323, %p324
    %p326 = scmp.ne.s32.totalorder %s315, %s316
    %p327 = scmp.eq.s32.totalorder %s24, 0
    %p328 = por %p326, %p327
    %p329 = scmp.ne.s32.totalorder %s315, %s316
    %p330 = scmp.eq.s32.totalorder %s25, 1
    %p331 = por %p329, %p330
    %p333 = scmp.ne.s32.totalorder %s316, %s332
    %p334 = scmp.eq.s32.totalorder %s25, 0
    %p335 = por %p333, %p334
    %p336 = scmp.le.s32.totalorder 1, %s19
    %p337 = scmp.lt.s32.totalorder %s19, 3
    %p338 = pnand %p336, %p337
    %p339 = pneg %p338
    // Predicated region
    $region9: #{decoder_forward.5} parent=5 // pred_check
      _
    $region10: #{decoder_forward.5} parent=5 // pred_check_branch
      %341 = sbr.rel (%p338) target = $region12
    $region11: #{decoder_forward.5} parent=5 // pred_region
      %s342 = ssub.s32 %s19, 1
      // Predicated region
      $region13: #{decoder_forward.5} parent=11 // pred_check
        %p343 = pneg %p92
      $region14: #{decoder_forward.5} parent=11 // pred_check_branch
        %345 = sbr.rel (%p343) target = $region16
      $region15: #{decoder_forward.5} parent=11 // pred_region
        _
      $region16: #{decoder_forward.5} parent=11 // pred_fallthru
        _
      // Predicated region
      $region17: #{decoder_forward.5} parent=11 // pred_check
        %p346 = pneg %p113
      $region18: #{decoder_forward.5} parent=11 // pred_check_branch
        %348 = sbr.rel (%p346) target = $region20
      $region19: #{decoder_forward.5} parent=11 // pred_region
        _
      $region20: #{decoder_forward.5} parent=11 // pred_fallthru
        _
      // Predicated region
      $region21: #{decoder_forward.5} parent=11 // pred_check
        %p349 = pneg %p134
      $region22: #{decoder_forward.5} parent=11 // pred_check_branch
        %351 = sbr.rel (%p349) target = $region24
      $region23: #{decoder_forward.5} parent=11 // pred_region
        _
      $region24: #{decoder_forward.5} parent=11 // pred_fallthru
        _
      // Predicated region
      $region25: #{decoder_forward.5} parent=11 // pred_check
        %p352 = pneg %p155
      $region26: #{decoder_forward.5} parent=11 // pred_check_branch
        %354 = sbr.rel (%p352) target = $region28
      $region27: #{decoder_forward.5} parent=11 // pred_region
        _
      $region28: #{decoder_forward.5} parent=11 // pred_fallthru
        _
      // Predicated region
      $region29: #{decoder_forward.5} parent=11 // pred_check
        %p355 = pneg %p176
      $region30: #{decoder_forward.5} parent=11 // pred_check_branch
        %357 = sbr.rel (%p355) target = $region32
      $region31: #{decoder_forward.5} parent=11 // pred_region
        _
      $region32: #{decoder_forward.5} parent=11 // pred_fallthru
        _
      // Predicated region
      $region33: #{decoder_forward.5} parent=11 // pred_check
        %p358 = pneg %p197
      $region34: #{decoder_forward.5} parent=11 // pred_check_branch
        %360 = sbr.rel (%p358) target = $region36
      $region35: #{decoder_forward.5} parent=11 // pred_region
        _
      $region36: #{decoder_forward.5} parent=11 // pred_fallthru
        _
      // Predicated region
      $region37: #{decoder_forward.5} parent=11 // pred_check
        %p361 = pneg %p218
      $region38: #{decoder_forward.5} parent=11 // pred_check_branch
        %363 = sbr.rel (%p361) target = $region40
      $region39: #{decoder_forward.5} parent=11 // pred_region
        _
      $region40: #{decoder_forward.5} parent=11 // pred_fallthru
        _
      // Predicated region
      $region41: #{decoder_forward.5} parent=11 // pred_check
        %p364 = pneg %p239
      $region42: #{decoder_forward.5} parent=11 // pred_check_branch
        %366 = sbr.rel (%p364) target = $region44
      $region43: #{decoder_forward.5} parent=11 // pred_region
        _
      $region44: #{decoder_forward.5} parent=11 // pred_fallthru
        _
      // Predicated region
      $region45: #{decoder_forward.5} parent=11 // pred_check
        %p367 = pneg %p260
      $region46: #{decoder_forward.5} parent=11 // pred_check_branch
        %369 = sbr.rel (%p367) target = $region48
      $region47: #{decoder_forward.5} parent=11 // pred_region
        _
      $region48: #{decoder_forward.5} parent=11 // pred_fallthru
        _
      // Predicated region
      $region49: #{decoder_forward.5} parent=11 // pred_check
        %p370 = pneg %p281
      $region50: #{decoder_forward.5} parent=11 // pred_check_branch
        %372 = sbr.rel (%p370) target = $region52
      $region51: #{decoder_forward.5} parent=11 // pred_region
        _
      $region52: #{decoder_forward.5} parent=11 // pred_fallthru
        _
      // Predicated region
      $region53: #{decoder_forward.5} parent=11 // pred_check
        %p373 = pneg %p302
      $region54: #{decoder_forward.5} parent=11 // pred_check_branch
        %375 = sbr.rel (%p373) target = $region56
      $region55: #{decoder_forward.5} parent=11 // pred_region
        _
      $region56: #{decoder_forward.5} parent=11 // pred_fallthru
        _
    $region12: #{decoder_forward.5} parent=5 // pred_fallthru
      _
    %p376 = scmp.lt.s32.totalorder %s19, 2
    // Predicated region
    $region57: #{decoder_forward.5} parent=5 // pred_check
      %p377 = pneg %p376
    $region58: #{decoder_forward.5} parent=5 // pred_check_branch
      %379 = sbr.rel (%p377) target = $region60
    $region59: #{decoder_forward.5} parent=5 // pred_region
      // Predicated region
      $region61: #{decoder_forward.5} parent=59 // pred_check
        %p380 = pneg %p39
      $region62: #{decoder_forward.5} parent=59 // pred_check_branch
        %382 = sbr.rel (%p380) target = $region64
      $region63: #{decoder_forward.5} parent=59 // pred_region
        %s383 = smul.u32 2, %s19
        %p384 = scmp.lt.s32.totalorder %s383, 3
        %s385 = scalar_select %p384, %s383, 3
        %s386 = smul.addr %s385, 8
        %s387 = scalar_lea.vmem %s0, %s386
        %s388 = smul.u32 2, %s19
      $region64: #{decoder_forward.5} parent=59 // pred_fallthru
        _
      // Predicated region
      $region65: #{decoder_forward.5} parent=59 // pred_check
        %p389 = pneg %p65
      $region66: #{decoder_forward.5} parent=59 // pred_check_branch
        %391 = sbr.rel (%p389) target = $region68
      $region67: #{decoder_forward.5} parent=59 // pred_region
        %s392 = smul.u32 2, %s19
        %p393 = scmp.lt.s32.totalorder %s392, 3
        %s394 = scalar_select %p393, %s392, 3
        %s395 = smul.addr %s394, 8
        %s396 = scalar_lea.vmem %s1, %s395
        %s397 = smul.u32 2, %s19
      $region68: #{decoder_forward.5} parent=59 // pred_fallthru
        _
    $region60: #{decoder_forward.5} parent=5 // pred_fallthru
      _
    %p398 = scmp.le.s32.totalorder 1, %s19
    %p399 = scmp.lt.s32.totalorder %s19, 3
    %p400 = pnand %p398, %p399
    %p401 = pneg %p400
    // Predicated region
    $region69: #{decoder_forward.5} parent=5 // pred_check
      _
    $region70: #{decoder_forward.5} parent=5 // pred_check_branch
      %403 = sbr.rel (%p400) target = $region72
    $region71: #{decoder_forward.5} parent=5 // pred_region
      %s404 = ssub.s32 %s19, 1
      %s405 = smul.u32 2, %s24
      %p406 = scmp.lt.s32.totalorder %s405, 3
      %s407 = scalar_select %p406, %s405, 3
      %s408 = smul.addr %s407, 8
      %s409 = scalar_lea.vmem %s0, %s408
      %p410 = pneg %p45
      %p411 = pneg %p42
      %s412 = smul.u32 2, %s24
      %p413 = scmp.lt.s32.totalorder %s412, 3
      %s414 = scalar_select %p413, %s412, 3
      %s415 = smul.addr %s414, 8
      %s416 = scalar_lea.vmem %s1, %s415
      %p417 = pneg %p71
      %p418 = pneg %p68
      %p419 = pneg %p92
      %p420 = pneg %p89
      %p421 = pneg %p113
      %p422 = pneg %p110
      %p423 = pneg %p134
      %p424 = pneg %p131
      %p425 = pneg %p155
      %p426 = pneg %p152
      %p427 = pneg %p176
      %p428 = pneg %p173
      %p429 = pneg %p197
      %p430 = pneg %p194
      %p431 = pneg %p218
      %p432 = pneg %p215
      %p433 = pneg %p239
      %p434 = pneg %p236
      %p435 = pneg %p260
      %p436 = pneg %p257
      %p437 = pneg %p281
      %p438 = pneg %p278
      %p439 = pneg %p302
      %p440 = pneg %p299
      %p441 = pneg %p328
      %p442 = pneg %p325
      %s443 = smul.u32 2, %s24
      %p444 = scmp.lt.s32.totalorder %s443, 3
      %s445 = scalar_select %p444, %s443, 3
      %s446 = smul.addr %s445, 8
      %s447 = scalar_lea.vmem %s13, %s446
      %s448 = smul.u32 2, %s24
      %p449 = scmp.lt.s32.totalorder %s448, 3
      %s450 = scalar_select %p449, %s448, 3
      %s451 = smul.addr %s450, 8
      %s452 = scalar_lea.vmem %s0, %s451
      %s453 = smul.u32 2, %s24
      %s454 = smul.u32 2, %s24
      %p455 = scmp.lt.s32.totalorder %s454, 3
      %s456 = scalar_select %p455, %s454, 3
      %s457 = smul.addr %s456, 8
      %s458 = scalar_lea.vmem %s1, %s457
      %s459 = smul.u32 2, %s24
      %s460 = smul.u32 2, %s24
      %p461 = scmp.lt.s32.totalorder %s460, 3
      %s462 = scalar_select %p461, %s460, 3
      %s463 = smul.addr %s462, 8
      %s464 = scalar_lea.vmem %s13, %s463
      %s465 = smul.u32 2, %s24
      %v467 = vld [vmem:[%s452] sm:$0xff]
      %v468 = vld [vmem:[%s452 + $0x8] sm:$0xff]
      %v469 = vld [vmem:[%s458] sm:$0xff]
      %v470 = vld [vmem:[%s458 + $0x8] sm:$0xff]
      %v471 = vld [vmem:[%s2] sm:$0xf]
      %v472 = vld [vmem:[%s2 + $0x4] sm:$0xf]
      %v473 = vld [vmem:[%s2 + $0x8] sm:$0xf]
      %v474 = vld [vmem:[%s2 + $0xc] sm:$0xf]
      %v475 = vld [vmem:[%s2 + $0x10] sm:$0xf]
      %v476 = vld [vmem:[%s2 + $0x14] sm:$0xf]
      %v477 = vld [vmem:[%s2 + $0x18] sm:$0xf]
      %v478 = vld [vmem:[%s2 + $0x1c] sm:$0xf]
      %v479 = vld [vmem:[%s2 + $0x20] sm:$0xf]
      %v480 = vld [vmem:[%s2 + $0x24] sm:$0xf]
      %v481 = vld [vmem:[%s2 + $0x28] sm:$0xf]
      %v482 = vld [vmem:[%s2 + $0x2c] sm:$0xf]
      %v483 = vld [vmem:[%s2 + $0x30] sm:$0xf]
      %v484 = vld [vmem:[%s2 + $0x34] sm:$0xf]
      %v485 = vld [vmem:[%s2 + $0x38] sm:$0xf]
      %v486 = vld [vmem:[%s2 + $0x3c] sm:$0xf]
      %v487 = vld [vmem:[%s3] sm:$0xf]
      %v488 = vld [vmem:[%s3 + $0x4] sm:$0xf]
      %v489 = vld [vmem:[%s3 + $0x8] sm:$0xf]
      %v490 = vld [vmem:[%s3 + $0xc] sm:$0xf]
      %v491 = vld [vmem:[%s3 + $0x10] sm:$0xf]
      %v492 = vld [vmem:[%s3 + $0x14] sm:$0xf]
      %v493 = vld [vmem:[%s3 + $0x18] sm:$0xf]
      %v494 = vld [vmem:[%s3 + $0x1c] sm:$0xf]
      %v495 = vld [vmem:[%s3 + $0x20] sm:$0xf]
      %v496 = vld [vmem:[%s3 + $0x24] sm:$0xf]
      %v497 = vld [vmem:[%s3 + $0x28] sm:$0xf]
      %v498 = vld [vmem:[%s3 + $0x2c] sm:$0xf]
      %v499 = vld [vmem:[%s3 + $0x30] sm:$0xf]
      %v500 = vld [vmem:[%s3 + $0x34] sm:$0xf]
      %v501 = vld [vmem:[%s3 + $0x38] sm:$0xf]
      %v502 = vld [vmem:[%s3 + $0x3c] sm:$0xf]
      %v503 = vld [vmem:[%s4] sm:$0x1]
      %v504 = vld [vmem:[%s5] sm:$0xf]
      %v505 = vld [vmem:[%s5 + $0x4] sm:$0xf]
      %v506 = vld [vmem:[%s5 + $0x8] sm:$0xf]
      %v507 = vld [vmem:[%s5 + $0xc] sm:$0xf]
      %v508 = vld [vmem:[%s5 + $0x10] sm:$0xf]
      %v509 = vld [vmem:[%s5 + $0x14] sm:$0xf]
      %v510 = vld [vmem:[%s5 + $0x18] sm:$0xf]
      %v511 = vld [vmem:[%s5 + $0x1c] sm:$0xf]
      %v512 = vld [vmem:[%s5 + $0x20] sm:$0xf]
      %v513 = vld [vmem:[%s5 + $0x24] sm:$0xf]
      %v514 = vld [vmem:[%s5 + $0x28] sm:$0xf]
      %v515 = vld [vmem:[%s5 + $0x2c] sm:$0xf]
      %v516 = vld [vmem:[%s5 + $0x30] sm:$0xf]
      %v517 = vld [vmem:[%s5 + $0x34] sm:$0xf]
      %v518 = vld [vmem:[%s5 + $0x38] sm:$0xf]
      %v519 = vld [vmem:[%s5 + $0x3c] sm:$0xf]
      %v520 = vld [vmem:[%s6] sm:$0x1]
      %v521 = vld [vmem:[%s7] sm:$0x1]
      %v522 = vld [vmem:[%s8] sm:$0x1]
      %v523 = vpack.c.bf16 %v468, %v467
      %v524 = vpack.c.bf16 %v470, %v469
      %v541 = vunpack.c.l.b16 %v487
      %v542 = vunpack.c.l.b16 %v488
      %v543 = vunpack.c.l.b16 %v489
      %v544 = vunpack.c.l.b16 %v490
      %v545 = vunpack.c.l.b16 %v491
      %v546 = vunpack.c.l.b16 %v492
      %v547 = vunpack.c.l.b16 %v493
      %v548 = vunpack.c.l.b16 %v494
      %v549 = vunpack.c.l.b16 %v495
      %v550 = vunpack.c.l.b16 %v496
      %v551 = vunpack.c.l.b16 %v497
      %v552 = vunpack.c.l.b16 %v498
      %v553 = vunpack.c.l.b16 %v499
      %v554 = vunpack.c.l.b16 %v500
      %v555 = vunpack.c.l.b16 %v501
      %v556 = vunpack.c.l.b16 %v502
      %v557 = vpack.c.b16 %v542, %v541
      %v558 = vpack.c.b16 %v544, %v543
      %v559 = vpack.c.b16 %v546, %v545
      %v560 = vpack.c.b16 %v548, %v547
      %v561 = vpack.c.b16 %v550, %v549
      %v562 = vpack.c.b16 %v552, %v551
      %v563 = vpack.c.b16 %v554, %v553
      %v564 = vpack.c.b16 %v556, %v555
      %573 = vmatprep.subr.bf16.mxu0 0
      %574 = vmatpush1.bf16.msra.mxu0 %v564
      %575 = vmatprep.subr.bf16.mxu0 0
      %576 = vmatpush1.bf16.msra.mxu0 %v563
      %577 = vmatprep.subr.bf16.mxu0 0
      %578 = vmatpush1.bf16.msra.mxu0 %v562
      %579 = vmatprep.subr.bf16.mxu0 0
      %580 = vmatpush1.bf16.msra.mxu0 %v561
      %581 = vmatprep.subr.bf16.mxu0 0
      %582 = vmatpush1.bf16.msra.mxu0 %v560
      %583 = vmatprep.subr.bf16.mxu0 0
      %584 = vmatpush1.bf16.msra.mxu0 %v559
      %585 = vmatprep.subr.bf16.mxu0 0
      %586 = vmatpush1.bf16.msra.mxu0 %v558
      %587 = vmatprep.subr.bf16.mxu0 0
      %588 = vmatpush1.bf16.msra.mxu0 %v557
      %589 = vmatprep.subr.bf16.mxu0 0
      %590 = vmatpush2.bf16.msra.mxu0 0
      %591 = vmatprep.subr.bf16.mxu0 0
      %592 = vmatpush2.bf16.msra.mxu0 0
      %593 = vmatprep.subr.bf16.mxu0 0
      %594 = vmatpush2.bf16.msra.mxu0 0
      %595 = vmatprep.subr.bf16.mxu0 0
      %596 = vmatpush2.bf16.msra.mxu0 0
      %597 = vmatprep.subr.bf16.mxu0 0
      %598 = vmatpush2.bf16.msra.mxu0 0
      %599 = vmatprep.subr.bf16.mxu0 0
      %600 = vmatpush2.bf16.msra.mxu0 0
      %601 = vmatprep.subr.bf16.mxu0 0
      %602 = vmatpush2.bf16.msra.mxu0 0
      %603 = vmatprep.subr.bf16.mxu0 0
      %604 = vmatpush2.bf16.msra.mxu0 0
      %605 = vmatprep.mubr.bf16.mxu0 0
      %606 = vmatmul.mubr.bf16.gmra.mxu0 %v524
      %v607 = vpop.f32.mrf.mxu0
      %v608 = vadd.f32 0.0, %v607
      %v609 = vpop.f32.mrf.mxu0
      %v610 = vpop.f32.mrf.mxu0
      %v611 = vadd.f32 0.0, %v610
      %v612 = vpop.f32.mrf.mxu0
      %613 = vdwg.mxu0
      %v630 = vunpack.c.l.b16 %v471
      %v631 = vunpack.c.l.b16 %v472
      %v632 = vunpack.c.l.b16 %v473
      %v633 = vunpack.c.l.b16 %v474
      %v634 = vunpack.c.l.b16 %v475
      %v635 = vunpack.c.l.b16 %v476
      %v636 = vunpack.c.l.b16 %v477
      %v637 = vunpack.c.l.b16 %v478
      %v638 = vunpack.c.l.b16 %v479
      %v639 = vunpack.c.l.b16 %v480
      %v640 = vunpack.c.l.b16 %v481
      %v641 = vunpack.c.l.b16 %v482
      %v642 = vunpack.c.l.b16 %v483
      %v643 = vunpack.c.l.b16 %v484
      %v644 = vunpack.c.l.b16 %v485
      %v645 = vunpack.c.l.b16 %v486
      %v646 = vpack.c.b16 %v631, %v630
      %v647 = vpack.c.b16 %v633, %v632
      %v648 = vpack.c.b16 %v635, %v634
      %v649 = vpack.c.b16 %v637, %v636
      %v650 = vpack.c.b16 %v639, %v638
      %v651 = vpack.c.b16 %v641, %v640
      %v652 = vpack.c.b16 %v643, %v642
      %v653 = vpack.c.b16 %v645, %v644
      %662 = vmatprep.subr.bf16.mxu0 0
      %663 = vmatpush1.bf16.msra.mxu0 %v653
      %664 = vmatprep.subr.bf16.mxu0 0
      %665 = vmatpush1.bf16.msra.mxu0 %v652
      %666 = vmatprep.subr.bf16.mxu0 0
      %667 = vmatpush1.bf16.msra.mxu0 %v651
      %668 = vmatprep.subr.bf16.mxu0 0
      %669 = vmatpush1.bf16.msra.mxu0 %v650
      %670 = vmatprep.subr.bf16.mxu0 0
      %671 = vmatpush1.bf16.msra.mxu0 %v649
      %672 = vmatprep.subr.bf16.mxu0 0
      %673 = vmatpush1.bf16.msra.mxu0 %v648
      %674 = vmatprep.subr.bf16.mxu0 0
      %675 = vmatpush1.bf16.msra.mxu0 %v647
      %676 = vmatprep.subr.bf16.mxu0 0
      %677 = vmatpush1.bf16.msra.mxu0 %v646
      %678 = vmatprep.subr.bf16.mxu0 0
      %679 = vmatpush2.bf16.msra.mxu0 0
      %680 = vmatprep.subr.bf16.mxu0 0
      %681 = vmatpush2.bf16.msra.mxu0 0
      %682 = vmatprep.subr.bf16.mxu0 0
      %683 = vmatpush2.bf16.msra.mxu0 0
      %684 = vmatprep.subr.bf16.mxu0 0
      %685 = vmatpush2.bf16.msra.mxu0 0
      %686 = vmatprep.subr.bf16.mxu0 0
      %687 = vmatpush2.bf16.msra.mxu0 0
      %688 = vmatprep.subr.bf16.mxu0 0
      %689 = vmatpush2.bf16.msra.mxu0 0
      %690 = vmatprep.subr.bf16.mxu0 0
      %691 = vmatpush2.bf16.msra.mxu0 0
      %692 = vmatprep.subr.bf16.mxu0 0
      %693 = vmatpush2.bf16.msra.mxu0 0
      %694 = vmatprep.mubr.bf16.mxu0 0
      %695 = vmatmul.mubr.bf16.gmra.mxu0 %v523
      %v696 = vpop.f32.mrf.mxu0
      %v697 = vadd.f32 %v608, %v696
      %v698 = vpop.f32.mrf.mxu0
      %v699 = vpop.f32.mrf.mxu0
      %v700 = vadd.f32 %v611, %v699
      %v701 = vpop.f32.mrf.mxu0
      %702 = vdwg.mxu0
      %v704 = vlaneseq
      %v705 = vshrl.u32 %v704, 7
      %v706 = vsub.s32 0, %v705
      %v707 = vrot.slane %v503, %v706
      %v709 = vadd.f32 %v697, %v707
      %v710 = vadd.f32 %v700, %v707
      %v711 = vxor.u32 %v709, 2147483648
      %v712 = vxor.u32 %v710, 2147483648
      %v713 = vmul.f32 %v711, 1.442695
      %v714 = vpow.pop %v713
      %v715 = vmul.f32 %v712, 1.442695
      %v716 = vpow.pop %v715
      %v717 = vadd.f32 %v714, 1.0
      %v718 = vadd.f32 %v716, 1.0
      %v719 = vrcp.pop %v717
      %v720 = vmul.f32 1.0, %v719
      %v721 = vrcp.pop %v718
      %v722 = vmul.f32 1.0, %v721
      %v723 = vmul.f32 %v709, %v720
      %v724 = vmul.f32 %v710, %v722
      %v725 = vpack.c.bf16 %v724, %v723
      %v727 = vlaneseq
      %v728 = vshrl.u32 %v727, 7
      %v729 = vsub.s32 0, %v728
      %v730 = vrot.slane %v520, %v729
      %v748 = vunpack.c.l.b16 %v504
      %v749 = vunpack.c.l.b16 %v505
      %v750 = vunpack.c.l.b16 %v506
      %v751 = vunpack.c.l.b16 %v507
      %v752 = vunpack.c.l.b16 %v508
      %v753 = vunpack.c.l.b16 %v509
      %v754 = vunpack.c.l.b16 %v510
      %v755 = vunpack.c.l.b16 %v511
      %v756 = vunpack.c.l.b16 %v512
      %v757 = vunpack.c.l.b16 %v513
      %v758 = vunpack.c.l.b16 %v514
      %v759 = vunpack.c.l.b16 %v515
      %v760 = vunpack.c.l.b16 %v516
      %v761 = vunpack.c.l.b16 %v517
      %v762 = vunpack.c.l.b16 %v518
      %v763 = vunpack.c.l.b16 %v519
      %v764 = vpack.c.b16 %v749, %v748
      %v765 = vpack.c.b16 %v751, %v750
      %v766 = vpack.c.b16 %v753, %v752
      %v767 = vpack.c.b16 %v755, %v754
      %v768 = vpack.c.b16 %v757, %v756
      %v769 = vpack.c.b16 %v759, %v758
      %v770 = vpack.c.b16 %v761, %v760
      %v771 = vpack.c.b16 %v763, %v762
      %780 = vmatprep.subr.bf16.mxu0 0
      %781 = vmatpush1.bf16.msra.mxu0 %v771
      %782 = vmatprep.subr.bf16.mxu0 0
      %783 = vmatpush1.bf16.msra.mxu0 %v770
      %784 = vmatprep.subr.bf16.mxu0 0
      %785 = vmatpush1.bf16.msra.mxu0 %v769
      %786 = vmatprep.subr.bf16.mxu0 0
      %787 = vmatpush1.bf16.msra.mxu0 %v768
      %788 = vmatprep.subr.bf16.mxu0 0
      %789 = vmatpush1.bf16.msra.mxu0 %v767
      %790 = vmatprep.subr.bf16.mxu0 0
      %791 = vmatpush1.bf16.msra.mxu0 %v766
      %792 = vmatprep.subr.bf16.mxu0 0
      %793 = vmatpush1.bf16.msra.mxu0 %v765
      %794 = vmatprep.subr.bf16.mxu0 0
      %795 = vmatpush1.bf16.msra.mxu0 %v764
      %796 = vmatprep.subr.bf16.mxu0 0
      %797 = vmatpush2.bf16.msra.mxu0 0
      %798 = vmatprep.subr.bf16.mxu0 0
      %799 = vmatpush2.bf16.msra.mxu0 0
      %800 = vmatprep.subr.bf16.mxu0 0
      %801 = vmatpush2.bf16.msra.mxu0 0
      %802 = vmatprep.subr.bf16.mxu0 0
      %803 = vmatpush2.bf16.msra.mxu0 0
      %804 = vmatprep.subr.bf16.mxu0 0
      %805 = vmatpush2.bf16.msra.mxu0 0
      %806 = vmatprep.subr.bf16.mxu0 0
      %807 = vmatpush2.bf16.msra.mxu0 0
      %808 = vmatprep.subr.bf16.mxu0 0
      %809 = vmatpush2.bf16.msra.mxu0 0
      %810 = vmatprep.subr.bf16.mxu0 0
      %811 = vmatpush2.bf16.msra.mxu0 0
      %812 = vmatprep.mubr.bf16.mxu0 0
      %813 = vmatmul.mubr.bf16.gmra.mxu0 %v725
      %v814 = vpop.f32.mrf.mxu0
      %v815 = vadd.f32 %v730, %v814
      %v816 = vpop.f32.mrf.mxu0
      %v817 = vpop.f32.mrf.mxu0
      %v818 = vadd.f32 %v730, %v817
      %v819 = vpop.f32.mrf.mxu0
      %820 = vdwg.mxu0
      %821 = vadd.xlane.f32.xlu0 %v815
      %v822 = vpop.xlane.xlu0 %821
      %823 = vadd.xlane.f32.xlu0 %v818
      %v824 = vpop.xlane.xlu0 %823
      %v825 = vmul.f32 %v822, 0.03125
      %v826 = vmul.f32 %v824, 0.03125
      %v827 = vsub.f32 %v815, %v825
      %v828 = vsub.f32 %v818, %v826
      %v829 = vlaneseq
      %v830 = vand.u32 %v829, 127
      %vm831 = vcmp.lt.s32.totalorder %v830, 32
      %v832 = vsel %vm831, %v827, 0.0
      %v833 = vsel %vm831, %v828, 0.0
      %v834 = vmul.f32 %v832, %v832
      %v835 = vmul.f32 %v833, %v833
      %836 = vadd.xlane.f32.xlu0 %v834
      %v837 = vpop.xlane.xlu0 %836
      %838 = vadd.xlane.f32.xlu0 %v835
      %v839 = vpop.xlane.xlu0 %838
      %v840 = vmul.f32 %v837, 0.03125
      %v841 = vmul.f32 %v839, 0.03125
      %v842 = vadd.f32 %v840, 1e-05
      %v843 = vadd.f32 %v841, 1e-05
      %v844 = vrsqrt.pop %v842
      %v845 = vrsqrt.pop %v843
      %v846 = vmul.f32 %v827, %v844
      %v847 = vmul.f32 %v828, %v845
      %v849 = vlaneseq
      %v850 = vshrl.u32 %v849, 7
      %v851 = vsub.s32 0, %v850
      %v852 = vrot.slane %v521, %v851
      %v854 = vmul.f32 %v846, %v852
      %v855 = vmul.f32 %v847, %v852
      %v857 = vlaneseq
      %v858 = vshrl.u32 %v857, 7
      %v859 = vsub.s32 0, %v858
      %v860 = vrot.slane %v522, %v859
      %v862 = vadd.f32 %v854, %v860
      %v863 = vadd.f32 %v855, %v860
      %v864 = vld [vmem:[%s9] sm:$0xf]
      %v865 = vld [vmem:[%s9 + $0x4] sm:$0xf]
      %v866 = vld [vmem:[%s9 + $0x8] sm:$0xf]
      %v867 = vld [vmem:[%s9 + $0xc] sm:$0xf]
      %v868 = vld [vmem:[%s9 + $0x10] sm:$0xf]
      %v869 = vld [vmem:[%s9 + $0x14] sm:$0xf]
      %v870 = vld [vmem:[%s9 + $0x18] sm:$0xf]
      %v871 = vld [vmem:[%s9 + $0x1c] sm:$0xf]
      %v872 = vld [vmem:[%s9 + $0x20] sm:$0xf]
      %v873 = vld [vmem:[%s9 + $0x24] sm:$0xf]
      %v874 = vld [vmem:[%s9 + $0x28] sm:$0xf]
      %v875 = vld [vmem:[%s9 + $0x2c] sm:$0xf]
      %v876 = vld [vmem:[%s9 + $0x30] sm:$0xf]
      %v877 = vld [vmem:[%s9 + $0x34] sm:$0xf]
      %v878 = vld [vmem:[%s9 + $0x38] sm:$0xf]
      %v879 = vld [vmem:[%s9 + $0x3c] sm:$0xf]
      %v880 = vld [vmem:[%s10] sm:$0x1]
      %v881 = vld [vmem:[%s11] sm:$0xf]
      %v882 = vld [vmem:[%s11 + $0x4] sm:$0xf]
      %v883 = vld [vmem:[%s11 + $0x8] sm:$0xf]
      %v884 = vld [vmem:[%s11 + $0xc] sm:$0xf]
      %v885 = vld [vmem:[%s11 + $0x10] sm:$0xf]
      %v886 = vld [vmem:[%s11 + $0x14] sm:$0xf]
      %v887 = vld [vmem:[%s11 + $0x18] sm:$0xf]
      %v888 = vld [vmem:[%s11 + $0x1c] sm:$0xf]
      %v889 = vld [vmem:[%s11 + $0x20] sm:$0xf]
      %v890 = vld [vmem:[%s11 + $0x24] sm:$0xf]
      %v891 = vld [vmem:[%s11 + $0x28] sm:$0xf]
      %v892 = vld [vmem:[%s11 + $0x2c] sm:$0xf]
      %v893 = vld [vmem:[%s11 + $0x30] sm:$0xf]
      %v894 = vld [vmem:[%s11 + $0x34] sm:$0xf]
      %v895 = vld [vmem:[%s11 + $0x38] sm:$0xf]
      %v896 = vld [vmem:[%s11 + $0x3c] sm:$0xf]
      %v897 = vld [vmem:[%s12] sm:$0x1]
      %v898 = vpack.c.bf16 %v863, %v862
      %v900 = vlaneseq
      %v901 = vshrl.u32 %v900, 7
      %v902 = vsub.s32 0, %v901
      %v903 = vrot.slane %v880, %v902
      %v921 = vunpack.c.l.b16 %v864
      %v922 = vunpack.c.l.b16 %v865
      %v923 = vunpack.c.l.b16 %v866
      %v924 = vunpack.c.l.b16 %v867
      %v925 = vunpack.c.l.b16 %v868
      %v926 = vunpack.c.l.b16 %v869
      %v927 = vunpack.c.l.b16 %v870
      %v928 = vunpack.c.l.b16 %v871
      %v929 = vunpack.c.l.b16 %v872
      %v930 = vunpack.c.l.b16 %v873
      %v931 = vunpack.c.l.b16 %v874
      %v932 = vunpack.c.l.b16 %v875
      %v933 = vunpack.c.l.b16 %v876
      %v934 = vunpack.c.l.b16 %v877
      %v935 = vunpack.c.l.b16 %v878
      %v936 = vunpack.c.l.b16 %v879
      %v937 = vpack.c.b16 %v922, %v921
      %v938 = vpack.c.b16 %v924, %v923
      %v939 = vpack.c.b16 %v926, %v925
      %v940 = vpack.c.b16 %v928, %v927
      %v941 = vpack.c.b16 %v930, %v929
      %v942 = vpack.c.b16 %v932, %v931
      %v943 = vpack.c.b16 %v934, %v933
      %v944 = vpack.c.b16 %v936, %v935
      %953 = vmatprep.subr.bf16.mxu0 0
      %954 = vmatpush1.bf16.msra.mxu0 %v944
      %955 = vmatprep.subr.bf16.mxu0 0
      %956 = vmatpush1.bf16.msra.mxu0 %v943
      %957 = vmatprep.subr.bf16.mxu0 0
      %958 = vmatpush1.bf16.msra.mxu0 %v942
      %959 = vmatprep.subr.bf16.mxu0 0
      %960 = vmatpush1.bf16.msra.mxu0 %v941
      %961 = vmatprep.subr.bf16.mxu0 0
      %962 = vmatpush1.bf16.msra.mxu0 %v940
      %963 = vmatprep.subr.bf16.mxu0 0
      %964 = vmatpush1.bf16.msra.mxu0 %v939
      %965 = vmatprep.subr.bf16.mxu0 0
      %966 = vmatpush1.bf16.msra.mxu0 %v938
      %967 = vmatprep.subr.bf16.mxu0 0
      %968 = vmatpush1.bf16.msra.mxu0 %v937
      %969 = vmatprep.subr.bf16.mxu0 0
      %970 = vmatpush2.bf16.msra.mxu0 0
      %971 = vmatprep.subr.bf16.mxu0 0
      %972 = vmatpush2.bf16.msra.mxu0 0
      %973 = vmatprep.subr.bf16.mxu0 0
      %974 = vmatpush2.bf16.msra.mxu0 0
      %975 = vmatprep.subr.bf16.mxu0 0
      %976 = vmatpush2.bf16.msra.mxu0 0
      %977 = vmatprep.subr.bf16.mxu0 0
      %978 = vmatpush2.bf16.msra.mxu0 0
      %979 = vmatprep.subr.bf16.mxu0 0
      %980 = vmatpush2.bf16.msra.mxu0 0
      %981 = vmatprep.subr.bf16.mxu0 0
      %982 = vmatpush2.bf16.msra.mxu0 0
      %983 = vmatprep.subr.bf16.mxu0 0
      %984 = vmatpush2.bf16.msra.mxu0 0
      %985 = vmatprep.mubr.bf16.mxu0 0
      %986 = vmatmul.mubr.bf16.gmra.mxu0 %v898
      %v987 = vpop.f32.mrf.mxu0
      %v988 = vadd.f32 %v903, %v987
      %v989 = vpop.f32.mrf.mxu0
      %v990 = vpop.f32.mrf.mxu0
      %v991 = vadd.f32 %v903, %v990
      %v992 = vpop.f32.mrf.mxu0
      %993 = vdwg.mxu0
      %v994 = vxor.u32 %v988, 2147483648
      %v995 = vxor.u32 %v991, 2147483648
      %v996 = vmul.f32 %v994, 1.442695
      %v997 = vpow.pop %v996
      %v998 = vmul.f32 %v995, 1.442695
      %v999 = vpow.pop %v998
      %v1000 = vadd.f32 %v997, 1.0
      %v1001 = vadd.f32 %v999, 1.0
      %v1002 = vrcp.pop %v1000
      %v1003 = vmul.f32 1.0, %v1002
      %v1004 = vrcp.pop %v1001
      %v1005 = vmul.f32 1.0, %v1004
      %v1006 = vpack.c.bf16 %v1005, %v1003
      %v1008 = vlaneseq
      %v1009 = vshrl.u32 %v1008, 7
      %v1010 = vsub.s32 0, %v1009
      %v1011 = vrot.slane %v897, %v1010
      %v1029 = vunpack.c.l.b16 %v881
      %v1030 = vunpack.c.l.b16 %v882
      %v1031 = vunpack.c.l.b16 %v883
      %v1032 = vunpack.c.l.b16 %v884
      %v1033 = vunpack.c.l.b16 %v885
      %v1034 = vunpack.c.l.b16 %v886
      %v1035 = vunpack.c.l.b16 %v887
      %v1036 = vunpack.c.l.b16 %v888
      %v1037 = vunpack.c.l.b16 %v889
      %v1038 = vunpack.c.l.b16 %v890
      %v1039 = vunpack.c.l.b16 %v891
      %v1040 = vunpack.c.l.b16 %v892
      %v1041 = vunpack.c.l.b16 %v893
      %v1042 = vunpack.c.l.b16 %v894
      %v1043 = vunpack.c.l.b16 %v895
      %v1044 = vunpack.c.l.b16 %v896
      %v1045 = vpack.c.b16 %v1030, %v1029
      %v1046 = vpack.c.b16 %v1032, %v1031
      %v1047 = vpack.c.b16 %v1034, %v1033
      %v1048 = vpack.c.b16 %v1036, %v1035
      %v1049 = vpack.c.b16 %v1038, %v1037
      %v1050 = vpack.c.b16 %v1040, %v1039
      %v1051 = vpack.c.b16 %v1042, %v1041
      %v1052 = vpack.c.b16 %v1044, %v1043
      %1061 = vmatprep.subr.bf16.mxu0 0
      %1062 = vmatpush1.bf16.msra.mxu0 %v1052
      %1063 = vmatprep.subr.bf16.mxu0 0
      %1064 = vmatpush1.bf16.msra.mxu0 %v1051
      %1065 = vmatprep.subr.bf16.mxu0 0
      %1066 = vmatpush1.bf16.msra.mxu0 %v1050
      %1067 = vmatprep.subr.bf16.mxu0 0
      %1068 = vmatpush1.bf16.msra.mxu0 %v1049
      %1069 = vmatprep.subr.bf16.mxu0 0
      %1070 = vmatpush1.bf16.msra.mxu0 %v1048
      %1071 = vmatprep.subr.bf16.mxu0 0
      %1072 = vmatpush1.bf16.msra.mxu0 %v1047
      %1073 = vmatprep.subr.bf16.mxu0 0
      %1074 = vmatpush1.bf16.msra.mxu0 %v1046
      %1075 = vmatprep.subr.bf16.mxu0 0
      %1076 = vmatpush1.bf16.msra.mxu0 %v1045
      %1077 = vmatprep.subr.bf16.mxu0 0
      %1078 = vmatpush2.bf16.msra.mxu0 0
      %1079 = vmatprep.subr.bf16.mxu0 0
      %1080 = vmatpush2.bf16.msra.mxu0 0
      %1081 = vmatprep.subr.bf16.mxu0 0
      %1082 = vmatpush2.bf16.msra.mxu0 0
      %1083 = vmatprep.subr.bf16.mxu0 0
      %1084 = vmatpush2.bf16.msra.mxu0 0
      %1085 = vmatprep.subr.bf16.mxu0 0
      %1086 = vmatpush2.bf16.msra.mxu0 0
      %1087 = vmatprep.subr.bf16.mxu0 0
      %1088 = vmatpush2.bf16.msra.mxu0 0
      %1089 = vmatprep.subr.bf16.mxu0 0
      %1090 = vmatpush2.bf16.msra.mxu0 0
      %1091 = vmatprep.subr.bf16.mxu0 0
      %1092 = vmatpush2.bf16.msra.mxu0 0
      %1093 = vmatprep.mubr.bf16.mxu0 0
      %1094 = vmatmul.mubr.bf16.gmra.mxu0 %v1006
      %v1095 = vpop.f32.mrf.mxu0
      %v1096 = vadd.f32 %v1011, %v1095
      %v1097 = vpop.f32.mrf.mxu0
      %v1098 = vpop.f32.mrf.mxu0
      %v1099 = vadd.f32 %v1011, %v1098
      %v1100 = vpop.f32.mrf.mxu0
      %1101 = vdwg.mxu0
      %1102 = vst [vmem:[%s464] sm:$0xff] %v1096
      %1103 = vst [vmem:[%s464 + $0x8] sm:$0xff] %v1099
      %s1104 = smul.u32 2, %s24
      %p1105 = scmp.lt.s32.totalorder %s1104, 3
      %s1106 = scalar_select %p1105, %s1104, 3
      %s1107 = smul.addr %s1106, 8
      %s1108 = scalar_lea.vmem %s13, %s1107
      // Predicated region
      $region73: #{decoder_forward.5} parent=71 // pred_check
        %p1109 = pneg %p325
      $region74: #{decoder_forward.5} parent=71 // pred_check_branch
        %1111 = sbr.rel (%p1109) target = $region76
      $region75: #{decoder_forward.5} parent=71 // pred_region
        %s1112 = smul.u32 2, %s24
      $region76: #{decoder_forward.5} parent=71 // pred_fallthru
        _
    $region72: #{decoder_forward.5} parent=5 // pred_fallthru
      _
    %p1113 = scmp.le.s32.totalorder 2, %s19
    // Predicated region
    $region77: #{decoder_forward.5} parent=5 // pred_check
      %p1114 = pneg %p1113
    $region78: #{decoder_forward.5} parent=5 // pred_check_branch
      %1116 = sbr.rel (%p1114) target = $region80
    $region79: #{decoder_forward.5} parent=5 // pred_region
      %s1117 = ssub.s32 %s19, 2
      // Predicated region
      $region81: #{decoder_forward.5} parent=79 // pred_check
        %p1118 = pneg %p331
      $region82: #{decoder_forward.5} parent=79 // pred_check_branch
        %1120 = sbr.rel (%p1118) target = $region84
      $region83: #{decoder_forward.5} parent=79 // pred_region
        %s1121 = smul.u32 2, %s25
        %p1122 = scmp.lt.s32.totalorder %s1121, 3
        %s1123 = scalar_select %p1122, %s1121, 3
        %s1124 = smul.addr %s1123, 8
        %s1125 = scalar_lea.vmem %s13, %s1124
      $region84: #{decoder_forward.5} parent=79 // pred_fallthru
        _
    $region80: #{decoder_forward.5} parent=5 // pred_fallthru
      _
  $region6: #{decoder_forward.5} parent=0 // loop_footer
    %s23 = sadd.s32 1, %s19
  $region7: #{decoder_forward.5} parent=0 // loop_footer_branch
    %18 = sbr.rel target = $region3
  $region8: #{decoder_forward.5} parent=0 // loop_exit
    _

// kernel: decoder_forward.3
$region0: #{decoder_forward.3}
  #allocation0 [shape = 'u32[]', space=smem, size = 0x4, offset = 0x4, fixed_abs, tag = 'smem constant byte address 0x4 - core index']
  #allocation1 [shape = 'u32[144,128]{1,0:T(1,128)}', space=vmem, size = 0x12000, scoped, tag = 'internal scratch']
  %s0 = inlined_call_operand.vmem [shape: f32[64,128], index: 0, kind: input, shape index: {}]
  %s1 = inlined_call_operand.vmem [shape: f32[64,128], index: 1, kind: input, shape index: {}]
  %s2 = inlined_call_operand.vmem [shape: f32[64,128], index: 2, kind: input, shape index: {}]
  %s3 = inlined_call_operand.vmem [shape: bf16[128,128], index: 3, kind: input, shape index: {}]
  %s4 = inlined_call_operand.vmem [shape: f32[1,128], index: 4, kind: input, shape index: {}]
  %s5 = inlined_call_operand.vmem [shape: bf16[128,128], index: 5, kind: input, shape index: {}]
  %s6 = inlined_call_operand.vmem [shape: f32[1,128], index: 6, kind: input, shape index: {}]
  %s7 = inlined_call_operand.vmem [shape: f32[1,128], index: 7, kind: input, shape index: {}]
  %s8 = inlined_call_operand.vmem [shape: f32[1,128], index: 8, kind: input, shape index: {}]
  %s9 = inlined_call_operand.vmem [shape: bf16[128,128], index: 9, kind: input, shape index: {}]
  %s10 = inlined_call_operand.vmem [shape: bf16[128,128], index: 10, kind: input, shape index: {}]
  %s11 = inlined_call_operand.vmem [shape: bf16[128,128], index: 11, kind: input, shape index: {}]
  %s12 = inlined_call_operand.vmem [shape: f32[1,128], index: 12, kind: input, shape index: {}]
  %s13 = inlined_call_operand.vmem [shape: bf16[128,128], index: 13, kind: input, shape index: {}]
  %s14 = inlined_call_operand.vmem [shape: f32[1,128], index: 14, kind: input, shape index: {}]
  %s15 = inlined_call_operand.vmem [shape: f32[1,128], index: 15, kind: input, shape index: {}]
  %s16 = inlined_call_operand.vmem [shape: f32[1,128], index: 16, kind: input, shape index: {}]
  %s17 = inlined_call_operand.vmem [shape: f32[64,128], index: 17, kind: output, shape index: {0}]
  %s18 = inlined_call_operand.vmem [shape: f32[64,128], index: 18, kind: output, shape index: {1}]
  %19 = xla_tuple %s17, %s18
  %s20 = sld [smem:[#allocation0]]
  $region109: #{decoder_forward.3} parent=0
    _
  %s22 = ssub.s32 1, %s20
  %s23 = scalar_select 0, %s22, %s20
  loop: start=0, step=1, limit=4
  $region2: #{decoder_forward.3} parent=0 // loop_pre_header
    _
  $region3: #{decoder_forward.3} parent=0 // loop_header
    %s25 = sphi 0, %s29
    %p26 = scmp.ge.s32.totalorder %s25, 4
    %s35 = sphi 0, %s37
    %s38 = sphi 0, %s35
    %s39 = sphi 0, %s38
    %s55 = sphi 0, %s39
    %s61 = sphi 0, %s63
    %s64 = sphi 0, %s61
    %s65 = sphi 0, %s64
    %s81 = sphi 0, %s65
    %s87 = sphi 0, %s89
    %s90 = sphi 0, %s87
    %s91 = sphi 0, %s90
    %s107 = sphi 0, %s91
    %s111 = sphi 0, %s111
    %s113 = sphi 0, %s111
    %s114 = sphi 0, %s113
    %s128 = sphi 0, %s114
    %s132 = sphi 0, %s132
    %s134 = sphi 0, %s132
    %s135 = sphi 0, %s134
    %s149 = sphi 0, %s135
    %s153 = sphi 0, %s153
    %s155 = sphi 0, %s153
    %s156 = sphi 0, %s155
    %s170 = sphi 0, %s156
    %s174 = sphi 0, %s174
    %s176 = sphi 0, %s174
    %s177 = sphi 0, %s176
    %s191 = sphi 0, %s177
    %s195 = sphi 0, %s195
    %s197 = sphi 0, %s195
    %s198 = sphi 0, %s197
    %s212 = sphi 0, %s198
    %s216 = sphi 0, %s216
    %s218 = sphi 0, %s216
    %s219 = sphi 0, %s218
    %s233 = sphi 0, %s219
    %s237 = sphi 0, %s237
    %s239 = sphi 0, %s237
    %s240 = sphi 0, %s239
    %s254 = sphi 0, %s240
    %s258 = sphi 0, %s258
    %s260 = sphi 0, %s258
    %s261 = sphi 0, %s260
    %s275 = sphi 0, %s261
    %s279 = sphi 0, %s279
    %s281 = sphi 0, %s279
    %s282 = sphi 0, %s281
    %s296 = sphi 0, %s282
    %s300 = sphi 0, %s300
    %s302 = sphi 0, %s300
    %s303 = sphi 0, %s302
    %s317 = sphi 0, %s303
    %s321 = sphi 0, %s321
    %s323 = sphi 0, %s321
    %s324 = sphi 0, %s323
    %s338 = sphi 0, %s324
    %s342 = sphi 0, %s342
    %s344 = sphi 0, %s342
    %s345 = sphi 0, %s344
    %s359 = sphi 0, %s345
    %s363 = sphi 0, %s363
    %s365 = sphi 0, %s363
    %s366 = sphi 0, %s365
    %s380 = sphi 0, %s366
    %s384 = sphi 0, %s384
    %s386 = sphi 0, %s384
    %s387 = sphi 0, %s386
    %s401 = sphi 0, %s387
    %s407 = sphi 0, %s409
    %s410 = sphi 0, %s407
    %s411 = sphi 0, %s410
    %s427 = sphi 0, %s411
    %s433 = sphi 0, %s435
    %s436 = sphi 0, %s433
    %s437 = sphi 0, %s436
    %s453 = sphi 0, %s437
  $region4: #{decoder_forward.3} parent=0 // loop_header_branch
    %28 = sbr.rel (%p26) target = $region8
  $region5: #{decoder_forward.3} parent=0 // loop_body
    %s30 = ssub.s32 %s25, 1
    %s31 = ssub.s32 %s25, 2
    %s32 = sadd.s32 %s25, 1
    %s33 = ssub.s32 %s25, %s32
    %p34 = scmp.eq.s32.totalorder %s33, 0
    %s36 = sadd.s32 %s35, 1
    %s37 = scalar_select %p34, %s35, %s36
    %p40 = pneg %p34
    %p41 = scmp.eq.s32.totalorder %s25, 1
    %p42 = por %p40, %p41
    %p43 = scmp.ne.s32.totalorder %s35, %s38
    %p44 = scmp.eq.s32.totalorder %s25, 0
    %p45 = por %p43, %p44
    %p46 = scmp.ne.s32.totalorder %s35, %s38
    %p47 = scmp.eq.s32.totalorder %s30, 1
    %p48 = por %p46, %p47
    %p49 = scmp.ne.s32.totalorder %s38, %s39
    %p50 = scmp.eq.s32.totalorder %s30, 0
    %p51 = por %p49, %p50
    %p52 = scmp.ne.s32.totalorder %s38, %s39
    %p53 = scmp.eq.s32.totalorder %s31, 1
    %p54 = por %p52, %p53
    %p56 = scmp.ne.s32.totalorder %s39, %s55
    %p57 = scmp.eq.s32.totalorder %s31, 0
    %p58 = por %p56, %p57
    %s59 = ssub.s32 %s25, %s32
    %p60 = scmp.eq.s32.totalorder %s59, 0
    %s62 = sadd.s32 %s61, 1
    %s63 = scalar_select %p60, %s61, %s62
    %p66 = pneg %p60
    %p67 = scmp.eq.s32.totalorder %s25, 1
    %p68 = por %p66, %p67
    %p69 = scmp.ne.s32.totalorder %s61, %s64
    %p70 = scmp.eq.s32.totalorder %s25, 0
    %p71 = por %p69, %p70
    %p72 = scmp.ne.s32.totalorder %s61, %s64
    %p73 = scmp.eq.s32.totalorder %s30, 1
    %p74 = por %p72, %p73
    %p75 = scmp.ne.s32.totalorder %s64, %s65
    %p76 = scmp.eq.s32.totalorder %s30, 0
    %p77 = por %p75, %p76
    %p78 = scmp.ne.s32.totalorder %s64, %s65
    %p79 = scmp.eq.s32.totalorder %s31, 1
    %p80 = por %p78, %p79
    %p82 = scmp.ne.s32.totalorder %s65, %s81
    %p83 = scmp.eq.s32.totalorder %s31, 0
    %p84 = por %p82, %p83
    %s85 = ssub.s32 %s25, %s32
    %p86 = scmp.eq.s32.totalorder %s85, 0
    %s88 = sadd.s32 %s87, 1
    %s89 = scalar_select %p86, %s87, %s88
    %p92 = pneg %p86
    %p93 = scmp.eq.s32.totalorder %s25, 1
    %p94 = por %p92, %p93
    %p95 = scmp.ne.s32.totalorder %s87, %s90
    %p96 = scmp.eq.s32.totalorder %s25, 0
    %p97 = por %p95, %p96
    %p98 = scmp.ne.s32.totalorder %s87, %s90
    %p99 = scmp.eq.s32.totalorder %s30, 1
    %p100 = por %p98, %p99
    %p101 = scmp.ne.s32.totalorder %s90, %s91
    %p102 = scmp.eq.s32.totalorder %s30, 0
    %p103 = por %p101, %p102
    %p104 = scmp.ne.s32.totalorder %s90, %s91
    %p105 = scmp.eq.s32.totalorder %s31, 1
    %p106 = por %p104, %p105
    %p108 = scmp.ne.s32.totalorder %s91, %s107
    %p109 = scmp.eq.s32.totalorder %s31, 0
    %p110 = por %p108, %p109
    %s112 = sadd.s32 %s111, 1
    %p115 = scmp.eq.s32.totalorder %s25, 1
    %p116 = scmp.ne.s32.totalorder %s111, %s113
    %p117 = scmp.eq.s32.totalorder %s25, 0
    %p118 = por %p116, %p117
    %p119 = scmp.ne.s32.totalorder %s111, %s113
    %p120 = scmp.eq.s32.totalorder %s30, 1
    %p121 = por %p119, %p120
    %p122 = scmp.ne.s32.totalorder %s113, %s114
    %p123 = scmp.eq.s32.totalorder %s30, 0
    %p124 = por %p122, %p123
    %p125 = scmp.ne.s32.totalorder %s113, %s114
    %p126 = scmp.eq.s32.totalorder %s31, 1
    %p127 = por %p125, %p126
    %p129 = scmp.ne.s32.totalorder %s114, %s128
    %p130 = scmp.eq.s32.totalorder %s31, 0
    %p131 = por %p129, %p130
    %s133 = sadd.s32 %s132, 1
    %p136 = scmp.eq.s32.totalorder %s25, 1
    %p137 = scmp.ne.s32.totalorder %s132, %s134
    %p138 = scmp.eq.s32.totalorder %s25, 0
    %p139 = por %p137, %p138
    %p140 = scmp.ne.s32.totalorder %s132, %s134
    %p141 = scmp.eq.s32.totalorder %s30, 1
    %p142 = por %p140, %p141
    %p143 = scmp.ne.s32.totalorder %s134, %s135
    %p144 = scmp.eq.s32.totalorder %s30, 0
    %p145 = por %p143, %p144
    %p146 = scmp.ne.s32.totalorder %s134, %s135
    %p147 = scmp.eq.s32.totalorder %s31, 1
    %p148 = por %p146, %p147
    %p150 = scmp.ne.s32.totalorder %s135, %s149
    %p151 = scmp.eq.s32.totalorder %s31, 0
    %p152 = por %p150, %p151
    %s154 = sadd.s32 %s153, 1
    %p157 = scmp.eq.s32.totalorder %s25, 1
    %p158 = scmp.ne.s32.totalorder %s153, %s155
    %p159 = scmp.eq.s32.totalorder %s25, 0
    %p160 = por %p158, %p159
    %p161 = scmp.ne.s32.totalorder %s153, %s155
    %p162 = scmp.eq.s32.totalorder %s30, 1
    %p163 = por %p161, %p162
    %p164 = scmp.ne.s32.totalorder %s155, %s156
    %p165 = scmp.eq.s32.totalorder %s30, 0
    %p166 = por %p164, %p165
    %p167 = scmp.ne.s32.totalorder %s155, %s156
    %p168 = scmp.eq.s32.totalorder %s31, 1
    %p169 = por %p167, %p168
    %p171 = scmp.ne.s32.totalorder %s156, %s170
    %p172 = scmp.eq.s32.totalorder %s31, 0
    %p173 = por %p171, %p172
    %s175 = sadd.s32 %s174, 1
    %p178 = scmp.eq.s32.totalorder %s25, 1
    %p179 = scmp.ne.s32.totalorder %s174, %s176
    %p180 = scmp.eq.s32.totalorder %s25, 0
    %p181 = por %p179, %p180
    %p182 = scmp.ne.s32.totalorder %s174, %s176
    %p183 = scmp.eq.s32.totalorder %s30, 1
    %p184 = por %p182, %p183
    %p185 = scmp.ne.s32.totalorder %s176, %s177
    %p186 = scmp.eq.s32.totalorder %s30, 0
    %p187 = por %p185, %p186
    %p188 = scmp.ne.s32.totalorder %s176, %s177
    %p189 = scmp.eq.s32.totalorder %s31, 1
    %p190 = por %p188, %p189
    %p192 = scmp.ne.s32.totalorder %s177, %s191
    %p193 = scmp.eq.s32.totalorder %s31, 0
    %p194 = por %p192, %p193
    %s196 = sadd.s32 %s195, 1
    %p199 = scmp.eq.s32.totalorder %s25, 1
    %p200 = scmp.ne.s32.totalorder %s195, %s197
    %p201 = scmp.eq.s32.totalorder %s25, 0
    %p202 = por %p200, %p201
    %p203 = scmp.ne.s32.totalorder %s195, %s197
    %p204 = scmp.eq.s32.totalorder %s30, 1
    %p205 = por %p203, %p204
    %p206 = scmp.ne.s32.totalorder %s197, %s198
    %p207 = scmp.eq.s32.totalorder %s30, 0
    %p208 = por %p206, %p207
    %p209 = scmp.ne.s32.totalorder %s197, %s198
    %p210 = scmp.eq.s32.totalorder %s31, 1
    %p211 = por %p209, %p210
    %p213 = scmp.ne.s32.totalorder %s198, %s212
    %p214 = scmp.eq.s32.totalorder %s31, 0
    %p215 = por %p213, %p214
    %s217 = sadd.s32 %s216, 1
    %p220 = scmp.eq.s32.totalorder %s25, 1
    %p221 = scmp.ne.s32.totalorder %s216, %s218
    %p222 = scmp.eq.s32.totalorder %s25, 0
    %p223 = por %p221, %p222
    %p224 = scmp.ne.s32.totalorder %s216, %s218
    %p225 = scmp.eq.s32.totalorder %s30, 1
    %p226 = por %p224, %p225
    %p227 = scmp.ne.s32.totalorder %s218, %s219
    %p228 = scmp.eq.s32.totalorder %s30, 0
    %p229 = por %p227, %p228
    %p230 = scmp.ne.s32.totalorder %s218, %s219
    %p231 = scmp.eq.s32.totalorder %s31, 1
    %p232 = por %p230, %p231
    %p234 = scmp.ne.s32.totalorder %s219, %s233
    %p235 = scmp.eq.s32.totalorder %s31, 0
    %p236 = por %p234, %p235
    %s238 = sadd.s32 %s237, 1
    %p241 = scmp.eq.s32.totalorder %s25, 1
    %p242 = scmp.ne.s32.totalorder %s237, %s239
    %p243 = scmp.eq.s32.totalorder %s25, 0
    %p244 = por %p242, %p243
    %p245 = scmp.ne.s32.totalorder %s237, %s239
    %p246 = scmp.eq.s32.totalorder %s30, 1
    %p247 = por %p245, %p246
    %p248 = scmp.ne.s32.totalorder %s239, %s240
    %p249 = scmp.eq.s32.totalorder %s30, 0
    %p250 = por %p248, %p249
    %p251 = scmp.ne.s32.totalorder %s239, %s240
    %p252 = scmp.eq.s32.totalorder %s31, 1
    %p253 = por %p251, %p252
    %p255 = scmp.ne.s32.totalorder %s240, %s254
    %p256 = scmp.eq.s32.totalorder %s31, 0
    %p257 = por %p255, %p256
    %s259 = sadd.s32 %s258, 1
    %p262 = scmp.eq.s32.totalorder %s25, 1
    %p263 = scmp.ne.s32.totalorder %s258, %s260
    %p264 = scmp.eq.s32.totalorder %s25, 0
    %p265 = por %p263, %p264
    %p266 = scmp.ne.s32.totalorder %s258, %s260
    %p267 = scmp.eq.s32.totalorder %s30, 1
    %p268 = por %p266, %p267
    %p269 = scmp.ne.s32.totalorder %s260, %s261
    %p270 = scmp.eq.s32.totalorder %s30, 0
    %p271 = por %p269, %p270
    %p272 = scmp.ne.s32.totalorder %s260, %s261
    %p273 = scmp.eq.s32.totalorder %s31, 1
    %p274 = por %p272, %p273
    %p276 = scmp.ne.s32.totalorder %s261, %s275
    %p277 = scmp.eq.s32.totalorder %s31, 0
    %p278 = por %p276, %p277
    %s280 = sadd.s32 %s279, 1
    %p283 = scmp.eq.s32.totalorder %s25, 1
    %p284 = scmp.ne.s32.totalorder %s279, %s281
    %p285 = scmp.eq.s32.totalorder %s25, 0
    %p286 = por %p284, %p285
    %p287 = scmp.ne.s32.totalorder %s279, %s281
    %p288 = scmp.eq.s32.totalorder %s30, 1
    %p289 = por %p287, %p288
    %p290 = scmp.ne.s32.totalorder %s281, %s282
    %p291 = scmp.eq.s32.totalorder %s30, 0
    %p292 = por %p290, %p291
    %p293 = scmp.ne.s32.totalorder %s281, %s282
    %p294 = scmp.eq.s32.totalorder %s31, 1
    %p295 = por %p293, %p294
    %p297 = scmp.ne.s32.totalorder %s282, %s296
    %p298 = scmp.eq.s32.totalorder %s31, 0
    %p299 = por %p297, %p298
    %s301 = sadd.s32 %s300, 1
    %p304 = scmp.eq.s32.totalorder %s25, 1
    %p305 = scmp.ne.s32.totalorder %s300, %s302
    %p306 = scmp.eq.s32.totalorder %s25, 0
    %p307 = por %p305, %p306
    %p308 = scmp.ne.s32.totalorder %s300, %s302
    %p309 = scmp.eq.s32.totalorder %s30, 1
    %p310 = por %p308, %p309
    %p311 = scmp.ne.s32.totalorder %s302, %s303
    %p312 = scmp.eq.s32.totalorder %s30, 0
    %p313 = por %p311, %p312
    %p314 = scmp.ne.s32.totalorder %s302, %s303
    %p315 = scmp.eq.s32.totalorder %s31, 1
    %p316 = por %p314, %p315
    %p318 = scmp.ne.s32.totalorder %s303, %s317
    %p319 = scmp.eq.s32.totalorder %s31, 0
    %p320 = por %p318, %p319
    %s322 = sadd.s32 %s321, 1
    %p325 = scmp.eq.s32.totalorder %s25, 1
    %p326 = scmp.ne.s32.totalorder %s321, %s323
    %p327 = scmp.eq.s32.totalorder %s25, 0
    %p328 = por %p326, %p327
    %p329 = scmp.ne.s32.totalorder %s321, %s323
    %p330 = scmp.eq.s32.totalorder %s30, 1
    %p331 = por %p329, %p330
    %p332 = scmp.ne.s32.totalorder %s323, %s324
    %p333 = scmp.eq.s32.totalorder %s30, 0
    %p334 = por %p332, %p333
    %p335 = scmp.ne.s32.totalorder %s323, %s324
    %p336 = scmp.eq.s32.totalorder %s31, 1
    %p337 = por %p335, %p336
    %p339 = scmp.ne.s32.totalorder %s324, %s338
    %p340 = scmp.eq.s32.totalorder %s31, 0
    %p341 = por %p339, %p340
    %s343 = sadd.s32 %s342, 1
    %p346 = scmp.eq.s32.totalorder %s25, 1
    %p347 = scmp.ne.s32.totalorder %s342, %s344
    %p348 = scmp.eq.s32.totalorder %s25, 0
    %p349 = por %p347, %p348
    %p350 = scmp.ne.s32.totalorder %s342, %s344
    %p351 = scmp.eq.s32.totalorder %s30, 1
    %p352 = por %p350, %p351
    %p353 = scmp.ne.s32.totalorder %s344, %s345
    %p354 = scmp.eq.s32.totalorder %s30, 0
    %p355 = por %p353, %p354
    %p356 = scmp.ne.s32.totalorder %s344, %s345
    %p357 = scmp.eq.s32.totalorder %s31, 1
    %p358 = por %p356, %p357
    %p360 = scmp.ne.s32.totalorder %s345, %s359
    %p361 = scmp.eq.s32.totalorder %s31, 0
    %p362 = por %p360, %p361
    %s364 = sadd.s32 %s363, 1
    %p367 = scmp.eq.s32.totalorder %s25, 1
    %p368 = scmp.ne.s32.totalorder %s363, %s365
    %p369 = scmp.eq.s32.totalorder %s25, 0
    %p370 = por %p368, %p369
    %p371 = scmp.ne.s32.totalorder %s363, %s365
    %p372 = scmp.eq.s32.totalorder %s30, 1
    %p373 = por %p371, %p372
    %p374 = scmp.ne.s32.totalorder %s365, %s366
    %p375 = scmp.eq.s32.totalorder %s30, 0
    %p376 = por %p374, %p375
    %p377 = scmp.ne.s32.totalorder %s365, %s366
    %p378 = scmp.eq.s32.totalorder %s31, 1
    %p379 = por %p377, %p378
    %p381 = scmp.ne.s32.totalorder %s366, %s380
    %p382 = scmp.eq.s32.totalorder %s31, 0
    %p383 = por %p381, %p382
    %s385 = sadd.s32 %s384, 1
    %p388 = scmp.eq.s32.totalorder %s25, 1
    %p389 = scmp.ne.s32.totalorder %s384, %s386
    %p390 = scmp.eq.s32.totalorder %s25, 0
    %p391 = por %p389, %p390
    %p392 = scmp.ne.s32.totalorder %s384, %s386
    %p393 = scmp.eq.s32.totalorder %s30, 1
    %p394 = por %p392, %p393
    %p395 = scmp.ne.s32.totalorder %s386, %s387
    %p396 = scmp.eq.s32.totalorder %s30, 0
    %p397 = por %p395, %p396
    %p398 = scmp.ne.s32.totalorder %s386, %s387
    %p399 = scmp.eq.s32.totalorder %s31, 1
    %p400 = por %p398, %p399
    %p402 = scmp.ne.s32.totalorder %s387, %s401
    %p403 = scmp.eq.s32.totalorder %s31, 0
    %p404 = por %p402, %p403
    %s405 = ssub.s32 %s25, %s32
    %p406 = scmp.eq.s32.totalorder %s405, 0
    %s408 = sadd.s32 %s407, 1
    %s409 = scalar_select %p406, %s407, %s408
    %p412 = pneg %p406
    %p413 = scmp.eq.s32.totalorder %s25, 1
    %p414 = por %p412, %p413
    %p415 = scmp.ne.s32.totalorder %s407, %s410
    %p416 = scmp.eq.s32.totalorder %s25, 0
    %p417 = por %p415, %p416
    %p418 = scmp.ne.s32.totalorder %s407, %s410
    %p419 = scmp.eq.s32.totalorder %s30, 1
    %p420 = por %p418, %p419
    %p421 = scmp.ne.s32.totalorder %s410, %s411
    %p422 = scmp.eq.s32.totalorder %s30, 0
    %p423 = por %p421, %p422
    %p424 = scmp.ne.s32.totalorder %s410, %s411
    %p425 = scmp.eq.s32.totalorder %s31, 1
    %p426 = por %p424, %p425
    %p428 = scmp.ne.s32.totalorder %s411, %s427
    %p429 = scmp.eq.s32.totalorder %s31, 0
    %p430 = por %p428, %p429
    %s431 = ssub.s32 %s25, %s32
    %p432 = scmp.eq.s32.totalorder %s431, 0
    %s434 = sadd.s32 %s433, 1
    %s435 = scalar_select %p432, %s433, %s434
    %p438 = pneg %p432
    %p439 = scmp.eq.s32.totalorder %s25, 1
    %p440 = por %p438, %p439
    %p441 = scmp.ne.s32.totalorder %s433, %s436
    %p442 = scmp.eq.s32.totalorder %s25, 0
    %p443 = por %p441, %p442
    %p444 = scmp.ne.s32.totalorder %s433, %s436
    %p445 = scmp.eq.s32.totalorder %s30, 1
    %p446 = por %p444, %p445
    %p447 = scmp.ne.s32.totalorder %s436, %s437
    %p448 = scmp.eq.s32.totalorder %s30, 0
    %p449 = por %p447, %p448
    %p450 = scmp.ne.s32.totalorder %s436, %s437
    %p451 = scmp.eq.s32.totalorder %s31, 1
    %p452 = por %p450, %p451
    %p454 = scmp.ne.s32.totalorder %s437, %s453
    %p455 = scmp.eq.s32.totalorder %s31, 0
    %p456 = por %p454, %p455
    %p457 = scmp.le.s32.totalorder 1, %s25
    %p458 = scmp.lt.s32.totalorder %s25, 3
    %p459 = pnand %p457, %p458
    %p460 = pneg %p459
    // Predicated region
    $region9: #{decoder_forward.3} parent=5 // pred_check
      _
    $region10: #{decoder_forward.3} parent=5 // pred_check_branch
      %462 = sbr.rel (%p459) target = $region12
    $region11: #{decoder_forward.3} parent=5 // pred_region
      %s463 = ssub.s32 %s25, 1
      // Predicated region
      $region13: #{decoder_forward.3} parent=11 // pred_check
        %p464 = pneg %p124
      $region14: #{decoder_forward.3} parent=11 // pred_check_branch
        %466 = sbr.rel (%p464) target = $region16
      $region15: #{decoder_forward.3} parent=11 // pred_region
        _
      $region16: #{decoder_forward.3} parent=11 // pred_fallthru
        _
      // Predicated region
      $region17: #{decoder_forward.3} parent=11 // pred_check
        %p467 = pneg %p145
      $region18: #{decoder_forward.3} parent=11 // pred_check_branch
        %469 = sbr.rel (%p467) target = $region20
      $region19: #{decoder_forward.3} parent=11 // pred_region
        _
      $region20: #{decoder_forward.3} parent=11 // pred_fallthru
        _
      // Predicated region
      $region21: #{decoder_forward.3} parent=11 // pred_check
        %p470 = pneg %p166
      $region22: #{decoder_forward.3} parent=11 // pred_check_branch
        %472 = sbr.rel (%p470) target = $region24
      $region23: #{decoder_forward.3} parent=11 // pred_region
        _
      $region24: #{decoder_forward.3} parent=11 // pred_fallthru
        _
      // Predicated region
      $region25: #{decoder_forward.3} parent=11 // pred_check
        %p473 = pneg %p187
      $region26: #{decoder_forward.3} parent=11 // pred_check_branch
        %475 = sbr.rel (%p473) target = $region28
      $region27: #{decoder_forward.3} parent=11 // pred_region
        _
      $region28: #{decoder_forward.3} parent=11 // pred_fallthru
        _
      // Predicated region
      $region29: #{decoder_forward.3} parent=11 // pred_check
        %p476 = pneg %p208
      $region30: #{decoder_forward.3} parent=11 // pred_check_branch
        %478 = sbr.rel (%p476) target = $region32
      $region31: #{decoder_forward.3} parent=11 // pred_region
        _
      $region32: #{decoder_forward.3} parent=11 // pred_fallthru
        _
      // Predicated region
      $region33: #{decoder_forward.3} parent=11 // pred_check
        %p479 = pneg %p229
      $region34: #{decoder_forward.3} parent=11 // pred_check_branch
        %481 = sbr.rel (%p479) target = $region36
      $region35: #{decoder_forward.3} parent=11 // pred_region
        _
      $region36: #{decoder_forward.3} parent=11 // pred_fallthru
        _
      // Predicated region
      $region37: #{decoder_forward.3} parent=11 // pred_check
        %p482 = pneg %p250
      $region38: #{decoder_forward.3} parent=11 // pred_check_branch
        %484 = sbr.rel (%p482) target = $region40
      $region39: #{decoder_forward.3} parent=11 // pred_region
        _
      $region40: #{decoder_forward.3} parent=11 // pred_fallthru
        _
      // Predicated region
      $region41: #{decoder_forward.3} parent=11 // pred_check
        %p485 = pneg %p271
      $region42: #{decoder_forward.3} parent=11 // pred_check_branch
        %487 = sbr.rel (%p485) target = $region44
      $region43: #{decoder_forward.3} parent=11 // pred_region
        _
      $region44: #{decoder_forward.3} parent=11 // pred_fallthru
        _
      // Predicated region
      $region45: #{decoder_forward.3} parent=11 // pred_check
        %p488 = pneg %p292
      $region46: #{decoder_forward.3} parent=11 // pred_check_branch
        %490 = sbr.rel (%p488) target = $region48
      $region47: #{decoder_forward.3} parent=11 // pred_region
        _
      $region48: #{decoder_forward.3} parent=11 // pred_fallthru
        _
      // Predicated region
      $region49: #{decoder_forward.3} parent=11 // pred_check
        %p491 = pneg %p313
      $region50: #{decoder_forward.3} parent=11 // pred_check_branch
        %493 = sbr.rel (%p491) target = $region52
      $region51: #{decoder_forward.3} parent=11 // pred_region
        _
      $region52: #{decoder_forward.3} parent=11 // pred_fallthru
        _
      // Predicated region
      $region53: #{decoder_forward.3} parent=11 // pred_check
        %p494 = pneg %p334
      $region54: #{decoder_forward.3} parent=11 // pred_check_branch
        %496 = sbr.rel (%p494) target = $region56
      $region55: #{decoder_forward.3} parent=11 // pred_region
        _
      $region56: #{decoder_forward.3} parent=11 // pred_fallthru
        _
      // Predicated region
      $region57: #{decoder_forward.3} parent=11 // pred_check
        %p497 = pneg %p355
      $region58: #{decoder_forward.3} parent=11 // pred_check_branch
        %499 = sbr.rel (%p497) target = $region60
      $region59: #{decoder_forward.3} parent=11 // pred_region
        _
      $region60: #{decoder_forward.3} parent=11 // pred_fallthru
        _
      // Predicated region
      $region61: #{decoder_forward.3} parent=11 // pred_check
        %p500 = pneg %p376
      $region62: #{decoder_forward.3} parent=11 // pred_check_branch
        %502 = sbr.rel (%p500) target = $region64
      $region63: #{decoder_forward.3} parent=11 // pred_region
        _
      $region64: #{decoder_forward.3} parent=11 // pred_fallthru
        _
      // Predicated region
      $region65: #{decoder_forward.3} parent=11 // pred_check
        %p503 = pneg %p397
      $region66: #{decoder_forward.3} parent=11 // pred_check_branch
        %505 = sbr.rel (%p503) target = $region68
      $region67: #{decoder_forward.3} parent=11 // pred_region
        _
      $region68: #{decoder_forward.3} parent=11 // pred_fallthru
        _
    $region12: #{decoder_forward.3} parent=5 // pred_fallthru
      _
    %p506 = scmp.lt.s32.totalorder %s25, 2
    // Predicated region
    $region69: #{decoder_forward.3} parent=5 // pred_check
      %p507 = pneg %p506
    $region70: #{decoder_forward.3} parent=5 // pred_check_branch
      %509 = sbr.rel (%p507) target = $region72
    $region71: #{decoder_forward.3} parent=5 // pred_region
      // Predicated region
      $region73: #{decoder_forward.3} parent=71 // pred_check
        %p510 = pneg %p45
      $region74: #{decoder_forward.3} parent=71 // pred_check_branch
        %512 = sbr.rel (%p510) target = $region76
      $region75: #{decoder_forward.3} parent=71 // pred_region
        %s513 = smul.u32 4, %s25
        %p514 = scmp.lt.s32.totalorder %s513, 7
        %s515 = scalar_select %p514, %s513, 7
        %s516 = smul.addr %s515, 8
        %s517 = scalar_lea.vmem %s0, %s516
        %s518 = smul.u32 4, %s25
      $region76: #{decoder_forward.3} parent=71 // pred_fallthru
        _
      // Predicated region
      $region77: #{decoder_forward.3} parent=71 // pred_check
        %p519 = pneg %p71
      $region78: #{decoder_forward.3} parent=71 // pred_check_branch
        %521 = sbr.rel (%p519) target = $region80
      $region79: #{decoder_forward.3} parent=71 // pred_region
        %s522 = smul.u32 4, %s25
        %p523 = scmp.lt.s32.totalorder %s522, 7
        %s524 = scalar_select %p523, %s522, 7
        %s525 = smul.addr %s524, 8
        %s526 = scalar_lea.vmem %s1, %s525
        %s527 = smul.u32 4, %s25
      $region80: #{decoder_forward.3} parent=71 // pred_fallthru
        _
      // Predicated region
      $region81: #{decoder_forward.3} parent=71 // pred_check
        %p528 = pneg %p97
      $region82: #{decoder_forward.3} parent=71 // pred_check_branch
        %530 = sbr.rel (%p528) target = $region84
      $region83: #{decoder_forward.3} parent=71 // pred_region
        %s531 = smul.u32 4, %s25
        %p532 = scmp.lt.s32.totalorder %s531, 7
        %s533 = scalar_select %p532, %s531, 7
        %s534 = smul.addr %s533, 8
        %s535 = scalar_lea.vmem %s2, %s534
        %s536 = smul.u32 4, %s25
      $region84: #{decoder_forward.3} parent=71 // pred_fallthru
        _
    $region72: #{decoder_forward.3} parent=5 // pred_fallthru
      _
    %p537 = scmp.le.s32.totalorder 1, %s25
    %p538 = scmp.lt.s32.totalorder %s25, 3
    %p539 = pnand %p537, %p538
    %p540 = pneg %p539
    // Predicated region
    $region85: #{decoder_forward.3} parent=5 // pred_check
      _
    $region86: #{decoder_forward.3} parent=5 // pred_check_branch
      %542 = sbr.rel (%p539) target = $region88
    $region87: #{decoder_forward.3} parent=5 // pred_region
      %s543 = ssub.s32 %s25, 1
      %s544 = smul.u32 4, %s30
      %p545 = scmp.lt.s32.totalorder %s544, 7
      %s546 = scalar_select %p545, %s544, 7
      %s547 = smul.addr %s546, 8
      %s548 = scalar_lea.vmem %s0, %s547
      %p549 = pneg %p51
      %p550 = pneg %p48
      %s551 = smul.u32 4, %s30
      %p552 = scmp.lt.s32.totalorder %s551, 7
      %s553 = scalar_select %p552, %s551, 7
      %s554 = smul.addr %s553, 8
      %s555 = scalar_lea.vmem %s1, %s554
      %p556 = pneg %p77
      %p557 = pneg %p74
      %s558 = smul.u32 4, %s30
      %p559 = scmp.lt.s32.totalorder %s558, 7
      %s560 = scalar_select %p559, %s558, 7
      %s561 = smul.addr %s560, 8
      %s562 = scalar_lea.vmem %s2, %s561
      %p563 = pneg %p103
      %p564 = pneg %p100
      %p565 = pneg %p124
      %p566 = pneg %p121
      %p567 = pneg %p145
      %p568 = pneg %p142
      %p569 = pneg %p166
      %p570 = pneg %p163
      %p571 = pneg %p187
      %p572 = pneg %p184
      %p573 = pneg %p208
      %p574 = pneg %p205
      %p575 = pneg %p229
      %p576 = pneg %p226
      %p577 = pneg %p250
      %p578 = pneg %p247
      %p579 = pneg %p271
      %p580 = pneg %p268
      %p581 = pneg %p292
      %p582 = pneg %p289
      %p583 = pneg %p313
      %p584 = pneg %p310
      %p585 = pneg %p334
      %p586 = pneg %p331
      %p587 = pneg %p355
      %p588 = pneg %p352
      %p589 = pneg %p376
      %p590 = pneg %p373
      %p591 = pneg %p397
      %p592 = pneg %p394
      %p593 = pneg %p423
      %p594 = pneg %p420
      %s595 = smul.u32 4, %s30
      %p596 = scmp.lt.s32.totalorder %s595, 7
      %s597 = scalar_select %p596, %s595, 7
      %s598 = smul.addr %s597, 8
      %s599 = scalar_lea.vmem %s17, %s598
      %p600 = pneg %p449
      %p601 = pneg %p446
      %s602 = smul.u32 4, %s30
      %p603 = scmp.lt.s32.totalorder %s602, 7
      %s604 = scalar_select %p603, %s602, 7
      %s605 = smul.addr %s604, 8
      %s606 = scalar_lea.vmem %s18, %s605
      %s607 = smul.u32 4, %s30
      %p608 = scmp.lt.s32.totalorder %s607, 7
      %s609 = scalar_select %p608, %s607, 7
      %s610 = smul.addr %s609, 8
      %s611 = scalar_lea.vmem %s0, %s610
      %s612 = smul.u32 4, %s30
      %s613 = smul.u32 4, %s30
      %p614 = scmp.lt.s32.totalorder %s613, 7
      %s615 = scalar_select %p614, %s613, 7
      %s616 = smul.addr %s615, 8
      %s617 = scalar_lea.vmem %s1, %s616
      %s618 = smul.u32 4, %s30
      %s619 = smul.u32 4, %s30
      %p620 = scmp.lt.s32.totalorder %s619, 7
      %s621 = scalar_select %p620, %s619, 7
      %s622 = smul.addr %s621, 8
      %s623 = scalar_lea.vmem %s2, %s622
      %s624 = smul.u32 4, %s30
      %s625 = smul.u32 4, %s30
      %p626 = scmp.lt.s32.totalorder %s625, 7
      %s627 = scalar_select %p626, %s625, 7
      %s628 = smul.addr %s627, 8
      %s629 = scalar_lea.vmem %s17, %s628
      %s630 = smul.u32 4, %s30
      %s631 = smul.u32 4, %s30
      %p632 = scmp.lt.s32.totalorder %s631, 7
      %s633 = scalar_select %p632, %s631, 7
      %s634 = smul.addr %s633, 8
      %s635 = scalar_lea.vmem %s18, %s634
      %s636 = smul.u32 4, %s30
      %v638 = vld [vmem:[%s611] sm:$0xff]
      %v639 = vld [vmem:[%s611 + $0x8] sm:$0xff]
      %v640 = vld [vmem:[%s611 + $0x10] sm:$0xff]
      %v641 = vld [vmem:[%s611 + $0x18] sm:$0xff]
      %v642 = vld [vmem:[%s3] sm:$0xf]
      %v643 = vld [vmem:[%s3 + $0x4] sm:$0xf]
      %v644 = vld [vmem:[%s3 + $0x8] sm:$0xf]
      %v645 = vld [vmem:[%s3 + $0xc] sm:$0xf]
      %v646 = vld [vmem:[%s3 + $0x10] sm:$0xf]
      %v647 = vld [vmem:[%s3 + $0x14] sm:$0xf]
      %v648 = vld [vmem:[%s3 + $0x18] sm:$0xf]
      %v649 = vld [vmem:[%s3 + $0x1c] sm:$0xf]
      %v650 = vld [vmem:[%s3 + $0x20] sm:$0xf]
      %v651 = vld [vmem:[%s3 + $0x24] sm:$0xf]
      %v652 = vld [vmem:[%s3 + $0x28] sm:$0xf]
      %v653 = vld [vmem:[%s3 + $0x2c] sm:$0xf]
      %v654 = vld [vmem:[%s3 + $0x30] sm:$0xf]
      %v655 = vld [vmem:[%s3 + $0x34] sm:$0xf]
      %v656 = vld [vmem:[%s3 + $0x38] sm:$0xf]
      %v657 = vld [vmem:[%s3 + $0x3c] sm:$0xf]
      %v658 = vld [vmem:[%s4] sm:$0x1]
      %v659 = vld [vmem:[%s5] sm:$0xf]
      %v660 = vld [vmem:[%s5 + $0x4] sm:$0xf]
      %v661 = vld [vmem:[%s5 + $0x8] sm:$0xf]
      %v662 = vld [vmem:[%s5 + $0xc] sm:$0xf]
      %v663 = vld [vmem:[%s5 + $0x10] sm:$0xf]
      %v664 = vld [vmem:[%s5 + $0x14] sm:$0xf]
      %v665 = vld [vmem:[%s5 + $0x18] sm:$0xf]
      %v666 = vld [vmem:[%s5 + $0x1c] sm:$0xf]
      %v667 = vld [vmem:[%s5 + $0x20] sm:$0xf]
      %v668 = vld [vmem:[%s5 + $0x24] sm:$0xf]
      %v669 = vld [vmem:[%s5 + $0x28] sm:$0xf]
      %v670 = vld [vmem:[%s5 + $0x2c] sm:$0xf]
      %v671 = vld [vmem:[%s5 + $0x30] sm:$0xf]
      %v672 = vld [vmem:[%s5 + $0x34] sm:$0xf]
      %v673 = vld [vmem:[%s5 + $0x38] sm:$0xf]
      %v674 = vld [vmem:[%s5 + $0x3c] sm:$0xf]
      %v675 = vld [vmem:[%s6] sm:$0x1]
      %v676 = vld [vmem:[%s7] sm:$0x1]
      %v677 = vld [vmem:[%s8] sm:$0x1]
      %v678 = vpack.c.bf16 %v639, %v638
      %v679 = vpack.c.bf16 %v641, %v640
      %v681 = vlaneseq
      %v682 = vshrl.u32 %v681, 7
      %v683 = vsub.s32 0, %v682
      %v684 = vrot.slane %v658, %v683
      %v702 = vunpack.c.l.b16 %v642
      %v703 = vunpack.c.l.b16 %v643
      %v704 = vunpack.c.l.b16 %v644
      %v705 = vunpack.c.l.b16 %v645
      %v706 = vunpack.c.l.b16 %v646
      %v707 = vunpack.c.l.b16 %v647
      %v708 = vunpack.c.l.b16 %v648
      %v709 = vunpack.c.l.b16 %v649
      %v710 = vunpack.c.l.b16 %v650
      %v711 = vunpack.c.l.b16 %v651
      %v712 = vunpack.c.l.b16 %v652
      %v713 = vunpack.c.l.b16 %v653
      %v714 = vunpack.c.l.b16 %v654
      %v715 = vunpack.c.l.b16 %v655
      %v716 = vunpack.c.l.b16 %v656
      %v717 = vunpack.c.l.b16 %v657
      %v718 = vpack.c.b16 %v703, %v702
      %v719 = vpack.c.b16 %v705, %v704
      %v720 = vpack.c.b16 %v707, %v706
      %v721 = vpack.c.b16 %v709, %v708
      %v722 = vpack.c.b16 %v711, %v710
      %v723 = vpack.c.b16 %v713, %v712
      %v724 = vpack.c.b16 %v715, %v714
      %v725 = vpack.c.b16 %v717, %v716
      %734 = vmatprep.subr.bf16.mxu0 0
      %735 = vmatpush1.bf16.msra.mxu0 %v725
      %736 = vmatprep.subr.bf16.mxu0 0
      %737 = vmatpush1.bf16.msra.mxu0 %v724
      %738 = vmatprep.subr.bf16.mxu0 0
      %739 = vmatpush1.bf16.msra.mxu0 %v723
      %740 = vmatprep.subr.bf16.mxu0 0
      %741 = vmatpush1.bf16.msra.mxu0 %v722
      %742 = vmatprep.subr.bf16.mxu0 0
      %743 = vmatpush1.bf16.msra.mxu0 %v721
      %744 = vmatprep.subr.bf16.mxu0 0
      %745 = vmatpush1.bf16.msra.mxu0 %v720
      %746 = vmatprep.subr.bf16.mxu0 0
      %747 = vmatpush1.bf16.msra.mxu0 %v719
      %748 = vmatprep.subr.bf16.mxu0 0
      %749 = vmatpush1.bf16.msra.mxu0 %v718
      %750 = vmatprep.subr.bf16.mxu0 0
      %751 = vmatpush2.bf16.msra.mxu0 0
      %752 = vmatprep.subr.bf16.mxu0 0
      %753 = vmatpush2.bf16.msra.mxu0 0
      %754 = vmatprep.subr.bf16.mxu0 0
      %755 = vmatpush2.bf16.msra.mxu0 0
      %756 = vmatprep.subr.bf16.mxu0 0
      %757 = vmatpush2.bf16.msra.mxu0 0
      %758 = vmatprep.subr.bf16.mxu0 0
      %759 = vmatpush2.bf16.msra.mxu0 0
      %760 = vmatprep.subr.bf16.mxu0 0
      %761 = vmatpush2.bf16.msra.mxu0 0
      %762 = vmatprep.subr.bf16.mxu0 0
      %763 = vmatpush2.bf16.msra.mxu0 0
      %764 = vmatprep.subr.bf16.mxu0 0
      %765 = vmatpush2.bf16.msra.mxu0 0
      %766 = vmatprep.mubr.bf16.mxu0 0
      %767 = vmatmul.mubr.bf16.gmra.mxu0 %v678
      %v768 = vpop.f32.mrf.mxu0
      %v769 = vadd.f32 %v684, %v768
      %v770 = vpop.f32.mrf.mxu0
      %v771 = vpop.f32.mrf.mxu0
      %v772 = vadd.f32 %v684, %v771
      %v773 = vpop.f32.mrf.mxu0
      %774 = vmatprep.mubr.bf16.mxu0 0
      %775 = vmatmul.mubr.bf16.gmra.mxu0 %v679
      %v776 = vpop.f32.mrf.mxu0
      %v777 = vadd.f32 %v684, %v776
      %v778 = vpop.f32.mrf.mxu0
      %v779 = vpop.f32.mrf.mxu0
      %v780 = vadd.f32 %v684, %v779
      %v781 = vpop.f32.mrf.mxu0
      %782 = vdwg.mxu0
      %v783 = vxor.u32 %v769, 2147483648
      %v784 = vxor.u32 %v772, 2147483648
      %v785 = vxor.u32 %v777, 2147483648
      %v786 = vxor.u32 %v780, 2147483648
      %v787 = vmul.f32 %v783, 1.442695
      %v788 = vpow.pop %v787
      %v789 = vmul.f32 %v784, 1.442695
      %v790 = vpow.pop %v789
      %v791 = vmul.f32 %v785, 1.442695
      %v792 = vpow.pop %v791
      %v793 = vmul.f32 %v786, 1.442695
      %v794 = vpow.pop %v793
      %v795 = vadd.f32 %v788, 1.0
      %v796 = vadd.f32 %v790, 1.0
      %v797 = vadd.f32 %v792, 1.0
      %v798 = vadd.f32 %v794, 1.0
      %v799 = vrcp.pop %v795
      %v800 = vmul.f32 1.0, %v799
      %v801 = vrcp.pop %v796
      %v802 = vmul.f32 1.0, %v801
      %v803 = vrcp.pop %v797
      %v804 = vmul.f32 1.0, %v803
      %v805 = vrcp.pop %v798
      %v806 = vmul.f32 1.0, %v805
      %v807 = vmul.f32 %v769, %v800
      %v808 = vmul.f32 %v772, %v802
      %v809 = vmul.f32 %v777, %v804
      %v810 = vmul.f32 %v780, %v806
      %v811 = vpack.c.bf16 %v808, %v807
      %v812 = vpack.c.bf16 %v810, %v809
      %v814 = vlaneseq
      %v815 = vshrl.u32 %v814, 7
      %v816 = vsub.s32 0, %v815
      %v817 = vrot.slane %v675, %v816
      %v835 = vunpack.c.l.b16 %v659
      %v836 = vunpack.c.l.b16 %v660
      %v837 = vunpack.c.l.b16 %v661
      %v838 = vunpack.c.l.b16 %v662
      %v839 = vunpack.c.l.b16 %v663
      %v840 = vunpack.c.l.b16 %v664
      %v841 = vunpack.c.l.b16 %v665
      %v842 = vunpack.c.l.b16 %v666
      %v843 = vunpack.c.l.b16 %v667
      %v844 = vunpack.c.l.b16 %v668
      %v845 = vunpack.c.l.b16 %v669
      %v846 = vunpack.c.l.b16 %v670
      %v847 = vunpack.c.l.b16 %v671
      %v848 = vunpack.c.l.b16 %v672
      %v849 = vunpack.c.l.b16 %v673
      %v850 = vunpack.c.l.b16 %v674
      %v851 = vpack.c.b16 %v836, %v835
      %v852 = vpack.c.b16 %v838, %v837
      %v853 = vpack.c.b16 %v840, %v839
      %v854 = vpack.c.b16 %v842, %v841
      %v855 = vpack.c.b16 %v844, %v843
      %v856 = vpack.c.b16 %v846, %v845
      %v857 = vpack.c.b16 %v848, %v847
      %v858 = vpack.c.b16 %v850, %v849
      %867 = vmatprep.subr.bf16.mxu0 0
      %868 = vmatpush1.bf16.msra.mxu0 %v858
      %869 = vmatprep.subr.bf16.mxu0 0
      %870 = vmatpush1.bf16.msra.mxu0 %v857
      %871 = vmatprep.subr.bf16.mxu0 0
      %872 = vmatpush1.bf16.msra.mxu0 %v856
      %873 = vmatprep.subr.bf16.mxu0 0
      %874 = vmatpush1.bf16.msra.mxu0 %v855
      %875 = vmatprep.subr.bf16.mxu0 0
      %876 = vmatpush1.bf16.msra.mxu0 %v854
      %877 = vmatprep.subr.bf16.mxu0 0
      %878 = vmatpush1.bf16.msra.mxu0 %v853
      %879 = vmatprep.subr.bf16.mxu0 0
      %880 = vmatpush1.bf16.msra.mxu0 %v852
      %881 = vmatprep.subr.bf16.mxu0 0
      %882 = vmatpush1.bf16.msra.mxu0 %v851
      %883 = vmatprep.subr.bf16.mxu0 0
      %884 = vmatpush2.bf16.msra.mxu0 0
      %885 = vmatprep.subr.bf16.mxu0 0
      %886 = vmatpush2.bf16.msra.mxu0 0
      %887 = vmatprep.subr.bf16.mxu0 0
      %888 = vmatpush2.bf16.msra.mxu0 0
      %889 = vmatprep.subr.bf16.mxu0 0
      %890 = vmatpush2.bf16.msra.mxu0 0
      %891 = vmatprep.subr.bf16.mxu0 0
      %892 = vmatpush2.bf16.msra.mxu0 0
      %893 = vmatprep.subr.bf16.mxu0 0
      %894 = vmatpush2.bf16.msra.mxu0 0
      %895 = vmatprep.subr.bf16.mxu0 0
      %896 = vmatpush2.bf16.msra.mxu0 0
      %897 = vmatprep.subr.bf16.mxu0 0
      %898 = vmatpush2.bf16.msra.mxu0 0
      %899 = vmatprep.mubr.bf16.mxu0 0
      %900 = vmatmul.mubr.bf16.gmra.mxu0 %v811
      %v901 = vpop.f32.mrf.mxu0
      %v902 = vadd.f32 %v817, %v901
      %v903 = vpop.f32.mrf.mxu0
      %v904 = vpop.f32.mrf.mxu0
      %v905 = vadd.f32 %v817, %v904
      %v906 = vpop.f32.mrf.mxu0
      %907 = vmatprep.mubr.bf16.mxu0 0
      %908 = vmatmul.mubr.bf16.gmra.mxu0 %v812
      %v909 = vpop.f32.mrf.mxu0
      %v910 = vadd.f32 %v817, %v909
      %v911 = vpop.f32.mrf.mxu0
      %v912 = vpop.f32.mrf.mxu0
      %v913 = vadd.f32 %v817, %v912
      %v914 = vpop.f32.mrf.mxu0
      %915 = vdwg.mxu0
      %916 = vadd.xlane.f32.xlu0 %v902
      %v917 = vpop.xlane.xlu0 %916
      %918 = vadd.xlane.f32.xlu0 %v905
      %v919 = vpop.xlane.xlu0 %918
      %920 = vadd.xlane.f32.xlu0 %v910
      %v921 = vpop.xlane.xlu0 %920
      %922 = vadd.xlane.f32.xlu0 %v913
      %v923 = vpop.xlane.xlu0 %922
      %v924 = vmul.f32 %v917, 0.03125
      %v925 = vmul.f32 %v919, 0.03125
      %v926 = vmul.f32 %v921, 0.03125
      %v927 = vmul.f32 %v923, 0.03125
      %v928 = vsub.f32 %v902, %v924
      %v929 = vsub.f32 %v905, %v925
      %v930 = vsub.f32 %v910, %v926
      %v931 = vsub.f32 %v913, %v927
      %v932 = vlaneseq
      %v933 = vand.u32 %v932, 127
      %vm934 = vcmp.lt.s32.totalorder %v933, 32
      %v935 = vsel %vm934, %v928, 0.0
      %v936 = vsel %vm934, %v929, 0.0
      %v937 = vsel %vm934, %v930, 0.0
      %v938 = vsel %vm934, %v931, 0.0
      %v939 = vmul.f32 %v935, %v935
      %v940 = vmul.f32 %v936, %v936
      %v941 = vmul.f32 %v937, %v937
      %v942 = vmul.f32 %v938, %v938
      %943 = vadd.xlane.f32.xlu0 %v939
      %v944 = vpop.xlane.xlu0 %943
      %945 = vadd.xlane.f32.xlu0 %v940
      %v946 = vpop.xlane.xlu0 %945
      %947 = vadd.xlane.f32.xlu0 %v941
      %v948 = vpop.xlane.xlu0 %947
      %949 = vadd.xlane.f32.xlu0 %v942
      %v950 = vpop.xlane.xlu0 %949
      %v951 = vmul.f32 %v944, 0.03125
      %v952 = vmul.f32 %v946, 0.03125
      %v953 = vmul.f32 %v948, 0.03125
      %v954 = vmul.f32 %v950, 0.03125
      %v955 = vadd.f32 %v951, 1e-05
      %v956 = vadd.f32 %v952, 1e-05
      %v957 = vadd.f32 %v953, 1e-05
      %v958 = vadd.f32 %v954, 1e-05
      %v959 = vrsqrt.pop %v955
      %v960 = vrsqrt.pop %v956
      %v961 = vrsqrt.pop %v957
      %v962 = vrsqrt.pop %v958
      %v963 = vmul.f32 %v928, %v959
      %v964 = vmul.f32 %v929, %v960
      %v965 = vmul.f32 %v930, %v961
      %v966 = vmul.f32 %v931, %v962
      %v968 = vlaneseq
      %v969 = vshrl.u32 %v968, 7
      %v970 = vsub.s32 0, %v969
      %v971 = vrot.slane %v676, %v970
      %v973 = vmul.f32 %v963, %v971
      %v974 = vmul.f32 %v964, %v971
      %v975 = vmul.f32 %v965, %v971
      %v976 = vmul.f32 %v966, %v971
      %v978 = vlaneseq
      %v979 = vshrl.u32 %v978, 7
      %v980 = vsub.s32 0, %v979
      %v981 = vrot.slane %v677, %v980
      %v983 = vadd.f32 %v973, %v981
      %v984 = vadd.f32 %v974, %v981
      %v985 = vadd.f32 %v975, %v981
      %v986 = vadd.f32 %v976, %v981
      %987 = vst [vmem:[%s629] sm:$0xff] %v983
      %988 = vst [vmem:[%s629 + $0x8] sm:$0xff] %v984
      %989 = vst [vmem:[%s629 + $0x10] sm:$0xff] %v985
      %990 = vst [vmem:[%s629 + $0x18] sm:$0xff] %v986
      %v991 = vld [vmem:[%s617] sm:$0xff]
      %v992 = vld [vmem:[%s617 + $0x8] sm:$0xff]
      %v993 = vld [vmem:[%s617 + $0x10] sm:$0xff]
      %v994 = vld [vmem:[%s617 + $0x18] sm:$0xff]
      %v995 = vld [vmem:[%s623] sm:$0xff]
      %v996 = vld [vmem:[%s623 + $0x8] sm:$0xff]
      %v997 = vld [vmem:[%s623 + $0x10] sm:$0xff]
      %v998 = vld [vmem:[%s623 + $0x18] sm:$0xff]
      %v999 = vld [vmem:[%s9] sm:$0xf]
      %v1000 = vld [vmem:[%s9 + $0x4] sm:$0xf]
      %v1001 = vld [vmem:[%s9 + $0x8] sm:$0xf]
      %v1002 = vld [vmem:[%s9 + $0xc] sm:$0xf]
      %v1003 = vld [vmem:[%s9 + $0x10] sm:$0xf]
      %v1004 = vld [vmem:[%s9 + $0x14] sm:$0xf]
      %v1005 = vld [vmem:[%s9 + $0x18] sm:$0xf]
      %v1006 = vld [vmem:[%s9 + $0x1c] sm:$0xf]
      %v1007 = vld [vmem:[%s9 + $0x20] sm:$0xf]
      %v1008 = vld [vmem:[%s9 + $0x24] sm:$0xf]
      %v1009 = vld [vmem:[%s9 + $0x28] sm:$0xf]
      %v1010 = vld [vmem:[%s9 + $0x2c] sm:$0xf]
      %v1011 = vld [vmem:[%s9 + $0x30] sm:$0xf]
      %v1012 = vld [vmem:[%s9 + $0x34] sm:$0xf]
      %v1013 = vld [vmem:[%s9 + $0x38] sm:$0xf]
      %v1014 = vld [vmem:[%s9 + $0x3c] sm:$0xf]
      %v1015 = vld [vmem:[%s10] sm:$0xf]
      %v1016 = vld [vmem:[%s10 + $0x4] sm:$0xf]
      %v1017 = vld [vmem:[%s10 + $0x8] sm:$0xf]
      %v1018 = vld [vmem:[%s10 + $0xc] sm:$0xf]
      %v1019 = vld [vmem:[%s10 + $0x10] sm:$0xf]
      %v1020 = vld [vmem:[%s10 + $0x14] sm:$0xf]
      %v1021 = vld [vmem:[%s10 + $0x18] sm:$0xf]
      %v1022 = vld [vmem:[%s10 + $0x1c] sm:$0xf]
      %v1023 = vld [vmem:[%s10 + $0x20] sm:$0xf]
      %v1024 = vld [vmem:[%s10 + $0x24] sm:$0xf]
      %v1025 = vld [vmem:[%s10 + $0x28] sm:$0xf]
      %v1026 = vld [vmem:[%s10 + $0x2c] sm:$0xf]
      %v1027 = vld [vmem:[%s10 + $0x30] sm:$0xf]
      %v1028 = vld [vmem:[%s10 + $0x34] sm:$0xf]
      %v1029 = vld [vmem:[%s10 + $0x38] sm:$0xf]
      %v1030 = vld [vmem:[%s10 + $0x3c] sm:$0xf]
      %v1031 = vld [vmem:[%s11] sm:$0xf]
      %v1032 = vld [vmem:[%s11 + $0x4] sm:$0xf]
      %v1033 = vld [vmem:[%s11 + $0x8] sm:$0xf]
      %v1034 = vld [vmem:[%s11 + $0xc] sm:$0xf]
      %v1035 = vld [vmem:[%s11 + $0x10] sm:$0xf]
      %v1036 = vld [vmem:[%s11 + $0x14] sm:$0xf]
      %v1037 = vld [vmem:[%s11 + $0x18] sm:$0xf]
      %v1038 = vld [vmem:[%s11 + $0x1c] sm:$0xf]
      %v1039 = vld [vmem:[%s11 + $0x20] sm:$0xf]
      %v1040 = vld [vmem:[%s11 + $0x24] sm:$0xf]
      %v1041 = vld [vmem:[%s11 + $0x28] sm:$0xf]
      %v1042 = vld [vmem:[%s11 + $0x2c] sm:$0xf]
      %v1043 = vld [vmem:[%s11 + $0x30] sm:$0xf]
      %v1044 = vld [vmem:[%s11 + $0x34] sm:$0xf]
      %v1045 = vld [vmem:[%s11 + $0x38] sm:$0xf]
      %v1046 = vld [vmem:[%s11 + $0x3c] sm:$0xf]
      %v1047 = vld [vmem:[%s12] sm:$0x1]
      %v1048 = vld [vmem:[%s13] sm:$0xf]
      %v1049 = vld [vmem:[%s13 + $0x4] sm:$0xf]
      %v1050 = vld [vmem:[%s13 + $0x8] sm:$0xf]
      %v1051 = vld [vmem:[%s13 + $0xc] sm:$0xf]
      %v1052 = vld [vmem:[%s13 + $0x10] sm:$0xf]
      %v1053 = vld [vmem:[%s13 + $0x14] sm:$0xf]
      %v1054 = vld [vmem:[%s13 + $0x18] sm:$0xf]
      %v1055 = vld [vmem:[%s13 + $0x1c] sm:$0xf]
      %v1056 = vld [vmem:[%s13 + $0x20] sm:$0xf]
      %v1057 = vld [vmem:[%s13 + $0x24] sm:$0xf]
      %v1058 = vld [vmem:[%s13 + $0x28] sm:$0xf]
      %v1059 = vld [vmem:[%s13 + $0x2c] sm:$0xf]
      %v1060 = vld [vmem:[%s13 + $0x30] sm:$0xf]
      %v1061 = vld [vmem:[%s13 + $0x34] sm:$0xf]
      %v1062 = vld [vmem:[%s13 + $0x38] sm:$0xf]
      %v1063 = vld [vmem:[%s13 + $0x3c] sm:$0xf]
      %v1064 = vld [vmem:[%s14] sm:$0x1]
      %v1065 = vld [vmem:[%s15] sm:$0x1]
      %v1066 = vld [vmem:[%s16] sm:$0x1]
      %v1067 = vpack.c.bf16 %v992, %v991
      %v1068 = vpack.c.bf16 %v994, %v993
      %v1069 = vpack.c.bf16 %v996, %v995
      %v1070 = vpack.c.bf16 %v998, %v997
      %v1087 = vunpack.c.l.b16 %v1015
      %v1088 = vunpack.c.l.b16 %v1016
      %v1089 = vunpack.c.l.b16 %v1017
      %v1090 = vunpack.c.l.b16 %v1018
      %v1091 = vunpack.c.l.b16 %v1019
      %v1092 = vunpack.c.l.b16 %v1020
      %v1093 = vunpack.c.l.b16 %v1021
      %v1094 = vunpack.c.l.b16 %v1022
      %v1095 = vunpack.c.l.b16 %v1023
      %v1096 = vunpack.c.l.b16 %v1024
      %v1097 = vunpack.c.l.b16 %v1025
      %v1098 = vunpack.c.l.b16 %v1026
      %v1099 = vunpack.c.l.b16 %v1027
      %v1100 = vunpack.c.l.b16 %v1028
      %v1101 = vunpack.c.l.b16 %v1029
      %v1102 = vunpack.c.l.b16 %v1030
      %v1103 = vpack.c.b16 %v1088, %v1087
      %v1104 = vpack.c.b16 %v1090, %v1089
      %v1105 = vpack.c.b16 %v1092, %v1091
      %v1106 = vpack.c.b16 %v1094, %v1093
      %v1107 = vpack.c.b16 %v1096, %v1095
      %v1108 = vpack.c.b16 %v1098, %v1097
      %v1109 = vpack.c.b16 %v1100, %v1099
      %v1110 = vpack.c.b16 %v1102, %v1101
      %1119 = vmatprep.subr.bf16.mxu0 0
      %1120 = vmatpush1.bf16.msra.mxu0 %v1110
      %1121 = vmatprep.subr.bf16.mxu0 0
      %1122 = vmatpush1.bf16.msra.mxu0 %v1109
      %1123 = vmatprep.subr.bf16.mxu0 0
      %1124 = vmatpush1.bf16.msra.mxu0 %v1108
      %1125 = vmatprep.subr.bf16.mxu0 0
      %1126 = vmatpush1.bf16.msra.mxu0 %v1107
      %1127 = vmatprep.subr.bf16.mxu0 0
      %1128 = vmatpush1.bf16.msra.mxu0 %v1106
      %1129 = vmatprep.subr.bf16.mxu0 0
      %1130 = vmatpush1.bf16.msra.mxu0 %v1105
      %1131 = vmatprep.subr.bf16.mxu0 0
      %1132 = vmatpush1.bf16.msra.mxu0 %v1104
      %1133 = vmatprep.subr.bf16.mxu0 0
      %1134 = vmatpush1.bf16.msra.mxu0 %v1103
      %1135 = vmatprep.subr.bf16.mxu0 0
      %1136 = vmatpush2.bf16.msra.mxu0 0
      %1137 = vmatprep.subr.bf16.mxu0 0
      %1138 = vmatpush2.bf16.msra.mxu0 0
      %1139 = vmatprep.subr.bf16.mxu0 0
      %1140 = vmatpush2.bf16.msra.mxu0 0
      %1141 = vmatprep.subr.bf16.mxu0 0
      %1142 = vmatpush2.bf16.msra.mxu0 0
      %1143 = vmatprep.subr.bf16.mxu0 0
      %1144 = vmatpush2.bf16.msra.mxu0 0
      %1145 = vmatprep.subr.bf16.mxu0 0
      %1146 = vmatpush2.bf16.msra.mxu0 0
      %1147 = vmatprep.subr.bf16.mxu0 0
      %1148 = vmatpush2.bf16.msra.mxu0 0
      %1149 = vmatprep.subr.bf16.mxu0 0
      %1150 = vmatpush2.bf16.msra.mxu0 0
      %1151 = vmatprep.mubr.bf16.mxu0 0
      %1152 = vmatmul.mubr.bf16.gmra.mxu0 %v1069
      %v1153 = vpop.f32.mrf.mxu0
      %v1154 = vadd.f32 0.0, %v1153
      %v1155 = vpop.f32.mrf.mxu0
      %v1156 = vpop.f32.mrf.mxu0
      %v1157 = vadd.f32 0.0, %v1156
      %v1158 = vpop.f32.mrf.mxu0
      %1159 = vmatprep.mubr.bf16.mxu0 0
      %1160 = vmatmul.mubr.bf16.gmra.mxu0 %v1070
      %v1161 = vpop.f32.mrf.mxu0
      %v1162 = vadd.f32 0.0, %v1161
      %v1163 = vpop.f32.mrf.mxu0
      %v1164 = vpop.f32.mrf.mxu0
      %v1165 = vadd.f32 0.0, %v1164
      %v1166 = vpop.f32.mrf.mxu0
      %1167 = vdwg.mxu0
      %v1184 = vunpack.c.l.b16 %v999
      %v1185 = vunpack.c.l.b16 %v1000
      %v1186 = vunpack.c.l.b16 %v1001
      %v1187 = vunpack.c.l.b16 %v1002
      %v1188 = vunpack.c.l.b16 %v1003
      %v1189 = vunpack.c.l.b16 %v1004
      %v1190 = vunpack.c.l.b16 %v1005
      %v1191 = vunpack.c.l.b16 %v1006
      %v1192 = vunpack.c.l.b16 %v1007
      %v1193 = vunpack.c.l.b16 %v1008
      %v1194 = vunpack.c.l.b16 %v1009
      %v1195 = vunpack.c.l.b16 %v1010
      %v1196 = vunpack.c.l.b16 %v1011
      %v1197 = vunpack.c.l.b16 %v1012
      %v1198 = vunpack.c.l.b16 %v1013
      %v1199 = vunpack.c.l.b16 %v1014
      %v1200 = vpack.c.b16 %v1185, %v1184
      %v1201 = vpack.c.b16 %v1187, %v1186
      %v1202 = vpack.c.b16 %v1189, %v1188
      %v1203 = vpack.c.b16 %v1191, %v1190
      %v1204 = vpack.c.b16 %v1193, %v1192
      %v1205 = vpack.c.b16 %v1195, %v1194
      %v1206 = vpack.c.b16 %v1197, %v1196
      %v1207 = vpack.c.b16 %v1199, %v1198
      %1216 = vmatprep.subr.bf16.mxu0 0
      %1217 = vmatpush1.bf16.msra.mxu0 %v1207
      %1218 = vmatprep.subr.bf16.mxu0 0
      %1219 = vmatpush1.bf16.msra.mxu0 %v1206
      %1220 = vmatprep.subr.bf16.mxu0 0
      %1221 = vmatpush1.bf16.msra.mxu0 %v1205
      %1222 = vmatprep.subr.bf16.mxu0 0
      %1223 = vmatpush1.bf16.msra.mxu0 %v1204
      %1224 = vmatprep.subr.bf16.mxu0 0
      %1225 = vmatpush1.bf16.msra.mxu0 %v1203
      %1226 = vmatprep.subr.bf16.mxu0 0
      %1227 = vmatpush1.bf16.msra.mxu0 %v1202
      %1228 = vmatprep.subr.bf16.mxu0 0
      %1229 = vmatpush1.bf16.msra.mxu0 %v1201
      %1230 = vmatprep.subr.bf16.mxu0 0
      %1231 = vmatpush1.bf16.msra.mxu0 %v1200
      %1232 = vmatprep.subr.bf16.mxu0 0
      %1233 = vmatpush2.bf16.msra.mxu0 0
      %1234 = vmatprep.subr.bf16.mxu0 0
      %1235 = vmatpush2.bf16.msra.mxu0 0
      %1236 = vmatprep.subr.bf16.mxu0 0
      %1237 = vmatpush2.bf16.msra.mxu0 0
      %1238 = vmatprep.subr.bf16.mxu0 0
      %1239 = vmatpush2.bf16.msra.mxu0 0
      %1240 = vmatprep.subr.bf16.mxu0 0
      %1241 = vmatpush2.bf16.msra.mxu0 0
      %1242 = vmatprep.subr.bf16.mxu0 0
      %1243 = vmatpush2.bf16.msra.mxu0 0
      %1244 = vmatprep.subr.bf16.mxu0 0
      %1245 = vmatpush2.bf16.msra.mxu0 0
      %1246 = vmatprep.subr.bf16.mxu0 0
      %1247 = vmatpush2.bf16.msra.mxu0 0
      %1248 = vmatprep.mubr.bf16.mxu0 0
      %1249 = vmatmul.mubr.bf16.gmra.mxu0 %v1067
      %v1250 = vpop.f32.mrf.mxu0
      %v1251 = vadd.f32 %v1154, %v1250
      %v1252 = vpop.f32.mrf.mxu0
      %v1253 = vpop.f32.mrf.mxu0
      %v1254 = vadd.f32 %v1157, %v1253
      %v1255 = vpop.f32.mrf.mxu0
      %1256 = vmatprep.mubr.bf16.mxu0 0
      %1257 = vmatmul.mubr.bf16.gmra.mxu0 %v1068
      %v1258 = vpop.f32.mrf.mxu0
      %v1259 = vadd.f32 %v1162, %v1258
      %v1260 = vpop.f32.mrf.mxu0
      %v1261 = vpop.f32.mrf.mxu0
      %v1262 = vadd.f32 %v1165, %v1261
      %v1263 = vpop.f32.mrf.mxu0
      %1264 = vdwg.mxu0
      %v1265 = vpack.c.bf16 %v984, %v983
      %v1266 = vpack.c.bf16 %v986, %v985
      %v1283 = vunpack.c.l.b16 %v1031
      %v1284 = vunpack.c.l.b16 %v1032
      %v1285 = vunpack.c.l.b16 %v1033
      %v1286 = vunpack.c.l.b16 %v1034
      %v1287 = vunpack.c.l.b16 %v1035
      %v1288 = vunpack.c.l.b16 %v1036
      %v1289 = vunpack.c.l.b16 %v1037
      %v1290 = vunpack.c.l.b16 %v1038
      %v1291 = vunpack.c.l.b16 %v1039
      %v1292 = vunpack.c.l.b16 %v1040
      %v1293 = vunpack.c.l.b16 %v1041
      %v1294 = vunpack.c.l.b16 %v1042
      %v1295 = vunpack.c.l.b16 %v1043
      %v1296 = vunpack.c.l.b16 %v1044
      %v1297 = vunpack.c.l.b16 %v1045
      %v1298 = vunpack.c.l.b16 %v1046
      %v1299 = vpack.c.b16 %v1284, %v1283
      %v1300 = vpack.c.b16 %v1286, %v1285
      %v1301 = vpack.c.b16 %v1288, %v1287
      %v1302 = vpack.c.b16 %v1290, %v1289
      %v1303 = vpack.c.b16 %v1292, %v1291
      %v1304 = vpack.c.b16 %v1294, %v1293
      %v1305 = vpack.c.b16 %v1296, %v1295
      %v1306 = vpack.c.b16 %v1298, %v1297
      %1315 = vmatprep.subr.bf16.mxu0 0
      %1316 = vmatpush1.bf16.msra.mxu0 %v1306
      %1317 = vmatprep.subr.bf16.mxu0 0
      %1318 = vmatpush1.bf16.msra.mxu0 %v1305
      %1319 = vmatprep.subr.bf16.mxu0 0
      %1320 = vmatpush1.bf16.msra.mxu0 %v1304
      %1321 = vmatprep.subr.bf16.mxu0 0
      %1322 = vmatpush1.bf16.msra.mxu0 %v1303
      %1323 = vmatprep.subr.bf16.mxu0 0
      %1324 = vmatpush1.bf16.msra.mxu0 %v1302
      %1325 = vmatprep.subr.bf16.mxu0 0
      %1326 = vmatpush1.bf16.msra.mxu0 %v1301
      %1327 = vmatprep.subr.bf16.mxu0 0
      %1328 = vmatpush1.bf16.msra.mxu0 %v1300
      %1329 = vmatprep.subr.bf16.mxu0 0
      %1330 = vmatpush1.bf16.msra.mxu0 %v1299
      %1331 = vmatprep.subr.bf16.mxu0 0
      %1332 = vmatpush2.bf16.msra.mxu0 0
      %1333 = vmatprep.subr.bf16.mxu0 0
      %1334 = vmatpush2.bf16.msra.mxu0 0
      %1335 = vmatprep.subr.bf16.mxu0 0
      %1336 = vmatpush2.bf16.msra.mxu0 0
      %1337 = vmatprep.subr.bf16.mxu0 0
      %1338 = vmatpush2.bf16.msra.mxu0 0
      %1339 = vmatprep.subr.bf16.mxu0 0
      %1340 = vmatpush2.bf16.msra.mxu0 0
      %1341 = vmatprep.subr.bf16.mxu0 0
      %1342 = vmatpush2.bf16.msra.mxu0 0
      %1343 = vmatprep.subr.bf16.mxu0 0
      %1344 = vmatpush2.bf16.msra.mxu0 0
      %1345 = vmatprep.subr.bf16.mxu0 0
      %1346 = vmatpush2.bf16.msra.mxu0 0
      %1347 = vmatprep.mubr.bf16.mxu0 0
      %1348 = vmatmul.mubr.bf16.gmra.mxu0 %v1265
      %v1349 = vpop.f32.mrf.mxu0
      %v1350 = vadd.f32 0.0, %v1349
      %v1351 = vpop.f32.mrf.mxu0
      %v1352 = vpop.f32.mrf.mxu0
      %v1353 = vadd.f32 0.0, %v1352
      %v1354 = vpop.f32.mrf.mxu0
      %1355 = vmatprep.mubr.bf16.mxu0 0
      %1356 = vmatmul.mubr.bf16.gmra.mxu0 %v1266
      %v1357 = vpop.f32.mrf.mxu0
      %v1358 = vadd.f32 0.0, %v1357
      %v1359 = vpop.f32.mrf.mxu0
      %v1360 = vpop.f32.mrf.mxu0
      %v1361 = vadd.f32 0.0, %v1360
      %v1362 = vpop.f32.mrf.mxu0
      %1363 = vdwg.mxu0
      %v1364 = vadd.f32 %v1251, %v1350
      %v1365 = vadd.f32 %v1254, %v1353
      %v1366 = vadd.f32 %v1259, %v1358
      %v1367 = vadd.f32 %v1262, %v1361
      %v1369 = vlaneseq
      %v1370 = vshrl.u32 %v1369, 7
      %v1371 = vsub.s32 0, %v1370
      %v1372 = vrot.slane %v1047, %v1371
      %v1374 = vadd.f32 %v1364, %v1372
      %v1375 = vadd.f32 %v1365, %v1372
      %v1376 = vadd.f32 %v1366, %v1372
      %v1377 = vadd.f32 %v1367, %v1372
      %v1378 = vxor.u32 %v1374, 2147483648
      %v1379 = vxor.u32 %v1375, 2147483648
      %v1380 = vxor.u32 %v1376, 2147483648
      %v1381 = vxor.u32 %v1377, 2147483648
      %v1382 = vmul.f32 %v1378, 1.442695
      %v1383 = vpow.pop %v1382
      %v1384 = vmul.f32 %v1379, 1.442695
      %v1385 = vpow.pop %v1384
      %v1386 = vmul.f32 %v1380, 1.442695
      %v1387 = vpow.pop %v1386
      %v1388 = vmul.f32 %v1381, 1.442695
      %v1389 = vpow.pop %v1388
      %v1390 = vadd.f32 %v1383, 1.0
      %v1391 = vadd.f32 %v1385, 1.0
      %v1392 = vadd.f32 %v1387, 1.0
      %v1393 = vadd.f32 %v1389, 1.0
      %v1394 = vrcp.pop %v1390
      %v1395 = vmul.f32 1.0, %v1394
      %v1396 = vrcp.pop %v1391
      %v1397 = vmul.f32 1.0, %v1396
      %v1398 = vrcp.pop %v1392
      %v1399 = vmul.f32 1.0, %v1398
      %v1400 = vrcp.pop %v1393
      %v1401 = vmul.f32 1.0, %v1400
      %v1402 = vmul.f32 %v1374, %v1395
      %v1403 = vmul.f32 %v1375, %v1397
      %v1404 = vmul.f32 %v1376, %v1399
      %v1405 = vmul.f32 %v1377, %v1401
      %v1406 = vpack.c.bf16 %v1403, %v1402
      %v1407 = vpack.c.bf16 %v1405, %v1404
      %v1409 = vlaneseq
      %v1410 = vshrl.u32 %v1409, 7
      %v1411 = vsub.s32 0, %v1410
      %v1412 = vrot.slane %v1064, %v1411
      %v1430 = vunpack.c.l.b16 %v1048
      %v1431 = vunpack.c.l.b16 %v1049
      %v1432 = vunpack.c.l.b16 %v1050
      %v1433 = vunpack.c.l.b16 %v1051
      %v1434 = vunpack.c.l.b16 %v1052
      %v1435 = vunpack.c.l.b16 %v1053
      %v1436 = vunpack.c.l.b16 %v1054
      %v1437 = vunpack.c.l.b16 %v1055
      %v1438 = vunpack.c.l.b16 %v1056
      %v1439 = vunpack.c.l.b16 %v1057
      %v1440 = vunpack.c.l.b16 %v1058
      %v1441 = vunpack.c.l.b16 %v1059
      %v1442 = vunpack.c.l.b16 %v1060
      %v1443 = vunpack.c.l.b16 %v1061
      %v1444 = vunpack.c.l.b16 %v1062
      %v1445 = vunpack.c.l.b16 %v1063
      %v1446 = vpack.c.b16 %v1431, %v1430
      %v1447 = vpack.c.b16 %v1433, %v1432
      %v1448 = vpack.c.b16 %v1435, %v1434
      %v1449 = vpack.c.b16 %v1437, %v1436
      %v1450 = vpack.c.b16 %v1439, %v1438
      %v1451 = vpack.c.b16 %v1441, %v1440
      %v1452 = vpack.c.b16 %v1443, %v1442
      %v1453 = vpack.c.b16 %v1445, %v1444
      %1462 = vmatprep.subr.bf16.mxu0 0
      %1463 = vmatpush1.bf16.msra.mxu0 %v1453
      %1464 = vmatprep.subr.bf16.mxu0 0
      %1465 = vmatpush1.bf16.msra.mxu0 %v1452
      %1466 = vmatprep.subr.bf16.mxu0 0
      %1467 = vmatpush1.bf16.msra.mxu0 %v1451
      %1468 = vmatprep.subr.bf16.mxu0 0
      %1469 = vmatpush1.bf16.msra.mxu0 %v1450
      %1470 = vmatprep.subr.bf16.mxu0 0
      %1471 = vmatpush1.bf16.msra.mxu0 %v1449
      %1472 = vmatprep.subr.bf16.mxu0 0
      %1473 = vmatpush1.bf16.msra.mxu0 %v1448
      %1474 = vmatprep.subr.bf16.mxu0 0
      %1475 = vmatpush1.bf16.msra.mxu0 %v1447
      %1476 = vmatprep.subr.bf16.mxu0 0
      %1477 = vmatpush1.bf16.msra.mxu0 %v1446
      %1478 = vmatprep.subr.bf16.mxu0 0
      %1479 = vmatpush2.bf16.msra.mxu0 0
      %1480 = vmatprep.subr.bf16.mxu0 0
      %1481 = vmatpush2.bf16.msra.mxu0 0
      %1482 = vmatprep.subr.bf16.mxu0 0
      %1483 = vmatpush2.bf16.msra.mxu0 0
      %1484 = vmatprep.subr.bf16.mxu0 0
      %1485 = vmatpush2.bf16.msra.mxu0 0
      %1486 = vmatprep.subr.bf16.mxu0 0
      %1487 = vmatpush2.bf16.msra.mxu0 0
      %1488 = vmatprep.subr.bf16.mxu0 0
      %1489 = vmatpush2.bf16.msra.mxu0 0
      %1490 = vmatprep.subr.bf16.mxu0 0
      %1491 = vmatpush2.bf16.msra.mxu0 0
      %1492 = vmatprep.subr.bf16.mxu0 0
      %1493 = vmatpush2.bf16.msra.mxu0 0
      %1494 = vmatprep.mubr.bf16.mxu0 0
      %1495 = vmatmul.mubr.bf16.gmra.mxu0 %v1406
      %v1496 = vpop.f32.mrf.mxu0
      %v1497 = vadd.f32 %v1412, %v1496
      %v1498 = vpop.f32.mrf.mxu0
      %v1499 = vpop.f32.mrf.mxu0
      %v1500 = vadd.f32 %v1412, %v1499
      %v1501 = vpop.f32.mrf.mxu0
      %1502 = vmatprep.mubr.bf16.mxu0 0
      %1503 = vmatmul.mubr.bf16.gmra.mxu0 %v1407
      %v1504 = vpop.f32.mrf.mxu0
      %v1505 = vadd.f32 %v1412, %v1504
      %v1506 = vpop.f32.mrf.mxu0
      %v1507 = vpop.f32.mrf.mxu0
      %v1508 = vadd.f32 %v1412, %v1507
      %v1509 = vpop.f32.mrf.mxu0
      %1510 = vdwg.mxu0
      %1511 = vadd.xlane.f32.xlu0 %v1497
      %v1512 = vpop.xlane.xlu0 %1511
      %1513 = vadd.xlane.f32.xlu0 %v1500
      %v1514 = vpop.xlane.xlu0 %1513
      %1515 = vadd.xlane.f32.xlu0 %v1505
      %v1516 = vpop.xlane.xlu0 %1515
      %1517 = vadd.xlane.f32.xlu0 %v1508
      %v1518 = vpop.xlane.xlu0 %1517
      %v1519 = vmul.f32 %v1512, 0.03125
      %v1520 = vmul.f32 %v1514, 0.03125
      %v1521 = vmul.f32 %v1516, 0.03125
      %v1522 = vmul.f32 %v1518, 0.03125
      %v1523 = vsub.f32 %v1497, %v1519
      %v1524 = vsub.f32 %v1500, %v1520
      %v1525 = vsub.f32 %v1505, %v1521
      %v1526 = vsub.f32 %v1508, %v1522
      %v1527 = vsel %vm934, %v1523, 0.0
      %v1528 = vsel %vm934, %v1524, 0.0
      %v1529 = vsel %vm934, %v1525, 0.0
      %v1530 = vsel %vm934, %v1526, 0.0
      %v1531 = vmul.f32 %v1527, %v1527
      %v1532 = vmul.f32 %v1528, %v1528
      %v1533 = vmul.f32 %v1529, %v1529
      %v1534 = vmul.f32 %v1530, %v1530
      %1535 = vadd.xlane.f32.xlu0 %v1531
      %v1536 = vpop.xlane.xlu0 %1535
      %1537 = vadd.xlane.f32.xlu0 %v1532
      %v1538 = vpop.xlane.xlu0 %1537
      %1539 = vadd.xlane.f32.xlu0 %v1533
      %v1540 = vpop.xlane.xlu0 %1539
      %1541 = vadd.xlane.f32.xlu0 %v1534
      %v1542 = vpop.xlane.xlu0 %1541
      %v1543 = vmul.f32 %v1536, 0.03125
      %v1544 = vmul.f32 %v1538, 0.03125
      %v1545 = vmul.f32 %v1540, 0.03125
      %v1546 = vmul.f32 %v1542, 0.03125
      %v1547 = vadd.f32 %v1543, 1e-05
      %v1548 = vadd.f32 %v1544, 1e-05
      %v1549 = vadd.f32 %v1545, 1e-05
      %v1550 = vadd.f32 %v1546, 1e-05
      %v1551 = vrsqrt.pop %v1547
      %v1552 = vrsqrt.pop %v1548
      %v1553 = vrsqrt.pop %v1549
      %v1554 = vrsqrt.pop %v1550
      %v1555 = vmul.f32 %v1523, %v1551
      %v1556 = vmul.f32 %v1524, %v1552
      %v1557 = vmul.f32 %v1525, %v1553
      %v1558 = vmul.f32 %v1526, %v1554
      %v1560 = vlaneseq
      %v1561 = vshrl.u32 %v1560, 7
      %v1562 = vsub.s32 0, %v1561
      %v1563 = vrot.slane %v1065, %v1562
      %v1565 = vmul.f32 %v1555, %v1563
      %v1566 = vmul.f32 %v1556, %v1563
      %v1567 = vmul.f32 %v1557, %v1563
      %v1568 = vmul.f32 %v1558, %v1563
      %v1570 = vlaneseq
      %v1571 = vshrl.u32 %v1570, 7
      %v1572 = vsub.s32 0, %v1571
      %v1573 = vrot.slane %v1066, %v1572
      %v1575 = vadd.f32 %v1565, %v1573
      %v1576 = vadd.f32 %v1566, %v1573
      %v1577 = vadd.f32 %v1567, %v1573
      %v1578 = vadd.f32 %v1568, %v1573
      %1579 = vst [vmem:[%s635] sm:$0xff] %v1575
      %1580 = vst [vmem:[%s635 + $0x8] sm:$0xff] %v1576
      %1581 = vst [vmem:[%s635 + $0x10] sm:$0xff] %v1577
      %1582 = vst [vmem:[%s635 + $0x18] sm:$0xff] %v1578
      %s1583 = smul.u32 4, %s30
      %p1584 = scmp.lt.s32.totalorder %s1583, 7
      %s1585 = scalar_select %p1584, %s1583, 7
      %s1586 = smul.addr %s1585, 8
      %s1587 = scalar_lea.vmem %s17, %s1586
      %s1588 = smul.u32 4, %s30
      %p1589 = scmp.lt.s32.totalorder %s1588, 7
      %s1590 = scalar_select %p1589, %s1588, 7
      %s1591 = smul.addr %s1590, 8
      %s1592 = scalar_lea.vmem %s18, %s1591
      // Predicated region
      $region89: #{decoder_forward.3} parent=87 // pred_check
        %p1593 = pneg %p420
      $region90: #{decoder_forward.3} parent=87 // pred_check_branch
        %1595 = sbr.rel (%p1593) target = $region92
      $region91: #{decoder_forward.3} parent=87 // pred_region
        %s1596 = smul.u32 4, %s30
      $region92: #{decoder_forward.3} parent=87 // pred_fallthru
        _
      // Predicated region
      $region93: #{decoder_forward.3} parent=87 // pred_check
        %p1597 = pneg %p446
      $region94: #{decoder_forward.3} parent=87 // pred_check_branch
        %1599 = sbr.rel (%p1597) target = $region96
      $region95: #{decoder_forward.3} parent=87 // pred_region
        %s1600 = smul.u32 4, %s30
      $region96: #{decoder_forward.3} parent=87 // pred_fallthru
        _
    $region88: #{decoder_forward.3} parent=5 // pred_fallthru
      _
    %p1601 = scmp.le.s32.totalorder 2, %s25
    // Predicated region
    $region97: #{decoder_forward.3} parent=5 // pred_check
      %p1602 = pneg %p1601
    $region98: #{decoder_forward.3} parent=5 // pred_check_branch
      %1604 = sbr.rel (%p1602) target = $region100
    $region99: #{decoder_forward.3} parent=5 // pred_region
      %s1605 = ssub.s32 %s25, 2
      // Predicated region
      $region101: #{decoder_forward.3} parent=99 // pred_check
        %p1606 = pneg %p426
      $region102: #{decoder_forward.3} parent=99 // pred_check_branch
        %1608 = sbr.rel (%p1606) target = $region104
      $region103: #{decoder_forward.3} parent=99 // pred_region
        %s1609 = smul.u32 4, %s31
        %p1610 = scmp.lt.s32.totalorder %s1609, 7
        %s1611 = scalar_select %p1610, %s1609, 7
        %s1612 = smul.addr %s1611, 8
        %s1613 = scalar_lea.vmem %s17, %s1612
      $region104: #{decoder_forward.3} parent=99 // pred_fallthru
        _
      // Predicated region
      $region105: #{decoder_forward.3} parent=99 // pred_check
        %p1614 = pneg %p452
      $region106: #{decoder_forward.3} parent=99 // pred_check_branch
        %1616 = sbr.rel (%p1614) target = $region108
      $region107: #{decoder_forward.3} parent=99 // pred_region
        %s1617 = smul.u32 4, %s31
        %p1618 = scmp.lt.s32.totalorder %s1617, 7
        %s1619 = scalar_select %p1618, %s1617, 7
        %s1620 = smul.addr %s1619, 8
        %s1621 = scalar_lea.vmem %s18, %s1620
      $region108: #{decoder_forward.3} parent=99 // pred_fallthru
        _
    $region100: #{decoder_forward.3} parent=5 // pred_fallthru
      _
  $region6: #{decoder_forward.3} parent=0 // loop_footer
    %s29 = sadd.s32 1, %s25
  $region7: #{decoder_forward.3} parent=0 // loop_footer_branch
    %24 = sbr.rel target = $region3
  $region8: #{decoder_forward.3} parent=0 // loop_exit
    _

</llo_original>
